<compile_context>
chip_gen: v7x
topology: tpu7x:2x2x1
jax: 0.10.0
libtpu: 0.0.40
codegen_flags: <defaults>
</compile_context>

<pallas_src>
import numpy as np
import jax
import jax.numpy as jnp
from jax.experimental import pallas as pl
from jax.experimental.pallas import tpu as pltpu


# ----------------------------------------------------------------------------
# Fused forward kernel: B_TILE samples per grid step.
#
# Layouts (bt = B_TILE, m = 8*bt):
#   xp_ref : (2, 2, 10, bt, 128)  phase-split input, xp[pz,py,zc,b, yc*16+xi]
#            = x[b, 2*zc+pz, 2*yc+py, xi]  (zc padded 8->10 with zeros)
#   h1     : (m, 512) rows = z1*bt + b, cols = y1*64 + x1*8 + c1   (valid z1,y1,x1 < 6)
#   h2     : (m, 512) rows = z2*bt + b, cols = x2l*256 + y2l*128 + y2h*64 + x2h*32 + c2
#   flat   : (bt, 256) feature = z2h*128 + y2h*64 + x2h*32 + c2 (FC weight pre-permuted)
# ----------------------------------------------------------------------------
def _voxnet_kernel(xp_ref, w1_ref, b1_ref, w2_ref, b2_ref, wfc_ref, bfc_ref, out_ref):
    f32, bf16 = jnp.float32, jnp.bfloat16
    bt = xp_ref.shape[3]
    m = 8 * bt

    # ---- conv1: one (m,1280)x(1280,512) bf16 GEMM (25 taps folded into K + Toeplitz N)
    slabs = []
    for dz in range(5):
        pz, ddz = dz % 2, dz // 2
        for py in range(2):
            s = xp_ref[pz, py, ddz:ddz + 8]            # (8, bt, 128), leading-dim slice
            slabs.append(s.reshape(m, 128))
    lhs1 = jnp.concatenate(slabs, axis=1).astype(bf16)  # (m, 1280)
    h1 = jnp.dot(lhs1, w1_ref[...], preferred_element_type=f32)
    h1 = jnp.maximum(h1 + b1_ref[...], 0.0)             # (m, 512)

    # ---- conv2: one (m,1536)x(1536,512) bf16 GEMM (3 z-taps along K, y/x in weight)
    parts = [h1]
    for dz2 in (1, 2):
        d = dz2 * bt                                    # multiple of 8 -> aligned
        parts.append(jnp.concatenate([h1[d:], h1[:d]], axis=0))
    lhs2 = jnp.concatenate(parts, axis=1).astype(bf16)   # (m, 1536)
    h2 = jnp.dot(lhs2, w2_ref[...], preferred_element_type=f32)
    h2 = jnp.maximum(h2 + b2_ref[...], 0.0)              # (m, 512)

    # ---- 2x2x2 maxpool: full-width aligned maxes (lanes: x-pair, y-pair; rows: z-pair)
    px = jnp.maximum(h2[:, 0:256], h2[:, 256:512])       # max over x2 low bit
    pxy = jnp.maximum(px[:, 0:128], px[:, 128:256])       # max over y2 low bit -> (m,128)
    f0 = jnp.maximum(pxy[0:bt], pxy[bt:2 * bt])           # z2 in {0,1}
    f1 = jnp.maximum(pxy[2 * bt:3 * bt], pxy[3 * bt:4 * bt])  # z2 in {2,3}
    flat = jnp.concatenate([f0, f1], axis=1).astype(bf16)  # (bt, 256)

    # ---- end_line: Linear(256, 40), N padded to 128 for a lane-dense store
    logits = jnp.dot(flat, wfc_ref[...], preferred_element_type=f32) + bfc_ref[...]
    out_ref[...] = logits                                  # (bt, 128)


# ----------------------------------------------------------------------------
# One-time weight preprocessing (PyTorch layout -> GEMM-ready Toeplitz layout).
# Exact gather + mask construction (numpy, host-side, tiny).
# ----------------------------------------------------------------------------
def prepare_params(params):
    w1 = np.asarray(params["conv1_w"], np.float32).reshape(8, 5, 5, 5)  # (c1,dz,dy,dx)
    b1 = np.asarray(params["conv1_b"], np.float32)
    w2 = np.asarray(params["conv2_w"], np.float32)                      # (c2,c1,dz,dy,dx)
    b2 = np.asarray(params["conv2_b"], np.float32)
    fw = np.asarray(params["fc_w"], np.float32)                         # (40, 256)
    fb = np.asarray(params["fc_b"], np.float32)

    # ---- conv1 weight (1280, 512): K = dz*256+py*128+yc*16+xi, N = y1*64+x1*8+c1 ----
    dzs, pys = np.arange(5), np.arange(2)
    ycs, xis = np.arange(8), np.arange(16)
    y1s, x1s = np.arange(8), np.arange(8)
    dy = (2 * (ycs[None, None, :, None, None, None] - y1s[None, None, None, None, :, None])
          + pys[None, :, None, None, None, None])
    dx = xis[None, None, None, :, None, None] - 2 * x1s[None, None, None, None, None, :]
    dzb = dzs[:, None, None, None, None, None]
    valid = ((dy >= 0) & (dy < 5) & (dx >= 0) & (dx < 5)
             & (y1s[None, None, None, None, :, None] < 6)
             & (x1s[None, None, None, None, None, :] < 6))
    dzb, dyc, dxc, valid = np.broadcast_arrays(dzb, np.clip(dy, 0, 4), np.clip(dx, 0, 4), valid)
    g1 = w1[:, dzb, dyc, dxc] * valid[None].astype(np.float32)   # (c1,dz,py,yc,xi,y1,x1)
    W1 = np.transpose(g1, (1, 2, 3, 4, 5, 6, 0)).reshape(1280, 512)
    maskyx = ((y1s[:, None] < 6) & (x1s[None, :] < 6)).astype(np.float32)
    b1v = (maskyx[:, :, None] * b1[None, None, :]).reshape(1, 512)

    # ---- conv2 weight (1536, 512): K = dz2*512 + y1*64 + x1*8 + c1,
    #      N = x2l*256 + y2l*128 + y2h*64 + x2h*32 + c2 (pool-friendly order) ----------
    y2s, x2s, dz2s = np.arange(4), np.arange(4), np.arange(3)
    dyv = y1s[:, None] - y2s[None, :]
    dxv = x1s[:, None] - x2s[None, :]
    vy = (dyv >= 0) & (dyv < 3)
    vx = (dxv >= 0) & (dxv < 3)
    A = dz2s[:, None, None, None, None]
    Bi = np.clip(dyv, 0, 2)[None, :, None, :, None]
    Ci = np.clip(dxv, 0, 2)[None, None, :, None, :]
    A, Bi, Ci = np.broadcast_arrays(A, Bi, Ci)                    # (dz2,y1,x1,y2,x2)
    g2 = w2[:, :, A, Bi, Ci]                                      # (c2,c1,dz2,y1,x1,y2,x2)
    vm = (vy[:, None, :, None] & vx[None, :, None, :]).astype(np.float32)   # (y1,x1,y2,x2)
    g2 = g2 * vm[None, None, None]
    t = np.transpose(g2, (2, 3, 4, 1, 5, 6, 0))                   # (dz2,y1,x1,c1,y2,x2,c2)
    t = t.reshape(3, 8, 8, 8, 2, 2, 2, 2, 32)                     # split y2/x2 -> (hi,lo)
    t = np.transpose(t, (0, 1, 2, 3, 7, 5, 4, 6, 8))              # (...,x2l,y2l,y2h,x2h,c2)
    W2 = t.reshape(1536, 512)
    b2v = np.tile(b2, 16).reshape(1, 512)

    # ---- FC weight permuted to kernel feature order z*128+y*64+x*32+c2, N padded 128 -
    wfc = np.transpose(fw.reshape(40, 32, 2, 2, 2), (2, 3, 4, 1, 0)).reshape(256, 40)
    wfc_p = np.zeros((256, 128), np.float32); wfc_p[:, :40] = wfc
    bfc_p = np.zeros((1, 128), np.float32); bfc_p[0, :40] = fb

    return {
        "w1": jnp.asarray(W1, jnp.bfloat16),
        "b1": jnp.asarray(b1v, jnp.float32),
        "w2": jnp.asarray(W2, jnp.bfloat16),
        "b2": jnp.asarray(b2v, jnp.float32),
        "wfc": jnp.asarray(wfc_p, jnp.bfloat16),
        "bfc": jnp.asarray(bfc_p, jnp.float32),
    }


# ----------------------------------------------------------------------------
# Pallas call wrapper + jitted forward.
# ----------------------------------------------------------------------------
def _fused_forward(xp, prep, bp, b_tile):
    grid = (bp // b_tile,)
    grid_spec = pltpu.PrefetchScalarGridSpec(
        num_scalar_prefetch=0,
        grid=grid,
        in_specs=[
            pl.BlockSpec((2, 2, 10, b_tile, 128), lambda i: (0, 0, 0, i, 0)),
            pl.BlockSpec((1280, 512), lambda i: (0, 0)),
            pl.BlockSpec((1, 512), lambda i: (0, 0)),
            pl.BlockSpec((1536, 512), lambda i: (0, 0)),
            pl.BlockSpec((1, 512), lambda i: (0, 0)),
            pl.BlockSpec((256, 128), lambda i: (0, 0)),
            pl.BlockSpec((1, 128), lambda i: (0, 0)),
        ],
        out_specs=pl.BlockSpec((b_tile, 128), lambda i: (i, 0)),
    )
    return pl.pallas_call(
        _voxnet_kernel,
        out_shape=jax.ShapeDtypeStruct((bp, 128), jnp.float32),
        grid_spec=grid_spec,
        compiler_params=pltpu.CompilerParams(
            dimension_semantics=("parallel",)),
    )(xp, prep["w1"], prep["b1"], prep["w2"], prep["b2"], prep["wfc"], prep["bfc"])


@jax.jit
def voxnet_forward(prep, x):
    B, C, D, H, W = x.shape
    assert (C, D, H, W) == (1, 16, 16, 16), "assumed VoxNet body expects (B,1,16,16,16)"
    b_tile = 8 if B <= 64 else 32                 # multiple of 8; 32 at large batch
    bp = -(-B // b_tile) * b_tile
    xs = x.reshape(B, 16, 16, 16).astype(jnp.float32)
    # Phase split + lane-dense pack: xp[pz,py,zc,b, yc*16+xi] = x[b, 2*zc+pz, 2*yc+py, xi]
    xr = xs.reshape(B, 8, 2, 8, 2, 16).transpose(2, 4, 1, 0, 3, 5).reshape(2, 2, 8, B, 128)
    xp = jnp.pad(xr, ((0, 0), (0, 0), (0, 2), (0, bp - B), (0, 0)))
    out = _fused_forward(xp, prep, bp, b_tile)
    return out[:B, :40]


# ----------------------------------------------------------------------------
# Params, pure-JAX reference (for correctness check), demo.
# ----------------------------------------------------------------------------
def init_params(key):
    k1, k2, k3, k4, k5, k6 = jax.random.split(key, 6)
    return {
        "conv1_w": jax.random.normal(k1, (8, 1, 5, 5, 5), jnp.float32) * 0.10,
        "conv1_b": jax.random.normal(k2, (8,), jnp.float32) * 0.10,
        "conv2_w": jax.random.normal(k3, (32, 8, 3, 3, 3), jnp.float32) * 0.05,
        "conv2_b": jax.random.normal(k4, (32,), jnp.float32) * 0.05,
        "fc_w": jax.random.normal(k5, (40, 256), jnp.float32) * 0.05,
        "fc_b": jax.random.normal(k6, (40,), jnp.float32) * 0.05,
    }


@jax.jit
def reference_forward(params, x):
    hi = jax.lax.Precision.HIGHEST
    dn = ("NCDHW", "OIDHW", "NCDHW")
    h = jax.lax.conv_general_dilated(x, params["conv1_w"], (2, 2, 2), "VALID",
                                     dimension_numbers=dn, precision=hi)
    h = jax.nn.relu(h + params["conv1_b"][None, :, None, None, None])
    h = jax.lax.conv_general_dilated(h, params["conv2_w"], (1, 1, 1), "VALID",
                                     dimension_numbers=dn, precision=hi)
    h = jax.nn.relu(h + params["conv2_b"][None, :, None, None, None])
    h = jax.lax.reduce_window(h, -jnp.inf, jax.lax.max,
                              (1, 1, 2, 2, 2), (1, 1, 2, 2, 2), "VALID")
    flat = h.reshape(h.shape[0], -1)
    return jnp.dot(flat, params["fc_w"].T, precision=hi) + params["fc_b"]


if __name__ == "__main__":
    key = jax.random.PRNGKey(0)
    pkey, xkey, xkey2 = jax.random.split(key, 3)
    params = init_params(pkey)
    prep = prepare_params(params)

    # small demo batch
    x = jax.random.normal(xkey, (2, 1, 16, 16, 16), jnp.float32)
    out = jax.block_until_ready(voxnet_forward(prep, x))
    assert out.shape == (2, 40), out.shape
    assert bool(jnp.all(jnp.isfinite(out)))
    ref = jax.block_until_ready(reference_forward(params, x))
    assert bool(jnp.allclose(out, ref, rtol=2e-2, atol=2e-2)), (
        "max abs err = %g" % float(jnp.max(jnp.abs(out - ref))))

    # exercise the multi-step batched path (grid > 1, batch padding)
    x2 = jax.random.normal(xkey2, (20, 1, 16, 16, 16), jnp.float32)
    out2 = jax.block_until_ready(voxnet_forward(prep, x2))
    ref2 = jax.block_until_ready(reference_forward(params, x2))
    assert bool(jnp.allclose(out2, ref2, rtol=2e-2, atol=2e-2)), (
        "max abs err = %g" % float(jnp.max(jnp.abs(out2 - ref2))))

    print("KERNEL_OK")
</pallas_src>

<mosaic_0001>
module attributes {stable_mosaic.version = 11 : i64} {
  func.func @_voxnet_kernel(%arg0: i32, %arg1: memref<2x2x10x8x128xf32, #tpu.memory_space<vmem>>, %arg2: memref<1280x512xbf16, #tpu.memory_space<vmem>>, %arg3: memref<1x512xf32, #tpu.memory_space<vmem>>, %arg4: memref<1536x512xbf16, #tpu.memory_space<vmem>>, %arg5: memref<1x512xf32, #tpu.memory_space<vmem>>, %arg6: memref<256x128xbf16, #tpu.memory_space<vmem>>, %arg7: memref<1x128xf32, #tpu.memory_space<vmem>>, %arg8: memref<8x128xf32, #tpu.memory_space<vmem>>) attributes {dimension_semantics = [#tpu.dimension_semantics<parallel>], iteration_bounds = array<i64: 1>, scalar_prefetch = 0 : i64, scratch_operands = 0 : i64, tpu.core_type = #tpu.core_type<tc>, window_params = [{transform_indices = @transform_0, window_bounds = array<i64: 2, 2, 10, 8, 128>}, {pipeline_mode = #tpu.pipeline_mode<synchronous>, transform_indices = @transform_1, window_bounds = array<i64: 1280, 512>}, {pipeline_mode = #tpu.pipeline_mode<synchronous>, transform_indices = @transform_2, window_bounds = array<i64: 1, 512>}, {pipeline_mode = #tpu.pipeline_mode<synchronous>, transform_indices = @transform_3, window_bounds = array<i64: 1536, 512>}, {pipeline_mode = #tpu.pipeline_mode<synchronous>, transform_indices = @transform_4, window_bounds = array<i64: 1, 512>}, {pipeline_mode = #tpu.pipeline_mode<synchronous>, transform_indices = @transform_5, window_bounds = array<i64: 256, 128>}, {pipeline_mode = #tpu.pipeline_mode<synchronous>, transform_indices = @transform_6, window_bounds = array<i64: 1, 128>}, {transform_indices = @transform_7, window_bounds = array<i64: 8, 128>}]} {
    %c0 = arith.constant 0 : index
    %c0_0 = arith.constant 0 : index
    %c0_1 = arith.constant 0 : index
    %c0_2 = arith.constant 0 : index
    %c0_3 = arith.constant 0 : index
    %0 = vector.load %arg1[%c0, %c0_0, %c0_1, %c0_2, %c0_3] : memref<2x2x10x8x128xf32, #tpu.memory_space<vmem>>, vector<1x1x8x8x128xf32>
    %1 = vector.shape_cast %0 : vector<1x1x8x8x128xf32> to vector<8x8x128xf32>
    %2 = vector.shape_cast %1 : vector<8x8x128xf32> to vector<64x128xf32>
    %c0_4 = arith.constant 0 : index
    %c1 = arith.constant 1 : index
    %c0_5 = arith.constant 0 : index
    %c0_6 = arith.constant 0 : index
    %c0_7 = arith.constant 0 : index
    %3 = vector.load %arg1[%c0_4, %c1, %c0_5, %c0_6, %c0_7] : memref<2x2x10x8x128xf32, #tpu.memory_space<vmem>>, vector<1x1x8x8x128xf32>
    %4 = vector.shape_cast %3 : vector<1x1x8x8x128xf32> to vector<8x8x128xf32>
    %5 = vector.shape_cast %4 : vector<8x8x128xf32> to vector<64x128xf32>
    %c1_8 = arith.constant 1 : index
    %c0_9 = arith.constant 0 : index
    %c0_10 = arith.constant 0 : index
    %c0_11 = arith.constant 0 : index
    %c0_12 = arith.constant 0 : index
    %6 = vector.load %arg1[%c1_8, %c0_9, %c0_10, %c0_11, %c0_12] : memref<2x2x10x8x128xf32, #tpu.memory_space<vmem>>, vector<1x1x8x8x128xf32>
    %7 = vector.shape_cast %6 : vector<1x1x8x8x128xf32> to vector<8x8x128xf32>
    %8 = vector.shape_cast %7 : vector<8x8x128xf32> to vector<64x128xf32>
    %c1_13 = arith.constant 1 : index
    %c1_14 = arith.constant 1 : index
    %c0_15 = arith.constant 0 : index
    %c0_16 = arith.constant 0 : index
    %c0_17 = arith.constant 0 : index
    %9 = vector.load %arg1[%c1_13, %c1_14, %c0_15, %c0_16, %c0_17] : memref<2x2x10x8x128xf32, #tpu.memory_space<vmem>>, vector<1x1x8x8x128xf32>
    %10 = vector.shape_cast %9 : vector<1x1x8x8x128xf32> to vector<8x8x128xf32>
    %11 = vector.shape_cast %10 : vector<8x8x128xf32> to vector<64x128xf32>
    %c0_18 = arith.constant 0 : index
    %c0_19 = arith.constant 0 : index
    %c1_20 = arith.constant 1 : index
    %c0_21 = arith.constant 0 : index
    %c0_22 = arith.constant 0 : index
    %12 = vector.load %arg1[%c0_18, %c0_19, %c1_20, %c0_21, %c0_22] : memref<2x2x10x8x128xf32, #tpu.memory_space<vmem>>, vector<1x1x8x8x128xf32>
    %13 = vector.shape_cast %12 : vector<1x1x8x8x128xf32> to vector<8x8x128xf32>
    %14 = vector.shape_cast %13 : vector<8x8x128xf32> to vector<64x128xf32>
    %c0_23 = arith.constant 0 : index
    %c1_24 = arith.constant 1 : index
    %c1_25 = arith.constant 1 : index
    %c0_26 = arith.constant 0 : index
    %c0_27 = arith.constant 0 : index
    %15 = vector.load %arg1[%c0_23, %c1_24, %c1_25, %c0_26, %c0_27] : memref<2x2x10x8x128xf32, #tpu.memory_space<vmem>>, vector<1x1x8x8x128xf32>
    %16 = vector.shape_cast %15 : vector<1x1x8x8x128xf32> to vector<8x8x128xf32>
    %17 = vector.shape_cast %16 : vector<8x8x128xf32> to vector<64x128xf32>
    %c1_28 = arith.constant 1 : index
    %c0_29 = arith.constant 0 : index
    %c1_30 = arith.constant 1 : index
    %c0_31 = arith.constant 0 : index
    %c0_32 = arith.constant 0 : index
    %18 = vector.load %arg1[%c1_28, %c0_29, %c1_30, %c0_31, %c0_32] : memref<2x2x10x8x128xf32, #tpu.memory_space<vmem>>, vector<1x1x8x8x128xf32>
    %19 = vector.shape_cast %18 : vector<1x1x8x8x128xf32> to vector<8x8x128xf32>
    %20 = vector.shape_cast %19 : vector<8x8x128xf32> to vector<64x128xf32>
    %c1_33 = arith.constant 1 : index
    %c1_34 = arith.constant 1 : index
    %c1_35 = arith.constant 1 : index
    %c0_36 = arith.constant 0 : index
    %c0_37 = arith.constant 0 : index
    %21 = vector.load %arg1[%c1_33, %c1_34, %c1_35, %c0_36, %c0_37] : memref<2x2x10x8x128xf32, #tpu.memory_space<vmem>>, vector<1x1x8x8x128xf32>
    %22 = vector.shape_cast %21 : vector<1x1x8x8x128xf32> to vector<8x8x128xf32>
    %23 = vector.shape_cast %22 : vector<8x8x128xf32> to vector<64x128xf32>
    %c0_38 = arith.constant 0 : index
    %c0_39 = arith.constant 0 : index
    %c2 = arith.constant 2 : index
    %c0_40 = arith.constant 0 : index
    %c0_41 = arith.constant 0 : index
    %24 = vector.load %arg1[%c0_38, %c0_39, %c2, %c0_40, %c0_41] : memref<2x2x10x8x128xf32, #tpu.memory_space<vmem>>, vector<1x1x8x8x128xf32>
    %25 = vector.shape_cast %24 : vector<1x1x8x8x128xf32> to vector<8x8x128xf32>
    %26 = vector.shape_cast %25 : vector<8x8x128xf32> to vector<64x128xf32>
    %c0_42 = arith.constant 0 : index
    %c1_43 = arith.constant 1 : index
    %c2_44 = arith.constant 2 : index
    %c0_45 = arith.constant 0 : index
    %c0_46 = arith.constant 0 : index
    %27 = vector.load %arg1[%c0_42, %c1_43, %c2_44, %c0_45, %c0_46] : memref<2x2x10x8x128xf32, #tpu.memory_space<vmem>>, vector<1x1x8x8x128xf32>
    %28 = vector.shape_cast %27 : vector<1x1x8x8x128xf32> to vector<8x8x128xf32>
    %29 = vector.shape_cast %28 : vector<8x8x128xf32> to vector<64x128xf32>
    %30 = tpu.concatenate %2, %5, %8, %11, %14, %17, %20, %23, %26, %29 in 1 : vector<64x128xf32>, vector<64x128xf32>, vector<64x128xf32>, vector<64x128xf32>, vector<64x128xf32>, vector<64x128xf32>, vector<64x128xf32>, vector<64x128xf32>, vector<64x128xf32>, vector<64x128xf32> -> vector<64x1280xf32>
    %31 = arith.truncf %30 : vector<64x1280xf32> to vector<64x1280xbf16>
    %c0_47 = arith.constant 0 : index
    %c0_48 = arith.constant 0 : index
    %32 = vector.load %arg2[%c0_47, %c0_48] : memref<1280x512xbf16, #tpu.memory_space<vmem>>, vector<1280x512xbf16>
    %cst = arith.constant dense<0.000000e+00> : vector<64x512xf32>
    %33 = tpu.matmul %31, %32, %cst {dimension_numbers = #tpu.dot_dimension_numbers<[1], [0], [0], [1], [0, 0, 1, 1], [], []>} : vector<64x1280xbf16>, vector<1280x512xbf16>, vector<64x512xf32> -> vector<64x512xf32>
    %c0_49 = arith.constant 0 : index
    %c0_50 = arith.constant 0 : index
    %34 = vector.load %arg3[%c0_49, %c0_50] : memref<1x512xf32, #tpu.memory_space<vmem>>, vector<1x512xf32>
    %35 = vector.broadcast %34 : vector<1x512xf32> to vector<64x512xf32>
    %36 = arith.addf %33, %35 : vector<64x512xf32>
    %cst_51 = arith.constant 0.000000e+00 : f32
    %37 = vector.broadcast %cst_51 : f32 to vector<64x512xf32>
    %38 = arith.maximumf %36, %37 : vector<64x512xf32>
    %39 = vector.extract_strided_slice %38 {offsets = [8, 0], sizes = [56, 512], strides = [1, 1]} : vector<64x512xf32> to vector<56x512xf32>
    %40 = vector.extract_strided_slice %38 {offsets = [0, 0], sizes = [8, 512], strides = [1, 1]} : vector<64x512xf32> to vector<8x512xf32>
    %41 = tpu.concatenate %39, %40 in 0 : vector<56x512xf32>, vector<8x512xf32> -> vector<64x512xf32>
    %42 = vector.extract_strided_slice %38 {offsets = [16, 0], sizes = [48, 512], strides = [1, 1]} : vector<64x512xf32> to vector<48x512xf32>
    %43 = vector.extract_strided_slice %38 {offsets = [0, 0], sizes = [16, 512], strides = [1, 1]} : vector<64x512xf32> to vector<16x512xf32>
    %44 = tpu.concatenate %42, %43 in 0 : vector<48x512xf32>, vector<16x512xf32> -> vector<64x512xf32>
    %45 = tpu.concatenate %38, %41, %44 in 1 : vector<64x512xf32>, vector<64x512xf32>, vector<64x512xf32> -> vector<64x1536xf32>
    %46 = arith.truncf %45 : vector<64x1536xf32> to vector<64x1536xbf16>
    %c0_52 = arith.constant 0 : index
    %c0_53 = arith.constant 0 : index
    %47 = vector.load %arg4[%c0_52, %c0_53] : memref<1536x512xbf16, #tpu.memory_space<vmem>>, vector<1536x512xbf16>
    %cst_54 = arith.constant dense<0.000000e+00> : vector<64x512xf32>
    %48 = tpu.matmul %46, %47, %cst_54 {dimension_numbers = #tpu.dot_dimension_numbers<[1], [0], [0], [1], [0, 0, 1, 1], [], []>} : vector<64x1536xbf16>, vector<1536x512xbf16>, vector<64x512xf32> -> vector<64x512xf32>
    %c0_55 = arith.constant 0 : index
    %c0_56 = arith.constant 0 : index
    %49 = vector.load %arg5[%c0_55, %c0_56] : memref<1x512xf32, #tpu.memory_space<vmem>>, vector<1x512xf32>
    %50 = vector.broadcast %49 : vector<1x512xf32> to vector<64x512xf32>
    %51 = arith.addf %48, %50 : vector<64x512xf32>
    %cst_57 = arith.constant 0.000000e+00 : f32
    %52 = vector.broadcast %cst_57 : f32 to vector<64x512xf32>
    %53 = arith.maximumf %51, %52 : vector<64x512xf32>
    %54 = vector.extract_strided_slice %53 {offsets = [0, 0], sizes = [64, 256], strides = [1, 1]} : vector<64x512xf32> to vector<64x256xf32>
    %55 = vector.extract_strided_slice %53 {offsets = [0, 256], sizes = [64, 256], strides = [1, 1]} : vector<64x512xf32> to vector<64x256xf32>
    %56 = arith.maximumf %54, %55 : vector<64x256xf32>
    %57 = vector.extract_strided_slice %56 {offsets = [0, 0], sizes = [64, 128], strides = [1, 1]} : vector<64x256xf32> to vector<64x128xf32>
    %58 = vector.extract_strided_slice %56 {offsets = [0, 128], sizes = [64, 128], strides = [1, 1]} : vector<64x256xf32> to vector<64x128xf32>
    %59 = arith.maximumf %57, %58 : vector<64x128xf32>
    %60 = vector.extract_strided_slice %59 {offsets = [0, 0], sizes = [8, 128], strides = [1, 1]} : vector<64x128xf32> to vector<8x128xf32>
    %61 = vector.extract_strided_slice %59 {offsets = [8, 0], sizes = [8, 128], strides = [1, 1]} : vector<64x128xf32> to vector<8x128xf32>
    %62 = arith.maximumf %60, %61 : vector<8x128xf32>
    %63 = vector.extract_strided_slice %59 {offsets = [16, 0], sizes = [8, 128], strides = [1, 1]} : vector<64x128xf32> to vector<8x128xf32>
    %64 = vector.extract_strided_slice %59 {offsets = [24, 0], sizes = [8, 128], strides = [1, 1]} : vector<64x128xf32> to vector<8x128xf32>
    %65 = arith.maximumf %63, %64 : vector<8x128xf32>
    %66 = tpu.concatenate %62, %65 in 1 : vector<8x128xf32>, vector<8x128xf32> -> vector<8x256xf32>
    %67 = arith.truncf %66 : vector<8x256xf32> to vector<8x256xbf16>
    %c0_58 = arith.constant 0 : index
    %c0_59 = arith.constant 0 : index
    %68 = vector.load %arg6[%c0_58, %c0_59] : memref<256x128xbf16, #tpu.memory_space<vmem>>, vector<256x128xbf16>
    %cst_60 = arith.constant dense<0.000000e+00> : vector<8x128xf32>
    %69 = tpu.matmul %67, %68, %cst_60 {dimension_numbers = #tpu.dot_dimension_numbers<[1], [0], [0], [1], [0, 0, 1, 1], [], []>} : vector<8x256xbf16>, vector<256x128xbf16>, vector<8x128xf32> -> vector<8x128xf32>
    %c0_61 = arith.constant 0 : index
    %c0_62 = arith.constant 0 : index
    %70 = vector.load %arg7[%c0_61, %c0_62] : memref<1x128xf32, #tpu.memory_space<vmem>>, vector<1x128xf32>
    %71 = vector.broadcast %70 : vector<1x128xf32> to vector<8x128xf32>
    %72 = arith.addf %69, %71 : vector<8x128xf32>
    %c0_63 = arith.constant 0 : index
    %c0_64 = arith.constant 0 : index
    %73 = vector.load %arg8[%c0_63, %c0_64] : memref<8x128xf32, #tpu.memory_space<vmem>>, vector<8x128xf32>
    tpu.vector_store %arg8[%c0_63, %c0_64], %72 {strides = array<i32>} : memref<8x128xf32, #tpu.memory_space<vmem>>, vector<8x128xf32>,
    return
  }
  func.func @transform_0(%arg0: i32) -> (i32, i32, i32, i32, i32) {
    %c0_i32 = arith.constant 0 : i32
    %c0_i32_0 = arith.constant 0 : i32
    %c0_i32_1 = arith.constant 0 : i32
    %c0_i32_2 = arith.constant 0 : i32
    %c0_i32_3 = arith.constant 0 : i32
    return %c0_i32, %c0_i32_0, %c0_i32_1, %arg0, %c0_i32_2 : i32, i32, i32, i32, i32
  }
  func.func @transform_1(%arg0: i32) -> (i32, i32) {
    %c0_i32 = arith.constant 0 : i32
    %c0_i32_0 = arith.constant 0 : i32
    %c0_i32_1 = arith.constant 0 : i32
    return %c0_i32, %c0_i32_0 : i32, i32
  }
  func.func @transform_2(%arg0: i32) -> (i32, i32) {
    %c0_i32 = arith.constant 0 : i32
    %c0_i32_0 = arith.constant 0 : i32
    %c0_i32_1 = arith.constant 0 : i32
    return %c0_i32, %c0_i32_0 : i32, i32
  }
  func.func @transform_3(%arg0: i32) -> (i32, i32) {
    %c0_i32 = arith.constant 0 : i32
    %c0_i32_0 = arith.constant 0 : i32
    %c0_i32_1 = arith.constant 0 : i32
    return %c0_i32, %c0_i32_0 : i32, i32
  }
  func.func @transform_4(%arg0: i32) -> (i32, i32) {
    %c0_i32 = arith.constant 0 : i32
    %c0_i32_0 = arith.constant 0 : i32
    %c0_i32_1 = arith.constant 0 : i32
    return %c0_i32, %c0_i32_0 : i32, i32
  }
  func.func @transform_5(%arg0: i32) -> (i32, i32) {
    %c0_i32 = arith.constant 0 : i32
    %c0_i32_0 = arith.constant 0 : i32
    %c0_i32_1 = arith.constant 0 : i32
    return %c0_i32, %c0_i32_0 : i32, i32
  }
  func.func @transform_6(%arg0: i32) -> (i32, i32) {
    %c0_i32 = arith.constant 0 : i32
    %c0_i32_0 = arith.constant 0 : i32
    %c0_i32_1 = arith.constant 0 : i32
    return %c0_i32, %c0_i32_0 : i32, i32
  }
  func.func @transform_7(%arg0: i32) -> (i32, i32) {
    %c0_i32 = arith.constant 0 : i32
    %c0_i32_0 = arith.constant 0 : i32
    return %arg0, %c0_i32 : i32, i32
  }
}

</mosaic_0001>

<llo_original>
// kernel: voxnet_forward.1
$region0: #{voxnet_forward.1}
  #allocation0 [shape = 'u32[]', space=smem, size = 0x4, offset = 0x4, fixed_abs, tag = 'smem constant byte address 0x4 - core index']
  #allocation1 [shape = 'u32[144,128]{1,0:T(1,128)}', space=vmem, size = 0x12000, scoped, tag = 'internal scratch']
  %s0 = inlined_call_operand.vmem [shape: f32[2,2,10,8,128], index: 0, kind: input, shape index: {}]
  %s1 = inlined_call_operand.hbm [shape: bf16[1280,512], index: 1, kind: input, shape index: {}]
  %s2 = inlined_call_operand.hbm [shape: f32[1,512], index: 2, kind: input, shape index: {}]
  %s3 = inlined_call_operand.hbm [shape: bf16[1536,512], index: 3, kind: input, shape index: {}]
  %s4 = inlined_call_operand.hbm [shape: f32[1,512], index: 4, kind: input, shape index: {}]
  %s5 = inlined_call_operand.hbm [shape: bf16[256,128], index: 5, kind: input, shape index: {}]
  %s6 = inlined_call_operand.hbm [shape: f32[1,128], index: 6, kind: input, shape index: {}]
  %s7 = inlined_call_operand.vmem [shape: f32[8,128], index: 7, kind: output, shape index: {}]
  %s8 = sld [smem:[#allocation0]]
  $region62: #{voxnet_forward.1} parent=0
    _
  %s10 = ssub.s32 1, %s8
  %s11 = scalar_select 0, %s10, %s8
  $region1: #{voxnet_forward.1} parent=0
    #allocation2 [shape = 'u8[1310720]{0}', space=vmem, size = 0x140000, scoped, tag = 'input window, operand 1, single buffered']
    #allocation3 [shape = 's32[1]{0}', space=sflag, size = 0x4, scoped, tag = 'scoped memory for voxnet_forward.1']
    #allocation4 [shape = 'u8[2048]{0}', space=vmem, size = 0x800, scoped, tag = 'input window, operand 2, single buffered']
    #allocation5 [shape = 's32[1]{0}', space=sflag, size = 0x4, scoped, tag = 'scoped memory for voxnet_forward.1']
    #allocation6 [shape = 'u8[1572864]{0}', space=vmem, size = 0x180000, scoped, tag = 'input window, operand 3, single buffered']
    #allocation7 [shape = 'u8[2048]{0}', space=vmem, size = 0x800, scoped, tag = 'input window, operand 4, single buffered']
    #allocation8 [shape = 's32[1]{0}', space=sflag, size = 0x4, scoped, tag = 'scoped memory for voxnet_forward.1']
    #allocation9 [shape = 'u8[65536]{0}', space=vmem, size = 0x10000, scoped, tag = 'input window, operand 5, single buffered']
    #allocation10 [shape = 'u8[512]{0}', space=vmem, size = 0x400, scoped, tag = 'input window, operand 6, single buffered']
    #allocation11 [shape = 's32[1]{0}', space=sflag, size = 0x4, scoped, tag = 'scoped memory for voxnet_forward.1']
    %12 = vsyncpa [#allocation3], 0
    %13 = vsyncpa [#allocation5], 0
    %14 = vsyncpa [#allocation8], 0
    %15 = vsyncpa [#allocation11], 0
    // Predicated region
    $region2: #{voxnet_forward.1} parent=1 // pred_check
      _
    $region3: #{voxnet_forward.1} parent=1 // pred_check_branch
      %17 = sbr.rel (0) target = $region5
    $region4: #{voxnet_forward.1} parent=1 // pred_region
      _
    $region5: #{voxnet_forward.1} parent=1 // pred_fallthru
      _
    // Predicated region
    $region6: #{voxnet_forward.1} parent=1 // pred_check
      _
    $region7: #{voxnet_forward.1} parent=1 // pred_check_branch
      %19 = sbr.rel (0) target = $region9
    $region8: #{voxnet_forward.1} parent=1 // pred_region
      %s21 = ssub.s32 40960, 40960
      %22 = vsyncadd [#allocation3], %s21
      %s23 = sshll.u32 [#allocation2], 4
      %s24 = int_to_ptr.vmem [resolvable:$true] %s23
      %29 = dma.hbm_to_vmem [thread:$0]  %s1, 40960, %s24, [#allocation3], 256, 256, 16
    $region9: #{voxnet_forward.1} parent=1 // pred_fallthru
      _
    // Predicated region
    $region10: #{voxnet_forward.1} parent=1 // pred_check
      _
    $region11: #{voxnet_forward.1} parent=1 // pred_check_branch
      %31 = sbr.rel (0) target = $region13
    $region12: #{voxnet_forward.1} parent=1 // pred_region
      %s33 = ssub.s32 64, 64
      %34 = vsyncadd [#allocation5], %s33
      %s36 = sshll.u32 [#allocation4], 4
      %s37 = int_to_ptr.vmem [resolvable:$true] %s36
      %39 = dma.hbm_to_vmem [thread:$0]  %s2, 64, %s37, [#allocation5]
    $region13: #{voxnet_forward.1} parent=1 // pred_fallthru
      _
    // Predicated region
    $region14: #{voxnet_forward.1} parent=1 // pred_check
      _
    $region15: #{voxnet_forward.1} parent=1 // pred_check_branch
      %41 = sbr.rel (0) target = $region17
    $region16: #{voxnet_forward.1} parent=1 // pred_region
      %s43 = ssub.s32 49152, 49152
      %44 = vsyncadd [#allocation5], %s43
      %s45 = sshll.u32 [#allocation6], 4
      %s46 = int_to_ptr.vmem [resolvable:$true] %s45
      %51 = dma.hbm_to_vmem [thread:$0]  %s3, 49152, %s46, [#allocation5], 256, 256, 16
    $region17: #{voxnet_forward.1} parent=1 // pred_fallthru
      _
    // Predicated region
    $region18: #{voxnet_forward.1} parent=1 // pred_check
      _
    $region19: #{voxnet_forward.1} parent=1 // pred_check_branch
      %53 = sbr.rel (0) target = $region21
    $region20: #{voxnet_forward.1} parent=1 // pred_region
      %s55 = ssub.s32 64, 64
      %56 = vsyncadd [#allocation8], %s55
      %s58 = sshll.u32 [#allocation7], 4
      %s59 = int_to_ptr.vmem [resolvable:$true] %s58
      %61 = dma.hbm_to_vmem [thread:$0]  %s4, 64, %s59, [#allocation8]
    $region21: #{voxnet_forward.1} parent=1 // pred_fallthru
      _
    // Predicated region
    $region22: #{voxnet_forward.1} parent=1 // pred_check
      _
    $region23: #{voxnet_forward.1} parent=1 // pred_check_branch
      %63 = sbr.rel (0) target = $region25
    $region24: #{voxnet_forward.1} parent=1 // pred_region
      %s65 = ssub.s32 2048, 2048
      %66 = vsyncadd [#allocation8], %s65
      %s67 = sshll.u32 [#allocation9], 4
      %s68 = int_to_ptr.vmem [resolvable:$true] %s67
      %73 = dma.hbm_to_vmem [thread:$0]  %s5, 2048, %s68, [#allocation8], 64, 64, 4
    $region25: #{voxnet_forward.1} parent=1 // pred_fallthru
      _
    // Predicated region
    $region26: #{voxnet_forward.1} parent=1 // pred_check
      _
    $region27: #{voxnet_forward.1} parent=1 // pred_check_branch
      %75 = sbr.rel (0) target = $region29
    $region28: #{voxnet_forward.1} parent=1 // pred_region
      %s77 = ssub.s32 16, 16
      %78 = vsyncadd [#allocation11], %s77
      %s80 = sshll.u32 [#allocation10], 4
      %s81 = int_to_ptr.vmem [resolvable:$true] %s80
      %83 = dma.hbm_to_vmem [thread:$0]  %s6, 16, %s81, [#allocation11]
    $region29: #{voxnet_forward.1} parent=1 // pred_fallthru
      _
    // Predicated region
    $region30: #{voxnet_forward.1} parent=1 // pred_check
      _
    $region31: #{voxnet_forward.1} parent=1 // pred_check_branch
      %85 = sbr.rel (0) target = $region33
    $region32: #{voxnet_forward.1} parent=1 // pred_region
      %86 = dma.done [#allocation3], 40960
    $region33: #{voxnet_forward.1} parent=1 // pred_fallthru
      _
    // Predicated region
    $region34: #{voxnet_forward.1} parent=1 // pred_check
      _
    $region35: #{voxnet_forward.1} parent=1 // pred_check_branch
      %88 = sbr.rel (0) target = $region37
    $region36: #{voxnet_forward.1} parent=1 // pred_region
      %89 = dma.done [#allocation5], 64
    $region37: #{voxnet_forward.1} parent=1 // pred_fallthru
      _
    // Predicated region
    $region38: #{voxnet_forward.1} parent=1 // pred_check
      _
    $region39: #{voxnet_forward.1} parent=1 // pred_check_branch
      %91 = sbr.rel (0) target = $region41
    $region40: #{voxnet_forward.1} parent=1 // pred_region
      %92 = dma.done [#allocation5], 49152
    $region41: #{voxnet_forward.1} parent=1 // pred_fallthru
      _
    // Predicated region
    $region42: #{voxnet_forward.1} parent=1 // pred_check
      _
    $region43: #{voxnet_forward.1} parent=1 // pred_check_branch
      %94 = sbr.rel (0) target = $region45
    $region44: #{voxnet_forward.1} parent=1 // pred_region
      %95 = dma.done [#allocation8], 64
    $region45: #{voxnet_forward.1} parent=1 // pred_fallthru
      _
    // Predicated region
    $region46: #{voxnet_forward.1} parent=1 // pred_check
      _
    $region47: #{voxnet_forward.1} parent=1 // pred_check_branch
      %97 = sbr.rel (0) target = $region49
    $region48: #{voxnet_forward.1} parent=1 // pred_region
      %98 = dma.done [#allocation8], 2048
    $region49: #{voxnet_forward.1} parent=1 // pred_fallthru
      _
    // Predicated region
    $region50: #{voxnet_forward.1} parent=1 // pred_check
      _
    $region51: #{voxnet_forward.1} parent=1 // pred_check_branch
      %100 = sbr.rel (0) target = $region53
    $region52: #{voxnet_forward.1} parent=1 // pred_region
      %101 = dma.done [#allocation11], 16
    $region53: #{voxnet_forward.1} parent=1 // pred_fallthru
      _
    %v103 = vld [vmem:[%s0] sm:$0xff]
    %v104 = vld [vmem:[%s0 + $0x8] sm:$0xff]
    %v105 = vld [vmem:[%s0 + $0x10] sm:$0xff]
    %v106 = vld [vmem:[%s0 + $0x18] sm:$0xff]
    %v107 = vld [vmem:[%s0 + $0x20] sm:$0xff]
    %v108 = vld [vmem:[%s0 + $0x28] sm:$0xff]
    %v109 = vld [vmem:[%s0 + $0x30] sm:$0xff]
    %v110 = vld [vmem:[%s0 + $0x38] sm:$0xff]
    %s111 = scalar_lea.vmem %s0, 80
    %v112 = vld [vmem:[%s111] sm:$0xff]
    %v113 = vld [vmem:[%s111 + $0x8] sm:$0xff]
    %v114 = vld [vmem:[%s111 + $0x10] sm:$0xff]
    %v115 = vld [vmem:[%s111 + $0x18] sm:$0xff]
    %v116 = vld [vmem:[%s111 + $0x20] sm:$0xff]
    %v117 = vld [vmem:[%s111 + $0x28] sm:$0xff]
    %v118 = vld [vmem:[%s111 + $0x30] sm:$0xff]
    %v119 = vld [vmem:[%s111 + $0x38] sm:$0xff]
    %s120 = scalar_lea.vmem %s0, 160
    %v121 = vld [vmem:[%s120] sm:$0xff]
    %v122 = vld [vmem:[%s120 + $0x8] sm:$0xff]
    %v123 = vld [vmem:[%s120 + $0x10] sm:$0xff]
    %v124 = vld [vmem:[%s120 + $0x18] sm:$0xff]
    %v125 = vld [vmem:[%s120 + $0x20] sm:$0xff]
    %v126 = vld [vmem:[%s120 + $0x28] sm:$0xff]
    %v127 = vld [vmem:[%s120 + $0x30] sm:$0xff]
    %v128 = vld [vmem:[%s120 + $0x38] sm:$0xff]
    %s129 = scalar_lea.vmem %s0, 240
    %v130 = vld [vmem:[%s129] sm:$0xff]
    %v131 = vld [vmem:[%s129 + $0x8] sm:$0xff]
    %v132 = vld [vmem:[%s129 + $0x10] sm:$0xff]
    %v133 = vld [vmem:[%s129 + $0x18] sm:$0xff]
    %v134 = vld [vmem:[%s129 + $0x20] sm:$0xff]
    %v135 = vld [vmem:[%s129 + $0x28] sm:$0xff]
    %v136 = vld [vmem:[%s129 + $0x30] sm:$0xff]
    %v137 = vld [vmem:[%s129 + $0x38] sm:$0xff]
    %s138 = scalar_lea.vmem %s0, 8
    %v139 = vld [vmem:[%s138] sm:$0xff]
    %v140 = vld [vmem:[%s138 + $0x8] sm:$0xff]
    %v141 = vld [vmem:[%s138 + $0x10] sm:$0xff]
    %v142 = vld [vmem:[%s138 + $0x18] sm:$0xff]
    %v143 = vld [vmem:[%s138 + $0x20] sm:$0xff]
    %v144 = vld [vmem:[%s138 + $0x28] sm:$0xff]
    %v145 = vld [vmem:[%s138 + $0x30] sm:$0xff]
    %v146 = vld [vmem:[%s138 + $0x38] sm:$0xff]
    %s147 = scalar_lea.vmem %s0, 88
    %v148 = vld [vmem:[%s147] sm:$0xff]
    %v149 = vld [vmem:[%s147 + $0x8] sm:$0xff]
    %v150 = vld [vmem:[%s147 + $0x10] sm:$0xff]
    %v151 = vld [vmem:[%s147 + $0x18] sm:$0xff]
    %v152 = vld [vmem:[%s147 + $0x20] sm:$0xff]
    %v153 = vld [vmem:[%s147 + $0x28] sm:$0xff]
    %v154 = vld [vmem:[%s147 + $0x30] sm:$0xff]
    %v155 = vld [vmem:[%s147 + $0x38] sm:$0xff]
    %s156 = scalar_lea.vmem %s0, 168
    %v157 = vld [vmem:[%s156] sm:$0xff]
    %v158 = vld [vmem:[%s156 + $0x8] sm:$0xff]
    %v159 = vld [vmem:[%s156 + $0x10] sm:$0xff]
    %v160 = vld [vmem:[%s156 + $0x18] sm:$0xff]
    %v161 = vld [vmem:[%s156 + $0x20] sm:$0xff]
    %v162 = vld [vmem:[%s156 + $0x28] sm:$0xff]
    %v163 = vld [vmem:[%s156 + $0x30] sm:$0xff]
    %v164 = vld [vmem:[%s156 + $0x38] sm:$0xff]
    %s165 = scalar_lea.vmem %s0, 248
    %v166 = vld [vmem:[%s165] sm:$0xff]
    %v167 = vld [vmem:[%s165 + $0x8] sm:$0xff]
    %v168 = vld [vmem:[%s165 + $0x10] sm:$0xff]
    %v169 = vld [vmem:[%s165 + $0x18] sm:$0xff]
    %v170 = vld [vmem:[%s165 + $0x20] sm:$0xff]
    %v171 = vld [vmem:[%s165 + $0x28] sm:$0xff]
    %v172 = vld [vmem:[%s165 + $0x30] sm:$0xff]
    %v173 = vld [vmem:[%s165 + $0x38] sm:$0xff]
    %s174 = scalar_lea.vmem %s0, 16
    %v175 = vld [vmem:[%s174] sm:$0xff]
    %v176 = vld [vmem:[%s174 + $0x8] sm:$0xff]
    %v177 = vld [vmem:[%s174 + $0x10] sm:$0xff]
    %v178 = vld [vmem:[%s174 + $0x18] sm:$0xff]
    %v179 = vld [vmem:[%s174 + $0x20] sm:$0xff]
    %v180 = vld [vmem:[%s174 + $0x28] sm:$0xff]
    %v181 = vld [vmem:[%s174 + $0x30] sm:$0xff]
    %v182 = vld [vmem:[%s174 + $0x38] sm:$0xff]
    %s183 = scalar_lea.vmem %s0, 96
    %v184 = vld [vmem:[%s183] sm:$0xff]
    %v185 = vld [vmem:[%s183 + $0x8] sm:$0xff]
    %v186 = vld [vmem:[%s183 + $0x10] sm:$0xff]
    %v187 = vld [vmem:[%s183 + $0x18] sm:$0xff]
    %v188 = vld [vmem:[%s183 + $0x20] sm:$0xff]
    %v189 = vld [vmem:[%s183 + $0x28] sm:$0xff]
    %v190 = vld [vmem:[%s183 + $0x30] sm:$0xff]
    %v191 = vld [vmem:[%s183 + $0x38] sm:$0xff]
    %v192 = vpack.c.bf16 %v104, %v103
    %v193 = vpack.c.bf16 %v113, %v112
    %v194 = vpack.c.bf16 %v122, %v121
    %v195 = vpack.c.bf16 %v131, %v130
    %v196 = vpack.c.bf16 %v140, %v139
    %v197 = vpack.c.bf16 %v149, %v148
    %v198 = vpack.c.bf16 %v158, %v157
    %v199 = vpack.c.bf16 %v167, %v166
    %v200 = vpack.c.bf16 %v176, %v175
    %v201 = vpack.c.bf16 %v185, %v184
    %v202 = vpack.c.bf16 %v106, %v105
    %v203 = vpack.c.bf16 %v115, %v114
    %v204 = vpack.c.bf16 %v124, %v123
    %v205 = vpack.c.bf16 %v133, %v132
    %v206 = vpack.c.bf16 %v142, %v141
    %v207 = vpack.c.bf16 %v151, %v150
    %v208 = vpack.c.bf16 %v160, %v159
    %v209 = vpack.c.bf16 %v169, %v168
    %v210 = vpack.c.bf16 %v178, %v177
    %v211 = vpack.c.bf16 %v187, %v186
    %v212 = vpack.c.bf16 %v108, %v107
    %v213 = vpack.c.bf16 %v117, %v116
    %v214 = vpack.c.bf16 %v126, %v125
    %v215 = vpack.c.bf16 %v135, %v134
    %v216 = vpack.c.bf16 %v144, %v143
    %v217 = vpack.c.bf16 %v153, %v152
    %v218 = vpack.c.bf16 %v162, %v161
    %v219 = vpack.c.bf16 %v171, %v170
    %v220 = vpack.c.bf16 %v180, %v179
    %v221 = vpack.c.bf16 %v189, %v188
    %v222 = vpack.c.bf16 %v110, %v109
    %v223 = vpack.c.bf16 %v119, %v118
    %v224 = vpack.c.bf16 %v128, %v127
    %v225 = vpack.c.bf16 %v137, %v136
    %v226 = vpack.c.bf16 %v146, %v145
    %v227 = vpack.c.bf16 %v155, %v154
    %v228 = vpack.c.bf16 %v164, %v163
    %v229 = vpack.c.bf16 %v173, %v172
    %v230 = vpack.c.bf16 %v182, %v181
    %v231 = vpack.c.bf16 %v191, %v190
    %v232 = vld [vmem:[#allocation2] sm:$0xff]
    %v233 = vld [vmem:[#allocation2 + $0x8] sm:$0xff]
    %v234 = vld [vmem:[#allocation2 + $0x10] sm:$0xff]
    %v235 = vld [vmem:[#allocation2 + $0x18] sm:$0xff]
    %v236 = vld [vmem:[#allocation2 + $0x20] sm:$0xff]
    %v237 = vld [vmem:[#allocation2 + $0x28] sm:$0xff]
    %v238 = vld [vmem:[#allocation2 + $0x30] sm:$0xff]
    %v239 = vld [vmem:[#allocation2 + $0x38] sm:$0xff]
    %v240 = vld [vmem:[#allocation2 + $0x40] sm:$0xff]
    %v241 = vld [vmem:[#allocation2 + $0x48] sm:$0xff]
    %v242 = vld [vmem:[#allocation2 + $0x50] sm:$0xff]
    %v243 = vld [vmem:[#allocation2 + $0x58] sm:$0xff]
    %v244 = vld [vmem:[#allocation2 + $0x60] sm:$0xff]
    %v245 = vld [vmem:[#allocation2 + $0x68] sm:$0xff]
    %v246 = vld [vmem:[#allocation2 + $0x70] sm:$0xff]
    %v247 = vld [vmem:[#allocation2 + $0x78] sm:$0xff]
    %v248 = vld [vmem:[#allocation2 + $0x80] sm:$0xff]
    %v249 = vld [vmem:[#allocation2 + $0x88] sm:$0xff]
    %v250 = vld [vmem:[#allocation2 + $0x90] sm:$0xff]
    %v251 = vld [vmem:[#allocation2 + $0x98] sm:$0xff]
    %v252 = vld [vmem:[#allocation2 + $0xa0] sm:$0xff]
    %v253 = vld [vmem:[#allocation2 + $0xa8] sm:$0xff]
    %v254 = vld [vmem:[#allocation2 + $0xb0] sm:$0xff]
    %v255 = vld [vmem:[#allocation2 + $0xb8] sm:$0xff]
    %v256 = vld [vmem:[#allocation2 + $0xc0] sm:$0xff]
    %v257 = vld [vmem:[#allocation2 + $0xc8] sm:$0xff]
    %v258 = vld [vmem:[#allocation2 + $0xd0] sm:$0xff]
    %v259 = vld [vmem:[#allocation2 + $0xd8] sm:$0xff]
    %v260 = vld [vmem:[#allocation2 + $0xe0] sm:$0xff]
    %v261 = vld [vmem:[#allocation2 + $0xe8] sm:$0xff]
    %v262 = vld [vmem:[#allocation2 + $0xf0] sm:$0xff]
    %v263 = vld [vmem:[#allocation2 + $0xf8] sm:$0xff]
    %v264 = vld [vmem:[#allocation2 + $0x100] sm:$0xff]
    %v265 = vld [vmem:[#allocation2 + $0x108] sm:$0xff]
    %v266 = vld [vmem:[#allocation2 + $0x110] sm:$0xff]
    %v267 = vld [vmem:[#allocation2 + $0x118] sm:$0xff]
    %v268 = vld [vmem:[#allocation2 + $0x120] sm:$0xff]
    %v269 = vld [vmem:[#allocation2 + $0x128] sm:$0xff]
    %v270 = vld [vmem:[#allocation2 + $0x130] sm:$0xff]
    %v271 = vld [vmem:[#allocation2 + $0x138] sm:$0xff]
    %v272 = vld [vmem:[#allocation2 + $0x140] sm:$0xff]
    %v273 = vld [vmem:[#allocation2 + $0x148] sm:$0xff]
    %v274 = vld [vmem:[#allocation2 + $0x150] sm:$0xff]
    %v275 = vld [vmem:[#allocation2 + $0x158] sm:$0xff]
    %v276 = vld [vmem:[#allocation2 + $0x160] sm:$0xff]
    %v277 = vld [vmem:[#allocation2 + $0x168] sm:$0xff]
    %v278 = vld [vmem:[#allocation2 + $0x170] sm:$0xff]
    %v279 = vld [vmem:[#allocation2 + $0x178] sm:$0xff]
    %v280 = vld [vmem:[#allocation2 + $0x180] sm:$0xff]
    %v281 = vld [vmem:[#allocation2 + $0x188] sm:$0xff]
    %v282 = vld [vmem:[#allocation2 + $0x190] sm:$0xff]
    %v283 = vld [vmem:[#allocation2 + $0x198] sm:$0xff]
    %v284 = vld [vmem:[#allocation2 + $0x1a0] sm:$0xff]
    %v285 = vld [vmem:[#allocation2 + $0x1a8] sm:$0xff]
    %v286 = vld [vmem:[#allocation2 + $0x1b0] sm:$0xff]
    %v287 = vld [vmem:[#allocation2 + $0x1b8] sm:$0xff]
    %v288 = vld [vmem:[#allocation2 + $0x1c0] sm:$0xff]
    %v289 = vld [vmem:[#allocation2 + $0x1c8] sm:$0xff]
    %v290 = vld [vmem:[#allocation2 + $0x1d0] sm:$0xff]
    %v291 = vld [vmem:[#allocation2 + $0x1d8] sm:$0xff]
    %v292 = vld [vmem:[#allocation2 + $0x1e0] sm:$0xff]
    %v293 = vld [vmem:[#allocation2 + $0x1e8] sm:$0xff]
    %v294 = vld [vmem:[#allocation2 + $0x1f0] sm:$0xff]
    %v295 = vld [vmem:[#allocation2 + $0x1f8] sm:$0xff]
    %v296 = vld [vmem:[#allocation2 + $0x200] sm:$0xff]
    %v297 = vld [vmem:[#allocation2 + $0x208] sm:$0xff]
    %v298 = vld [vmem:[#allocation2 + $0x210] sm:$0xff]
    %v299 = vld [vmem:[#allocation2 + $0x218] sm:$0xff]
    %v300 = vld [vmem:[#allocation2 + $0x220] sm:$0xff]
    %v301 = vld [vmem:[#allocation2 + $0x228] sm:$0xff]
    %v302 = vld [vmem:[#allocation2 + $0x230] sm:$0xff]
    %v303 = vld [vmem:[#allocation2 + $0x238] sm:$0xff]
    %v304 = vld [vmem:[#allocation2 + $0x240] sm:$0xff]
    %v305 = vld [vmem:[#allocation2 + $0x248] sm:$0xff]
    %v306 = vld [vmem:[#allocation2 + $0x250] sm:$0xff]
    %v307 = vld [vmem:[#allocation2 + $0x258] sm:$0xff]
    %v308 = vld [vmem:[#allocation2 + $0x260] sm:$0xff]
    %v309 = vld [vmem:[#allocation2 + $0x268] sm:$0xff]
    %v310 = vld [vmem:[#allocation2 + $0x270] sm:$0xff]
    %v311 = vld [vmem:[#allocation2 + $0x278] sm:$0xff]
    %v312 = vld [vmem:[#allocation2 + $0x280] sm:$0xff]
    %v313 = vld [vmem:[#allocation2 + $0x288] sm:$0xff]
    %v314 = vld [vmem:[#allocation2 + $0x290] sm:$0xff]
    %v315 = vld [vmem:[#allocation2 + $0x298] sm:$0xff]
    %v316 = vld [vmem:[#allocation2 + $0x2a0] sm:$0xff]
    %v317 = vld [vmem:[#allocation2 + $0x2a8] sm:$0xff]
    %v318 = vld [vmem:[#allocation2 + $0x2b0] sm:$0xff]
    %v319 = vld [vmem:[#allocation2 + $0x2b8] sm:$0xff]
    %v320 = vld [vmem:[#allocation2 + $0x2c0] sm:$0xff]
    %v321 = vld [vmem:[#allocation2 + $0x2c8] sm:$0xff]
    %v322 = vld [vmem:[#allocation2 + $0x2d0] sm:$0xff]
    %v323 = vld [vmem:[#allocation2 + $0x2d8] sm:$0xff]
    %v324 = vld [vmem:[#allocation2 + $0x2e0] sm:$0xff]
    %v325 = vld [vmem:[#allocation2 + $0x2e8] sm:$0xff]
    %v326 = vld [vmem:[#allocation2 + $0x2f0] sm:$0xff]
    %v327 = vld [vmem:[#allocation2 + $0x2f8] sm:$0xff]
    %v328 = vld [vmem:[#allocation2 + $0x300] sm:$0xff]
    %v329 = vld [vmem:[#allocation2 + $0x308] sm:$0xff]
    %v330 = vld [vmem:[#allocation2 + $0x310] sm:$0xff]
    %v331 = vld [vmem:[#allocation2 + $0x318] sm:$0xff]
    %v332 = vld [vmem:[#allocation2 + $0x320] sm:$0xff]
    %v333 = vld [vmem:[#allocation2 + $0x328] sm:$0xff]
    %v334 = vld [vmem:[#allocation2 + $0x330] sm:$0xff]
    %v335 = vld [vmem:[#allocation2 + $0x338] sm:$0xff]
    %v336 = vld [vmem:[#allocation2 + $0x340] sm:$0xff]
    %v337 = vld [vmem:[#allocation2 + $0x348] sm:$0xff]
    %v338 = vld [vmem:[#allocation2 + $0x350] sm:$0xff]
    %v339 = vld [vmem:[#allocation2 + $0x358] sm:$0xff]
    %v340 = vld [vmem:[#allocation2 + $0x360] sm:$0xff]
    %v341 = vld [vmem:[#allocation2 + $0x368] sm:$0xff]
    %v342 = vld [vmem:[#allocation2 + $0x370] sm:$0xff]
    %v343 = vld [vmem:[#allocation2 + $0x378] sm:$0xff]
    %v344 = vld [vmem:[#allocation2 + $0x380] sm:$0xff]
    %v345 = vld [vmem:[#allocation2 + $0x388] sm:$0xff]
    %v346 = vld [vmem:[#allocation2 + $0x390] sm:$0xff]
    %v347 = vld [vmem:[#allocation2 + $0x398] sm:$0xff]
    %v348 = vld [vmem:[#allocation2 + $0x3a0] sm:$0xff]
    %v349 = vld [vmem:[#allocation2 + $0x3a8] sm:$0xff]
    %v350 = vld [vmem:[#allocation2 + $0x3b0] sm:$0xff]
    %v351 = vld [vmem:[#allocation2 + $0x3b8] sm:$0xff]
    %v352 = vld [vmem:[#allocation2 + $0x3c0] sm:$0xff]
    %v353 = vld [vmem:[#allocation2 + $0x3c8] sm:$0xff]
    %v354 = vld [vmem:[#allocation2 + $0x3d0] sm:$0xff]
    %v355 = vld [vmem:[#allocation2 + $0x3d8] sm:$0xff]
    %v356 = vld [vmem:[#allocation2 + $0x3e0] sm:$0xff]
    %v357 = vld [vmem:[#allocation2 + $0x3e8] sm:$0xff]
    %v358 = vld [vmem:[#allocation2 + $0x3f0] sm:$0xff]
    %v359 = vld [vmem:[#allocation2 + $0x3f8] sm:$0xff]
    %v360 = vld [vmem:[#allocation2 + $0x400] sm:$0xff]
    %v361 = vld [vmem:[#allocation2 + $0x408] sm:$0xff]
    %v362 = vld [vmem:[#allocation2 + $0x410] sm:$0xff]
    %v363 = vld [vmem:[#allocation2 + $0x418] sm:$0xff]
    %v364 = vld [vmem:[#allocation2 + $0x420] sm:$0xff]
    %v365 = vld [vmem:[#allocation2 + $0x428] sm:$0xff]
    %v366 = vld [vmem:[#allocation2 + $0x430] sm:$0xff]
    %v367 = vld [vmem:[#allocation2 + $0x438] sm:$0xff]
    %v368 = vld [vmem:[#allocation2 + $0x440] sm:$0xff]
    %v369 = vld [vmem:[#allocation2 + $0x448] sm:$0xff]
    %v370 = vld [vmem:[#allocation2 + $0x450] sm:$0xff]
    %v371 = vld [vmem:[#allocation2 + $0x458] sm:$0xff]
    %v372 = vld [vmem:[#allocation2 + $0x460] sm:$0xff]
    %v373 = vld [vmem:[#allocation2 + $0x468] sm:$0xff]
    %v374 = vld [vmem:[#allocation2 + $0x470] sm:$0xff]
    %v375 = vld [vmem:[#allocation2 + $0x478] sm:$0xff]
    %v376 = vld [vmem:[#allocation2 + $0x480] sm:$0xff]
    %v377 = vld [vmem:[#allocation2 + $0x488] sm:$0xff]
    %v378 = vld [vmem:[#allocation2 + $0x490] sm:$0xff]
    %v379 = vld [vmem:[#allocation2 + $0x498] sm:$0xff]
    %v380 = vld [vmem:[#allocation2 + $0x4a0] sm:$0xff]
    %v381 = vld [vmem:[#allocation2 + $0x4a8] sm:$0xff]
    %v382 = vld [vmem:[#allocation2 + $0x4b0] sm:$0xff]
    %v383 = vld [vmem:[#allocation2 + $0x4b8] sm:$0xff]
    %v384 = vld [vmem:[#allocation2 + $0x4c0] sm:$0xff]
    %v385 = vld [vmem:[#allocation2 + $0x4c8] sm:$0xff]
    %v386 = vld [vmem:[#allocation2 + $0x4d0] sm:$0xff]
    %v387 = vld [vmem:[#allocation2 + $0x4d8] sm:$0xff]
    %v388 = vld [vmem:[#allocation2 + $0x4e0] sm:$0xff]
    %v389 = vld [vmem:[#allocation2 + $0x4e8] sm:$0xff]
    %v390 = vld [vmem:[#allocation2 + $0x4f0] sm:$0xff]
    %v391 = vld [vmem:[#allocation2 + $0x4f8] sm:$0xff]
    %v392 = vld [vmem:[#allocation2 + $0x500] sm:$0xff]
    %v393 = vld [vmem:[#allocation2 + $0x508] sm:$0xff]
    %v394 = vld [vmem:[#allocation2 + $0x510] sm:$0xff]
    %v395 = vld [vmem:[#allocation2 + $0x518] sm:$0xff]
    %v396 = vld [vmem:[#allocation2 + $0x520] sm:$0xff]
    %v397 = vld [vmem:[#allocation2 + $0x528] sm:$0xff]
    %v398 = vld [vmem:[#allocation2 + $0x530] sm:$0xff]
    %v399 = vld [vmem:[#allocation2 + $0x538] sm:$0xff]
    %v400 = vld [vmem:[#allocation2 + $0x540] sm:$0xff]
    %v401 = vld [vmem:[#allocation2 + $0x548] sm:$0xff]
    %v402 = vld [vmem:[#allocation2 + $0x550] sm:$0xff]
    %v403 = vld [vmem:[#allocation2 + $0x558] sm:$0xff]
    %v404 = vld [vmem:[#allocation2 + $0x560] sm:$0xff]
    %v405 = vld [vmem:[#allocation2 + $0x568] sm:$0xff]
    %v406 = vld [vmem:[#allocation2 + $0x570] sm:$0xff]
    %v407 = vld [vmem:[#allocation2 + $0x578] sm:$0xff]
    %v408 = vld [vmem:[#allocation2 + $0x580] sm:$0xff]
    %v409 = vld [vmem:[#allocation2 + $0x588] sm:$0xff]
    %v410 = vld [vmem:[#allocation2 + $0x590] sm:$0xff]
    %v411 = vld [vmem:[#allocation2 + $0x598] sm:$0xff]
    %v412 = vld [vmem:[#allocation2 + $0x5a0] sm:$0xff]
    %v413 = vld [vmem:[#allocation2 + $0x5a8] sm:$0xff]
    %v414 = vld [vmem:[#allocation2 + $0x5b0] sm:$0xff]
    %v415 = vld [vmem:[#allocation2 + $0x5b8] sm:$0xff]
    %v416 = vld [vmem:[#allocation2 + $0x5c0] sm:$0xff]
    %v417 = vld [vmem:[#allocation2 + $0x5c8] sm:$0xff]
    %v418 = vld [vmem:[#allocation2 + $0x5d0] sm:$0xff]
    %v419 = vld [vmem:[#allocation2 + $0x5d8] sm:$0xff]
    %v420 = vld [vmem:[#allocation2 + $0x5e0] sm:$0xff]
    %v421 = vld [vmem:[#allocation2 + $0x5e8] sm:$0xff]
    %v422 = vld [vmem:[#allocation2 + $0x5f0] sm:$0xff]
    %v423 = vld [vmem:[#allocation2 + $0x5f8] sm:$0xff]
    %v424 = vld [vmem:[#allocation2 + $0x600] sm:$0xff]
    %v425 = vld [vmem:[#allocation2 + $0x608] sm:$0xff]
    %v426 = vld [vmem:[#allocation2 + $0x610] sm:$0xff]
    %v427 = vld [vmem:[#allocation2 + $0x618] sm:$0xff]
    %v428 = vld [vmem:[#allocation2 + $0x620] sm:$0xff]
    %v429 = vld [vmem:[#allocation2 + $0x628] sm:$0xff]
    %v430 = vld [vmem:[#allocation2 + $0x630] sm:$0xff]
    %v431 = vld [vmem:[#allocation2 + $0x638] sm:$0xff]
    %v432 = vld [vmem:[#allocation2 + $0x640] sm:$0xff]
    %v433 = vld [vmem:[#allocation2 + $0x648] sm:$0xff]
    %v434 = vld [vmem:[#allocation2 + $0x650] sm:$0xff]
    %v435 = vld [vmem:[#allocation2 + $0x658] sm:$0xff]
    %v436 = vld [vmem:[#allocation2 + $0x660] sm:$0xff]
    %v437 = vld [vmem:[#allocation2 + $0x668] sm:$0xff]
    %v438 = vld [vmem:[#allocation2 + $0x670] sm:$0xff]
    %v439 = vld [vmem:[#allocation2 + $0x678] sm:$0xff]
    %v440 = vld [vmem:[#allocation2 + $0x680] sm:$0xff]
    %v441 = vld [vmem:[#allocation2 + $0x688] sm:$0xff]
    %v442 = vld [vmem:[#allocation2 + $0x690] sm:$0xff]
    %v443 = vld [vmem:[#allocation2 + $0x698] sm:$0xff]
    %v444 = vld [vmem:[#allocation2 + $0x6a0] sm:$0xff]
    %v445 = vld [vmem:[#allocation2 + $0x6a8] sm:$0xff]
    %v446 = vld [vmem:[#allocation2 + $0x6b0] sm:$0xff]
    %v447 = vld [vmem:[#allocation2 + $0x6b8] sm:$0xff]
    %v448 = vld [vmem:[#allocation2 + $0x6c0] sm:$0xff]
    %v449 = vld [vmem:[#allocation2 + $0x6c8] sm:$0xff]
    %v450 = vld [vmem:[#allocation2 + $0x6d0] sm:$0xff]
    %v451 = vld [vmem:[#allocation2 + $0x6d8] sm:$0xff]
    %v452 = vld [vmem:[#allocation2 + $0x6e0] sm:$0xff]
    %v453 = vld [vmem:[#allocation2 + $0x6e8] sm:$0xff]
    %v454 = vld [vmem:[#allocation2 + $0x6f0] sm:$0xff]
    %v455 = vld [vmem:[#allocation2 + $0x6f8] sm:$0xff]
    %v456 = vld [vmem:[#allocation2 + $0x700] sm:$0xff]
    %v457 = vld [vmem:[#allocation2 + $0x708] sm:$0xff]
    %v458 = vld [vmem:[#allocation2 + $0x710] sm:$0xff]
    %v459 = vld [vmem:[#allocation2 + $0x718] sm:$0xff]
    %v460 = vld [vmem:[#allocation2 + $0x720] sm:$0xff]
    %v461 = vld [vmem:[#allocation2 + $0x728] sm:$0xff]
    %v462 = vld [vmem:[#allocation2 + $0x730] sm:$0xff]
    %v463 = vld [vmem:[#allocation2 + $0x738] sm:$0xff]
    %v464 = vld [vmem:[#allocation2 + $0x740] sm:$0xff]
    %v465 = vld [vmem:[#allocation2 + $0x748] sm:$0xff]
    %v466 = vld [vmem:[#allocation2 + $0x750] sm:$0xff]
    %v467 = vld [vmem:[#allocation2 + $0x758] sm:$0xff]
    %v468 = vld [vmem:[#allocation2 + $0x760] sm:$0xff]
    %v469 = vld [vmem:[#allocation2 + $0x768] sm:$0xff]
    %v470 = vld [vmem:[#allocation2 + $0x770] sm:$0xff]
    %v471 = vld [vmem:[#allocation2 + $0x778] sm:$0xff]
    %v472 = vld [vmem:[#allocation2 + $0x780] sm:$0xff]
    %v473 = vld [vmem:[#allocation2 + $0x788] sm:$0xff]
    %v474 = vld [vmem:[#allocation2 + $0x790] sm:$0xff]
    %v475 = vld [vmem:[#allocation2 + $0x798] sm:$0xff]
    %v476 = vld [vmem:[#allocation2 + $0x7a0] sm:$0xff]
    %v477 = vld [vmem:[#allocation2 + $0x7a8] sm:$0xff]
    %v478 = vld [vmem:[#allocation2 + $0x7b0] sm:$0xff]
    %v479 = vld [vmem:[#allocation2 + $0x7b8] sm:$0xff]
    %v480 = vld [vmem:[#allocation2 + $0x7c0] sm:$0xff]
    %v481 = vld [vmem:[#allocation2 + $0x7c8] sm:$0xff]
    %v482 = vld [vmem:[#allocation2 + $0x7d0] sm:$0xff]
    %v483 = vld [vmem:[#allocation2 + $0x7d8] sm:$0xff]
    %v484 = vld [vmem:[#allocation2 + $0x7e0] sm:$0xff]
    %v485 = vld [vmem:[#allocation2 + $0x7e8] sm:$0xff]
    %v486 = vld [vmem:[#allocation2 + $0x7f0] sm:$0xff]
    %v487 = vld [vmem:[#allocation2 + $0x7f8] sm:$0xff]
    %v488 = vld [vmem:[#allocation2 + $0x800] sm:$0xff]
    %v489 = vld [vmem:[#allocation2 + $0x808] sm:$0xff]
    %v490 = vld [vmem:[#allocation2 + $0x810] sm:$0xff]
    %v491 = vld [vmem:[#allocation2 + $0x818] sm:$0xff]
    %v492 = vld [vmem:[#allocation2 + $0x820] sm:$0xff]
    %v493 = vld [vmem:[#allocation2 + $0x828] sm:$0xff]
    %v494 = vld [vmem:[#allocation2 + $0x830] sm:$0xff]
    %v495 = vld [vmem:[#allocation2 + $0x838] sm:$0xff]
    %v496 = vld [vmem:[#allocation2 + $0x840] sm:$0xff]
    %v497 = vld [vmem:[#allocation2 + $0x848] sm:$0xff]
    %v498 = vld [vmem:[#allocation2 + $0x850] sm:$0xff]
    %v499 = vld [vmem:[#allocation2 + $0x858] sm:$0xff]
    %v500 = vld [vmem:[#allocation2 + $0x860] sm:$0xff]
    %v501 = vld [vmem:[#allocation2 + $0x868] sm:$0xff]
    %v502 = vld [vmem:[#allocation2 + $0x870] sm:$0xff]
    %v503 = vld [vmem:[#allocation2 + $0x878] sm:$0xff]
    %v504 = vld [vmem:[#allocation2 + $0x880] sm:$0xff]
    %v505 = vld [vmem:[#allocation2 + $0x888] sm:$0xff]
    %v506 = vld [vmem:[#allocation2 + $0x890] sm:$0xff]
    %v507 = vld [vmem:[#allocation2 + $0x898] sm:$0xff]
    %v508 = vld [vmem:[#allocation2 + $0x8a0] sm:$0xff]
    %v509 = vld [vmem:[#allocation2 + $0x8a8] sm:$0xff]
    %v510 = vld [vmem:[#allocation2 + $0x8b0] sm:$0xff]
    %v511 = vld [vmem:[#allocation2 + $0x8b8] sm:$0xff]
    %v512 = vld [vmem:[#allocation2 + $0x8c0] sm:$0xff]
    %v513 = vld [vmem:[#allocation2 + $0x8c8] sm:$0xff]
    %v514 = vld [vmem:[#allocation2 + $0x8d0] sm:$0xff]
    %v515 = vld [vmem:[#allocation2 + $0x8d8] sm:$0xff]
    %v516 = vld [vmem:[#allocation2 + $0x8e0] sm:$0xff]
    %v517 = vld [vmem:[#allocation2 + $0x8e8] sm:$0xff]
    %v518 = vld [vmem:[#allocation2 + $0x8f0] sm:$0xff]
    %v519 = vld [vmem:[#allocation2 + $0x8f8] sm:$0xff]
    %v520 = vld [vmem:[#allocation2 + $0x900] sm:$0xff]
    %v521 = vld [vmem:[#allocation2 + $0x908] sm:$0xff]
    %v522 = vld [vmem:[#allocation2 + $0x910] sm:$0xff]
    %v523 = vld [vmem:[#allocation2 + $0x918] sm:$0xff]
    %v524 = vld [vmem:[#allocation2 + $0x920] sm:$0xff]
    %v525 = vld [vmem:[#allocation2 + $0x928] sm:$0xff]
    %v526 = vld [vmem:[#allocation2 + $0x930] sm:$0xff]
    %v527 = vld [vmem:[#allocation2 + $0x938] sm:$0xff]
    %v528 = vld [vmem:[#allocation2 + $0x940] sm:$0xff]
    %v529 = vld [vmem:[#allocation2 + $0x948] sm:$0xff]
    %v530 = vld [vmem:[#allocation2 + $0x950] sm:$0xff]
    %v531 = vld [vmem:[#allocation2 + $0x958] sm:$0xff]
    %v532 = vld [vmem:[#allocation2 + $0x960] sm:$0xff]
    %v533 = vld [vmem:[#allocation2 + $0x968] sm:$0xff]
    %v534 = vld [vmem:[#allocation2 + $0x970] sm:$0xff]
    %v535 = vld [vmem:[#allocation2 + $0x978] sm:$0xff]
    %v536 = vld [vmem:[#allocation2 + $0x980] sm:$0xff]
    %v537 = vld [vmem:[#allocation2 + $0x988] sm:$0xff]
    %v538 = vld [vmem:[#allocation2 + $0x990] sm:$0xff]
    %v539 = vld [vmem:[#allocation2 + $0x998] sm:$0xff]
    %v540 = vld [vmem:[#allocation2 + $0x9a0] sm:$0xff]
    %v541 = vld [vmem:[#allocation2 + $0x9a8] sm:$0xff]
    %v542 = vld [vmem:[#allocation2 + $0x9b0] sm:$0xff]
    %v543 = vld [vmem:[#allocation2 + $0x9b8] sm:$0xff]
    %v544 = vld [vmem:[#allocation2 + $0x9c0] sm:$0xff]
    %v545 = vld [vmem:[#allocation2 + $0x9c8] sm:$0xff]
    %v546 = vld [vmem:[#allocation2 + $0x9d0] sm:$0xff]
    %v547 = vld [vmem:[#allocation2 + $0x9d8] sm:$0xff]
    %v548 = vld [vmem:[#allocation2 + $0x9e0] sm:$0xff]
    %v549 = vld [vmem:[#allocation2 + $0x9e8] sm:$0xff]
    %v550 = vld [vmem:[#allocation2 + $0x9f0] sm:$0xff]
    %v551 = vld [vmem:[#allocation2 + $0x9f8] sm:$0xff]
    %v552 = vld [vmem:[#allocation4] sm:$0xf]
    %v554 = vlaneseq
    %v555 = vshrl.u32 %v554, 7
    %v556 = vsub.s32 0, %v555
    %v557 = vrot.slane %v552, %v556
    %v558 = vlaneseq
    %v559 = vshrl.u32 %v558, 7
    %v560 = vsub.s32 1, %v559
    %v561 = vrot.slane %v552, %v560
    %v562 = vlaneseq
    %v563 = vshrl.u32 %v562, 7
    %v564 = vsub.s32 2, %v563
    %v565 = vrot.slane %v552, %v564
    %v566 = vlaneseq
    %v567 = vshrl.u32 %v566, 7
    %v568 = vsub.s32 3, %v567
    %v569 = vrot.slane %v552, %v568
    %v894 = vunpack.c.l.b16 %v232
    %v895 = vunpack.c.h.b16 %v232
    %v896 = vunpack.c.l.b16 %v233
    %v897 = vunpack.c.h.b16 %v233
    %v898 = vunpack.c.l.b16 %v234
    %v899 = vunpack.c.h.b16 %v234
    %v900 = vunpack.c.l.b16 %v235
    %v901 = vunpack.c.h.b16 %v235
    %v902 = vunpack.c.l.b16 %v236
    %v903 = vunpack.c.h.b16 %v236
    %v904 = vunpack.c.l.b16 %v237
    %v905 = vunpack.c.h.b16 %v237
    %v906 = vunpack.c.l.b16 %v238
    %v907 = vunpack.c.h.b16 %v238
    %v908 = vunpack.c.l.b16 %v239
    %v909 = vunpack.c.h.b16 %v239
    %v910 = vunpack.c.l.b16 %v240
    %v911 = vunpack.c.h.b16 %v240
    %v912 = vunpack.c.l.b16 %v241
    %v913 = vunpack.c.h.b16 %v241
    %v914 = vunpack.c.l.b16 %v242
    %v915 = vunpack.c.h.b16 %v242
    %v916 = vunpack.c.l.b16 %v243
    %v917 = vunpack.c.h.b16 %v243
    %v918 = vunpack.c.l.b16 %v244
    %v919 = vunpack.c.h.b16 %v244
    %v920 = vunpack.c.l.b16 %v245
    %v921 = vunpack.c.h.b16 %v245
    %v922 = vunpack.c.l.b16 %v246
    %v923 = vunpack.c.h.b16 %v246
    %v924 = vunpack.c.l.b16 %v247
    %v925 = vunpack.c.h.b16 %v247
    %v926 = vunpack.c.l.b16 %v248
    %v927 = vunpack.c.h.b16 %v248
    %v928 = vunpack.c.l.b16 %v249
    %v929 = vunpack.c.h.b16 %v249
    %v930 = vunpack.c.l.b16 %v250
    %v931 = vunpack.c.h.b16 %v250
    %v932 = vunpack.c.l.b16 %v251
    %v933 = vunpack.c.h.b16 %v251
    %v934 = vunpack.c.l.b16 %v252
    %v935 = vunpack.c.h.b16 %v252
    %v936 = vunpack.c.l.b16 %v253
    %v937 = vunpack.c.h.b16 %v253
    %v938 = vunpack.c.l.b16 %v254
    %v939 = vunpack.c.h.b16 %v254
    %v940 = vunpack.c.l.b16 %v255
    %v941 = vunpack.c.h.b16 %v255
    %v942 = vunpack.c.l.b16 %v256
    %v943 = vunpack.c.h.b16 %v256
    %v944 = vunpack.c.l.b16 %v257
    %v945 = vunpack.c.h.b16 %v257
    %v946 = vunpack.c.l.b16 %v258
    %v947 = vunpack.c.h.b16 %v258
    %v948 = vunpack.c.l.b16 %v259
    %v949 = vunpack.c.h.b16 %v259
    %v950 = vunpack.c.l.b16 %v260
    %v951 = vunpack.c.h.b16 %v260
    %v952 = vunpack.c.l.b16 %v261
    %v953 = vunpack.c.h.b16 %v261
    %v954 = vunpack.c.l.b16 %v262
    %v955 = vunpack.c.h.b16 %v262
    %v956 = vunpack.c.l.b16 %v263
    %v957 = vunpack.c.h.b16 %v263
    %v958 = vunpack.c.l.b16 %v264
    %v959 = vunpack.c.h.b16 %v264
    %v960 = vunpack.c.l.b16 %v265
    %v961 = vunpack.c.h.b16 %v265
    %v962 = vunpack.c.l.b16 %v266
    %v963 = vunpack.c.h.b16 %v266
    %v964 = vunpack.c.l.b16 %v267
    %v965 = vunpack.c.h.b16 %v267
    %v966 = vunpack.c.l.b16 %v268
    %v967 = vunpack.c.h.b16 %v268
    %v968 = vunpack.c.l.b16 %v269
    %v969 = vunpack.c.h.b16 %v269
    %v970 = vunpack.c.l.b16 %v270
    %v971 = vunpack.c.h.b16 %v270
    %v972 = vunpack.c.l.b16 %v271
    %v973 = vunpack.c.h.b16 %v271
    %v974 = vunpack.c.l.b16 %v272
    %v975 = vunpack.c.h.b16 %v272
    %v976 = vunpack.c.l.b16 %v273
    %v977 = vunpack.c.h.b16 %v273
    %v978 = vunpack.c.l.b16 %v274
    %v979 = vunpack.c.h.b16 %v274
    %v980 = vunpack.c.l.b16 %v275
    %v981 = vunpack.c.h.b16 %v275
    %v982 = vunpack.c.l.b16 %v276
    %v983 = vunpack.c.h.b16 %v276
    %v984 = vunpack.c.l.b16 %v277
    %v985 = vunpack.c.h.b16 %v277
    %v986 = vunpack.c.l.b16 %v278
    %v987 = vunpack.c.h.b16 %v278
    %v988 = vunpack.c.l.b16 %v279
    %v989 = vunpack.c.h.b16 %v279
    %v990 = vunpack.c.l.b16 %v280
    %v991 = vunpack.c.h.b16 %v280
    %v992 = vunpack.c.l.b16 %v281
    %v993 = vunpack.c.h.b16 %v281
    %v994 = vunpack.c.l.b16 %v282
    %v995 = vunpack.c.h.b16 %v282
    %v996 = vunpack.c.l.b16 %v283
    %v997 = vunpack.c.h.b16 %v283
    %v998 = vunpack.c.l.b16 %v284
    %v999 = vunpack.c.h.b16 %v284
    %v1000 = vunpack.c.l.b16 %v285
    %v1001 = vunpack.c.h.b16 %v285
    %v1002 = vunpack.c.l.b16 %v286
    %v1003 = vunpack.c.h.b16 %v286
    %v1004 = vunpack.c.l.b16 %v287
    %v1005 = vunpack.c.h.b16 %v287
    %v1006 = vunpack.c.l.b16 %v288
    %v1007 = vunpack.c.h.b16 %v288
    %v1008 = vunpack.c.l.b16 %v289
    %v1009 = vunpack.c.h.b16 %v289
    %v1010 = vunpack.c.l.b16 %v290
    %v1011 = vunpack.c.h.b16 %v290
    %v1012 = vunpack.c.l.b16 %v291
    %v1013 = vunpack.c.h.b16 %v291
    %v1014 = vunpack.c.l.b16 %v292
    %v1015 = vunpack.c.h.b16 %v292
    %v1016 = vunpack.c.l.b16 %v293
    %v1017 = vunpack.c.h.b16 %v293
    %v1018 = vunpack.c.l.b16 %v294
    %v1019 = vunpack.c.h.b16 %v294
    %v1020 = vunpack.c.l.b16 %v295
    %v1021 = vunpack.c.h.b16 %v295
    %v1022 = vunpack.c.l.b16 %v296
    %v1023 = vunpack.c.h.b16 %v296
    %v1024 = vunpack.c.l.b16 %v297
    %v1025 = vunpack.c.h.b16 %v297
    %v1026 = vunpack.c.l.b16 %v298
    %v1027 = vunpack.c.h.b16 %v298
    %v1028 = vunpack.c.l.b16 %v299
    %v1029 = vunpack.c.h.b16 %v299
    %v1030 = vunpack.c.l.b16 %v300
    %v1031 = vunpack.c.h.b16 %v300
    %v1032 = vunpack.c.l.b16 %v301
    %v1033 = vunpack.c.h.b16 %v301
    %v1034 = vunpack.c.l.b16 %v302
    %v1035 = vunpack.c.h.b16 %v302
    %v1036 = vunpack.c.l.b16 %v303
    %v1037 = vunpack.c.h.b16 %v303
    %v1038 = vunpack.c.l.b16 %v304
    %v1039 = vunpack.c.h.b16 %v304
    %v1040 = vunpack.c.l.b16 %v305
    %v1041 = vunpack.c.h.b16 %v305
    %v1042 = vunpack.c.l.b16 %v306
    %v1043 = vunpack.c.h.b16 %v306
    %v1044 = vunpack.c.l.b16 %v307
    %v1045 = vunpack.c.h.b16 %v307
    %v1046 = vunpack.c.l.b16 %v308
    %v1047 = vunpack.c.h.b16 %v308
    %v1048 = vunpack.c.l.b16 %v309
    %v1049 = vunpack.c.h.b16 %v309
    %v1050 = vunpack.c.l.b16 %v310
    %v1051 = vunpack.c.h.b16 %v310
    %v1052 = vunpack.c.l.b16 %v311
    %v1053 = vunpack.c.h.b16 %v311
    %v1054 = vunpack.c.l.b16 %v312
    %v1055 = vunpack.c.h.b16 %v312
    %v1056 = vunpack.c.l.b16 %v313
    %v1057 = vunpack.c.h.b16 %v313
    %v1058 = vunpack.c.l.b16 %v314
    %v1059 = vunpack.c.h.b16 %v314
    %v1060 = vunpack.c.l.b16 %v315
    %v1061 = vunpack.c.h.b16 %v315
    %v1062 = vunpack.c.l.b16 %v316
    %v1063 = vunpack.c.h.b16 %v316
    %v1064 = vunpack.c.l.b16 %v317
    %v1065 = vunpack.c.h.b16 %v317
    %v1066 = vunpack.c.l.b16 %v318
    %v1067 = vunpack.c.h.b16 %v318
    %v1068 = vunpack.c.l.b16 %v319
    %v1069 = vunpack.c.h.b16 %v319
    %v1070 = vunpack.c.l.b16 %v320
    %v1071 = vunpack.c.h.b16 %v320
    %v1072 = vunpack.c.l.b16 %v321
    %v1073 = vunpack.c.h.b16 %v321
    %v1074 = vunpack.c.l.b16 %v322
    %v1075 = vunpack.c.h.b16 %v322
    %v1076 = vunpack.c.l.b16 %v323
    %v1077 = vunpack.c.h.b16 %v323
    %v1078 = vunpack.c.l.b16 %v324
    %v1079 = vunpack.c.h.b16 %v324
    %v1080 = vunpack.c.l.b16 %v325
    %v1081 = vunpack.c.h.b16 %v325
    %v1082 = vunpack.c.l.b16 %v326
    %v1083 = vunpack.c.h.b16 %v326
    %v1084 = vunpack.c.l.b16 %v327
    %v1085 = vunpack.c.h.b16 %v327
    %v1086 = vunpack.c.l.b16 %v328
    %v1087 = vunpack.c.h.b16 %v328
    %v1088 = vunpack.c.l.b16 %v329
    %v1089 = vunpack.c.h.b16 %v329
    %v1090 = vunpack.c.l.b16 %v330
    %v1091 = vunpack.c.h.b16 %v330
    %v1092 = vunpack.c.l.b16 %v331
    %v1093 = vunpack.c.h.b16 %v331
    %v1094 = vunpack.c.l.b16 %v332
    %v1095 = vunpack.c.h.b16 %v332
    %v1096 = vunpack.c.l.b16 %v333
    %v1097 = vunpack.c.h.b16 %v333
    %v1098 = vunpack.c.l.b16 %v334
    %v1099 = vunpack.c.h.b16 %v334
    %v1100 = vunpack.c.l.b16 %v335
    %v1101 = vunpack.c.h.b16 %v335
    %v1102 = vunpack.c.l.b16 %v336
    %v1103 = vunpack.c.h.b16 %v336
    %v1104 = vunpack.c.l.b16 %v337
    %v1105 = vunpack.c.h.b16 %v337
    %v1106 = vunpack.c.l.b16 %v338
    %v1107 = vunpack.c.h.b16 %v338
    %v1108 = vunpack.c.l.b16 %v339
    %v1109 = vunpack.c.h.b16 %v339
    %v1110 = vunpack.c.l.b16 %v340
    %v1111 = vunpack.c.h.b16 %v340
    %v1112 = vunpack.c.l.b16 %v341
    %v1113 = vunpack.c.h.b16 %v341
    %v1114 = vunpack.c.l.b16 %v342
    %v1115 = vunpack.c.h.b16 %v342
    %v1116 = vunpack.c.l.b16 %v343
    %v1117 = vunpack.c.h.b16 %v343
    %v1118 = vunpack.c.l.b16 %v344
    %v1119 = vunpack.c.h.b16 %v344
    %v1120 = vunpack.c.l.b16 %v345
    %v1121 = vunpack.c.h.b16 %v345
    %v1122 = vunpack.c.l.b16 %v346
    %v1123 = vunpack.c.h.b16 %v346
    %v1124 = vunpack.c.l.b16 %v347
    %v1125 = vunpack.c.h.b16 %v347
    %v1126 = vunpack.c.l.b16 %v348
    %v1127 = vunpack.c.h.b16 %v348
    %v1128 = vunpack.c.l.b16 %v349
    %v1129 = vunpack.c.h.b16 %v349
    %v1130 = vunpack.c.l.b16 %v350
    %v1131 = vunpack.c.h.b16 %v350
    %v1132 = vunpack.c.l.b16 %v351
    %v1133 = vunpack.c.h.b16 %v351
    %v1134 = vunpack.c.l.b16 %v352
    %v1135 = vunpack.c.h.b16 %v352
    %v1136 = vunpack.c.l.b16 %v353
    %v1137 = vunpack.c.h.b16 %v353
    %v1138 = vunpack.c.l.b16 %v354
    %v1139 = vunpack.c.h.b16 %v354
    %v1140 = vunpack.c.l.b16 %v355
    %v1141 = vunpack.c.h.b16 %v355
    %v1142 = vunpack.c.l.b16 %v356
    %v1143 = vunpack.c.h.b16 %v356
    %v1144 = vunpack.c.l.b16 %v357
    %v1145 = vunpack.c.h.b16 %v357
    %v1146 = vunpack.c.l.b16 %v358
    %v1147 = vunpack.c.h.b16 %v358
    %v1148 = vunpack.c.l.b16 %v359
    %v1149 = vunpack.c.h.b16 %v359
    %v1150 = vunpack.c.l.b16 %v360
    %v1151 = vunpack.c.h.b16 %v360
    %v1152 = vunpack.c.l.b16 %v361
    %v1153 = vunpack.c.h.b16 %v361
    %v1154 = vunpack.c.l.b16 %v362
    %v1155 = vunpack.c.h.b16 %v362
    %v1156 = vunpack.c.l.b16 %v363
    %v1157 = vunpack.c.h.b16 %v363
    %v1158 = vunpack.c.l.b16 %v364
    %v1159 = vunpack.c.h.b16 %v364
    %v1160 = vunpack.c.l.b16 %v365
    %v1161 = vunpack.c.h.b16 %v365
    %v1162 = vunpack.c.l.b16 %v366
    %v1163 = vunpack.c.h.b16 %v366
    %v1164 = vunpack.c.l.b16 %v367
    %v1165 = vunpack.c.h.b16 %v367
    %v1166 = vunpack.c.l.b16 %v368
    %v1167 = vunpack.c.h.b16 %v368
    %v1168 = vunpack.c.l.b16 %v369
    %v1169 = vunpack.c.h.b16 %v369
    %v1170 = vunpack.c.l.b16 %v370
    %v1171 = vunpack.c.h.b16 %v370
    %v1172 = vunpack.c.l.b16 %v371
    %v1173 = vunpack.c.h.b16 %v371
    %v1174 = vunpack.c.l.b16 %v372
    %v1175 = vunpack.c.h.b16 %v372
    %v1176 = vunpack.c.l.b16 %v373
    %v1177 = vunpack.c.h.b16 %v373
    %v1178 = vunpack.c.l.b16 %v374
    %v1179 = vunpack.c.h.b16 %v374
    %v1180 = vunpack.c.l.b16 %v375
    %v1181 = vunpack.c.h.b16 %v375
    %v1182 = vunpack.c.l.b16 %v376
    %v1183 = vunpack.c.h.b16 %v376
    %v1184 = vunpack.c.l.b16 %v377
    %v1185 = vunpack.c.h.b16 %v377
    %v1186 = vunpack.c.l.b16 %v378
    %v1187 = vunpack.c.h.b16 %v378
    %v1188 = vunpack.c.l.b16 %v379
    %v1189 = vunpack.c.h.b16 %v379
    %v1190 = vunpack.c.l.b16 %v380
    %v1191 = vunpack.c.h.b16 %v380
    %v1192 = vunpack.c.l.b16 %v381
    %v1193 = vunpack.c.h.b16 %v381
    %v1194 = vunpack.c.l.b16 %v382
    %v1195 = vunpack.c.h.b16 %v382
    %v1196 = vunpack.c.l.b16 %v383
    %v1197 = vunpack.c.h.b16 %v383
    %v1198 = vunpack.c.l.b16 %v384
    %v1199 = vunpack.c.h.b16 %v384
    %v1200 = vunpack.c.l.b16 %v385
    %v1201 = vunpack.c.h.b16 %v385
    %v1202 = vunpack.c.l.b16 %v386
    %v1203 = vunpack.c.h.b16 %v386
    %v1204 = vunpack.c.l.b16 %v387
    %v1205 = vunpack.c.h.b16 %v387
    %v1206 = vunpack.c.l.b16 %v388
    %v1207 = vunpack.c.h.b16 %v388
    %v1208 = vunpack.c.l.b16 %v389
    %v1209 = vunpack.c.h.b16 %v389
    %v1210 = vunpack.c.l.b16 %v390
    %v1211 = vunpack.c.h.b16 %v390
    %v1212 = vunpack.c.l.b16 %v391
    %v1213 = vunpack.c.h.b16 %v391
    %v1214 = vunpack.c.l.b16 %v392
    %v1215 = vunpack.c.h.b16 %v392
    %v1216 = vunpack.c.l.b16 %v393
    %v1217 = vunpack.c.h.b16 %v393
    %v1218 = vunpack.c.l.b16 %v394
    %v1219 = vunpack.c.h.b16 %v394
    %v1220 = vunpack.c.l.b16 %v395
    %v1221 = vunpack.c.h.b16 %v395
    %v1222 = vunpack.c.l.b16 %v396
    %v1223 = vunpack.c.h.b16 %v396
    %v1224 = vunpack.c.l.b16 %v397
    %v1225 = vunpack.c.h.b16 %v397
    %v1226 = vunpack.c.l.b16 %v398
    %v1227 = vunpack.c.h.b16 %v398
    %v1228 = vunpack.c.l.b16 %v399
    %v1229 = vunpack.c.h.b16 %v399
    %v1230 = vunpack.c.l.b16 %v400
    %v1231 = vunpack.c.h.b16 %v400
    %v1232 = vunpack.c.l.b16 %v401
    %v1233 = vunpack.c.h.b16 %v401
    %v1234 = vunpack.c.l.b16 %v402
    %v1235 = vunpack.c.h.b16 %v402
    %v1236 = vunpack.c.l.b16 %v403
    %v1237 = vunpack.c.h.b16 %v403
    %v1238 = vunpack.c.l.b16 %v404
    %v1239 = vunpack.c.h.b16 %v404
    %v1240 = vunpack.c.l.b16 %v405
    %v1241 = vunpack.c.h.b16 %v405
    %v1242 = vunpack.c.l.b16 %v406
    %v1243 = vunpack.c.h.b16 %v406
    %v1244 = vunpack.c.l.b16 %v407
    %v1245 = vunpack.c.h.b16 %v407
    %v1246 = vunpack.c.l.b16 %v408
    %v1247 = vunpack.c.h.b16 %v408
    %v1248 = vunpack.c.l.b16 %v409
    %v1249 = vunpack.c.h.b16 %v409
    %v1250 = vunpack.c.l.b16 %v410
    %v1251 = vunpack.c.h.b16 %v410
    %v1252 = vunpack.c.l.b16 %v411
    %v1253 = vunpack.c.h.b16 %v411
    %v1254 = vunpack.c.l.b16 %v412
    %v1255 = vunpack.c.h.b16 %v412
    %v1256 = vunpack.c.l.b16 %v413
    %v1257 = vunpack.c.h.b16 %v413
    %v1258 = vunpack.c.l.b16 %v414
    %v1259 = vunpack.c.h.b16 %v414
    %v1260 = vunpack.c.l.b16 %v415
    %v1261 = vunpack.c.h.b16 %v415
    %v1262 = vunpack.c.l.b16 %v416
    %v1263 = vunpack.c.h.b16 %v416
    %v1264 = vunpack.c.l.b16 %v417
    %v1265 = vunpack.c.h.b16 %v417
    %v1266 = vunpack.c.l.b16 %v418
    %v1267 = vunpack.c.h.b16 %v418
    %v1268 = vunpack.c.l.b16 %v419
    %v1269 = vunpack.c.h.b16 %v419
    %v1270 = vunpack.c.l.b16 %v420
    %v1271 = vunpack.c.h.b16 %v420
    %v1272 = vunpack.c.l.b16 %v421
    %v1273 = vunpack.c.h.b16 %v421
    %v1274 = vunpack.c.l.b16 %v422
    %v1275 = vunpack.c.h.b16 %v422
    %v1276 = vunpack.c.l.b16 %v423
    %v1277 = vunpack.c.h.b16 %v423
    %v1278 = vunpack.c.l.b16 %v424
    %v1279 = vunpack.c.h.b16 %v424
    %v1280 = vunpack.c.l.b16 %v425
    %v1281 = vunpack.c.h.b16 %v425
    %v1282 = vunpack.c.l.b16 %v426
    %v1283 = vunpack.c.h.b16 %v426
    %v1284 = vunpack.c.l.b16 %v427
    %v1285 = vunpack.c.h.b16 %v427
    %v1286 = vunpack.c.l.b16 %v428
    %v1287 = vunpack.c.h.b16 %v428
    %v1288 = vunpack.c.l.b16 %v429
    %v1289 = vunpack.c.h.b16 %v429
    %v1290 = vunpack.c.l.b16 %v430
    %v1291 = vunpack.c.h.b16 %v430
    %v1292 = vunpack.c.l.b16 %v431
    %v1293 = vunpack.c.h.b16 %v431
    %v1294 = vunpack.c.l.b16 %v432
    %v1295 = vunpack.c.h.b16 %v432
    %v1296 = vunpack.c.l.b16 %v433
    %v1297 = vunpack.c.h.b16 %v433
    %v1298 = vunpack.c.l.b16 %v434
    %v1299 = vunpack.c.h.b16 %v434
    %v1300 = vunpack.c.l.b16 %v435
    %v1301 = vunpack.c.h.b16 %v435
    %v1302 = vunpack.c.l.b16 %v436
    %v1303 = vunpack.c.h.b16 %v436
    %v1304 = vunpack.c.l.b16 %v437
    %v1305 = vunpack.c.h.b16 %v437
    %v1306 = vunpack.c.l.b16 %v438
    %v1307 = vunpack.c.h.b16 %v438
    %v1308 = vunpack.c.l.b16 %v439
    %v1309 = vunpack.c.h.b16 %v439
    %v1310 = vunpack.c.l.b16 %v440
    %v1311 = vunpack.c.h.b16 %v440
    %v1312 = vunpack.c.l.b16 %v441
    %v1313 = vunpack.c.h.b16 %v441
    %v1314 = vunpack.c.l.b16 %v442
    %v1315 = vunpack.c.h.b16 %v442
    %v1316 = vunpack.c.l.b16 %v443
    %v1317 = vunpack.c.h.b16 %v443
    %v1318 = vunpack.c.l.b16 %v444
    %v1319 = vunpack.c.h.b16 %v444
    %v1320 = vunpack.c.l.b16 %v445
    %v1321 = vunpack.c.h.b16 %v445
    %v1322 = vunpack.c.l.b16 %v446
    %v1323 = vunpack.c.h.b16 %v446
    %v1324 = vunpack.c.l.b16 %v447
    %v1325 = vunpack.c.h.b16 %v447
    %v1326 = vunpack.c.l.b16 %v448
    %v1327 = vunpack.c.h.b16 %v448
    %v1328 = vunpack.c.l.b16 %v449
    %v1329 = vunpack.c.h.b16 %v449
    %v1330 = vunpack.c.l.b16 %v450
    %v1331 = vunpack.c.h.b16 %v450
    %v1332 = vunpack.c.l.b16 %v451
    %v1333 = vunpack.c.h.b16 %v451
    %v1334 = vunpack.c.l.b16 %v452
    %v1335 = vunpack.c.h.b16 %v452
    %v1336 = vunpack.c.l.b16 %v453
    %v1337 = vunpack.c.h.b16 %v453
    %v1338 = vunpack.c.l.b16 %v454
    %v1339 = vunpack.c.h.b16 %v454
    %v1340 = vunpack.c.l.b16 %v455
    %v1341 = vunpack.c.h.b16 %v455
    %v1342 = vunpack.c.l.b16 %v456
    %v1343 = vunpack.c.h.b16 %v456
    %v1344 = vunpack.c.l.b16 %v457
    %v1345 = vunpack.c.h.b16 %v457
    %v1346 = vunpack.c.l.b16 %v458
    %v1347 = vunpack.c.h.b16 %v458
    %v1348 = vunpack.c.l.b16 %v459
    %v1349 = vunpack.c.h.b16 %v459
    %v1350 = vunpack.c.l.b16 %v460
    %v1351 = vunpack.c.h.b16 %v460
    %v1352 = vunpack.c.l.b16 %v461
    %v1353 = vunpack.c.h.b16 %v461
    %v1354 = vunpack.c.l.b16 %v462
    %v1355 = vunpack.c.h.b16 %v462
    %v1356 = vunpack.c.l.b16 %v463
    %v1357 = vunpack.c.h.b16 %v463
    %v1358 = vunpack.c.l.b16 %v464
    %v1359 = vunpack.c.h.b16 %v464
    %v1360 = vunpack.c.l.b16 %v465
    %v1361 = vunpack.c.h.b16 %v465
    %v1362 = vunpack.c.l.b16 %v466
    %v1363 = vunpack.c.h.b16 %v466
    %v1364 = vunpack.c.l.b16 %v467
    %v1365 = vunpack.c.h.b16 %v467
    %v1366 = vunpack.c.l.b16 %v468
    %v1367 = vunpack.c.h.b16 %v468
    %v1368 = vunpack.c.l.b16 %v469
    %v1369 = vunpack.c.h.b16 %v469
    %v1370 = vunpack.c.l.b16 %v470
    %v1371 = vunpack.c.h.b16 %v470
    %v1372 = vunpack.c.l.b16 %v471
    %v1373 = vunpack.c.h.b16 %v471
    %v1374 = vunpack.c.l.b16 %v472
    %v1375 = vunpack.c.h.b16 %v472
    %v1376 = vunpack.c.l.b16 %v473
    %v1377 = vunpack.c.h.b16 %v473
    %v1378 = vunpack.c.l.b16 %v474
    %v1379 = vunpack.c.h.b16 %v474
    %v1380 = vunpack.c.l.b16 %v475
    %v1381 = vunpack.c.h.b16 %v475
    %v1382 = vunpack.c.l.b16 %v476
    %v1383 = vunpack.c.h.b16 %v476
    %v1384 = vunpack.c.l.b16 %v477
    %v1385 = vunpack.c.h.b16 %v477
    %v1386 = vunpack.c.l.b16 %v478
    %v1387 = vunpack.c.h.b16 %v478
    %v1388 = vunpack.c.l.b16 %v479
    %v1389 = vunpack.c.h.b16 %v479
    %v1390 = vunpack.c.l.b16 %v480
    %v1391 = vunpack.c.h.b16 %v480
    %v1392 = vunpack.c.l.b16 %v481
    %v1393 = vunpack.c.h.b16 %v481
    %v1394 = vunpack.c.l.b16 %v482
    %v1395 = vunpack.c.h.b16 %v482
    %v1396 = vunpack.c.l.b16 %v483
    %v1397 = vunpack.c.h.b16 %v483
    %v1398 = vunpack.c.l.b16 %v484
    %v1399 = vunpack.c.h.b16 %v484
    %v1400 = vunpack.c.l.b16 %v485
    %v1401 = vunpack.c.h.b16 %v485
    %v1402 = vunpack.c.l.b16 %v486
    %v1403 = vunpack.c.h.b16 %v486
    %v1404 = vunpack.c.l.b16 %v487
    %v1405 = vunpack.c.h.b16 %v487
    %v1406 = vunpack.c.l.b16 %v488
    %v1407 = vunpack.c.h.b16 %v488
    %v1408 = vunpack.c.l.b16 %v489
    %v1409 = vunpack.c.h.b16 %v489
    %v1410 = vunpack.c.l.b16 %v490
    %v1411 = vunpack.c.h.b16 %v490
    %v1412 = vunpack.c.l.b16 %v491
    %v1413 = vunpack.c.h.b16 %v491
    %v1414 = vunpack.c.l.b16 %v492
    %v1415 = vunpack.c.h.b16 %v492
    %v1416 = vunpack.c.l.b16 %v493
    %v1417 = vunpack.c.h.b16 %v493
    %v1418 = vunpack.c.l.b16 %v494
    %v1419 = vunpack.c.h.b16 %v494
    %v1420 = vunpack.c.l.b16 %v495
    %v1421 = vunpack.c.h.b16 %v495
    %v1422 = vunpack.c.l.b16 %v496
    %v1423 = vunpack.c.h.b16 %v496
    %v1424 = vunpack.c.l.b16 %v497
    %v1425 = vunpack.c.h.b16 %v497
    %v1426 = vunpack.c.l.b16 %v498
    %v1427 = vunpack.c.h.b16 %v498
    %v1428 = vunpack.c.l.b16 %v499
    %v1429 = vunpack.c.h.b16 %v499
    %v1430 = vunpack.c.l.b16 %v500
    %v1431 = vunpack.c.h.b16 %v500
    %v1432 = vunpack.c.l.b16 %v501
    %v1433 = vunpack.c.h.b16 %v501
    %v1434 = vunpack.c.l.b16 %v502
    %v1435 = vunpack.c.h.b16 %v502
    %v1436 = vunpack.c.l.b16 %v503
    %v1437 = vunpack.c.h.b16 %v503
    %v1438 = vunpack.c.l.b16 %v504
    %v1439 = vunpack.c.h.b16 %v504
    %v1440 = vunpack.c.l.b16 %v505
    %v1441 = vunpack.c.h.b16 %v505
    %v1442 = vunpack.c.l.b16 %v506
    %v1443 = vunpack.c.h.b16 %v506
    %v1444 = vunpack.c.l.b16 %v507
    %v1445 = vunpack.c.h.b16 %v507
    %v1446 = vunpack.c.l.b16 %v508
    %v1447 = vunpack.c.h.b16 %v508
    %v1448 = vunpack.c.l.b16 %v509
    %v1449 = vunpack.c.h.b16 %v509
    %v1450 = vunpack.c.l.b16 %v510
    %v1451 = vunpack.c.h.b16 %v510
    %v1452 = vunpack.c.l.b16 %v511
    %v1453 = vunpack.c.h.b16 %v511
    %v1454 = vunpack.c.l.b16 %v512
    %v1455 = vunpack.c.h.b16 %v512
    %v1456 = vunpack.c.l.b16 %v513
    %v1457 = vunpack.c.h.b16 %v513
    %v1458 = vunpack.c.l.b16 %v514
    %v1459 = vunpack.c.h.b16 %v514
    %v1460 = vunpack.c.l.b16 %v515
    %v1461 = vunpack.c.h.b16 %v515
    %v1462 = vunpack.c.l.b16 %v516
    %v1463 = vunpack.c.h.b16 %v516
    %v1464 = vunpack.c.l.b16 %v517
    %v1465 = vunpack.c.h.b16 %v517
    %v1466 = vunpack.c.l.b16 %v518
    %v1467 = vunpack.c.h.b16 %v518
    %v1468 = vunpack.c.l.b16 %v519
    %v1469 = vunpack.c.h.b16 %v519
    %v1470 = vunpack.c.l.b16 %v520
    %v1471 = vunpack.c.h.b16 %v520
    %v1472 = vunpack.c.l.b16 %v521
    %v1473 = vunpack.c.h.b16 %v521
    %v1474 = vunpack.c.l.b16 %v522
    %v1475 = vunpack.c.h.b16 %v522
    %v1476 = vunpack.c.l.b16 %v523
    %v1477 = vunpack.c.h.b16 %v523
    %v1478 = vunpack.c.l.b16 %v524
    %v1479 = vunpack.c.h.b16 %v524
    %v1480 = vunpack.c.l.b16 %v525
    %v1481 = vunpack.c.h.b16 %v525
    %v1482 = vunpack.c.l.b16 %v526
    %v1483 = vunpack.c.h.b16 %v526
    %v1484 = vunpack.c.l.b16 %v527
    %v1485 = vunpack.c.h.b16 %v527
    %v1486 = vunpack.c.l.b16 %v528
    %v1487 = vunpack.c.h.b16 %v528
    %v1488 = vunpack.c.l.b16 %v529
    %v1489 = vunpack.c.h.b16 %v529
    %v1490 = vunpack.c.l.b16 %v530
    %v1491 = vunpack.c.h.b16 %v530
    %v1492 = vunpack.c.l.b16 %v531
    %v1493 = vunpack.c.h.b16 %v531
    %v1494 = vunpack.c.l.b16 %v532
    %v1495 = vunpack.c.h.b16 %v532
    %v1496 = vunpack.c.l.b16 %v533
    %v1497 = vunpack.c.h.b16 %v533
    %v1498 = vunpack.c.l.b16 %v534
    %v1499 = vunpack.c.h.b16 %v534
    %v1500 = vunpack.c.l.b16 %v535
    %v1501 = vunpack.c.h.b16 %v535
    %v1502 = vunpack.c.l.b16 %v536
    %v1503 = vunpack.c.h.b16 %v536
    %v1504 = vunpack.c.l.b16 %v537
    %v1505 = vunpack.c.h.b16 %v537
    %v1506 = vunpack.c.l.b16 %v538
    %v1507 = vunpack.c.h.b16 %v538
    %v1508 = vunpack.c.l.b16 %v539
    %v1509 = vunpack.c.h.b16 %v539
    %v1510 = vunpack.c.l.b16 %v540
    %v1511 = vunpack.c.h.b16 %v540
    %v1512 = vunpack.c.l.b16 %v541
    %v1513 = vunpack.c.h.b16 %v541
    %v1514 = vunpack.c.l.b16 %v542
    %v1515 = vunpack.c.h.b16 %v542
    %v1516 = vunpack.c.l.b16 %v543
    %v1517 = vunpack.c.h.b16 %v543
    %v1518 = vunpack.c.l.b16 %v544
    %v1519 = vunpack.c.h.b16 %v544
    %v1520 = vunpack.c.l.b16 %v545
    %v1521 = vunpack.c.h.b16 %v545
    %v1522 = vunpack.c.l.b16 %v546
    %v1523 = vunpack.c.h.b16 %v546
    %v1524 = vunpack.c.l.b16 %v547
    %v1525 = vunpack.c.h.b16 %v547
    %v1526 = vunpack.c.l.b16 %v548
    %v1527 = vunpack.c.h.b16 %v548
    %v1528 = vunpack.c.l.b16 %v549
    %v1529 = vunpack.c.h.b16 %v549
    %v1530 = vunpack.c.l.b16 %v550
    %v1531 = vunpack.c.h.b16 %v550
    %v1532 = vunpack.c.l.b16 %v551
    %v1533 = vunpack.c.h.b16 %v551
    %v1534 = vpack.c.b16 %v898, %v894
    %v1535 = vpack.c.b16 %v899, %v895
    %v1536 = vpack.c.b16 %v900, %v896
    %v1537 = vpack.c.b16 %v901, %v897
    %v1538 = vpack.c.b16 %v906, %v902
    %v1539 = vpack.c.b16 %v907, %v903
    %v1540 = vpack.c.b16 %v908, %v904
    %v1541 = vpack.c.b16 %v909, %v905
    %v1542 = vpack.c.b16 %v914, %v910
    %v1543 = vpack.c.b16 %v915, %v911
    %v1544 = vpack.c.b16 %v916, %v912
    %v1545 = vpack.c.b16 %v917, %v913
    %v1546 = vpack.c.b16 %v922, %v918
    %v1547 = vpack.c.b16 %v923, %v919
    %v1548 = vpack.c.b16 %v924, %v920
    %v1549 = vpack.c.b16 %v925, %v921
    %v1550 = vpack.c.b16 %v930, %v926
    %v1551 = vpack.c.b16 %v931, %v927
    %v1552 = vpack.c.b16 %v932, %v928
    %v1553 = vpack.c.b16 %v933, %v929
    %v1554 = vpack.c.b16 %v938, %v934
    %v1555 = vpack.c.b16 %v939, %v935
    %v1556 = vpack.c.b16 %v940, %v936
    %v1557 = vpack.c.b16 %v941, %v937
    %v1558 = vpack.c.b16 %v946, %v942
    %v1559 = vpack.c.b16 %v947, %v943
    %v1560 = vpack.c.b16 %v948, %v944
    %v1561 = vpack.c.b16 %v949, %v945
    %v1562 = vpack.c.b16 %v954, %v950
    %v1563 = vpack.c.b16 %v955, %v951
    %v1564 = vpack.c.b16 %v956, %v952
    %v1565 = vpack.c.b16 %v957, %v953
    %v1566 = vpack.c.b16 %v962, %v958
    %v1567 = vpack.c.b16 %v963, %v959
    %v1568 = vpack.c.b16 %v964, %v960
    %v1569 = vpack.c.b16 %v965, %v961
    %v1570 = vpack.c.b16 %v970, %v966
    %v1571 = vpack.c.b16 %v971, %v967
    %v1572 = vpack.c.b16 %v972, %v968
    %v1573 = vpack.c.b16 %v973, %v969
    %v1574 = vpack.c.b16 %v978, %v974
    %v1575 = vpack.c.b16 %v979, %v975
    %v1576 = vpack.c.b16 %v980, %v976
    %v1577 = vpack.c.b16 %v981, %v977
    %v1578 = vpack.c.b16 %v986, %v982
    %v1579 = vpack.c.b16 %v987, %v983
    %v1580 = vpack.c.b16 %v988, %v984
    %v1581 = vpack.c.b16 %v989, %v985
    %v1582 = vpack.c.b16 %v994, %v990
    %v1583 = vpack.c.b16 %v995, %v991
    %v1584 = vpack.c.b16 %v996, %v992
    %v1585 = vpack.c.b16 %v997, %v993
    %v1586 = vpack.c.b16 %v1002, %v998
    %v1587 = vpack.c.b16 %v1003, %v999
    %v1588 = vpack.c.b16 %v1004, %v1000
    %v1589 = vpack.c.b16 %v1005, %v1001
    %v1590 = vpack.c.b16 %v1010, %v1006
    %v1591 = vpack.c.b16 %v1011, %v1007
    %v1592 = vpack.c.b16 %v1012, %v1008
    %v1593 = vpack.c.b16 %v1013, %v1009
    %v1594 = vpack.c.b16 %v1018, %v1014
    %v1595 = vpack.c.b16 %v1019, %v1015
    %v1596 = vpack.c.b16 %v1020, %v1016
    %v1597 = vpack.c.b16 %v1021, %v1017
    %v1598 = vpack.c.b16 %v1026, %v1022
    %v1599 = vpack.c.b16 %v1027, %v1023
    %v1600 = vpack.c.b16 %v1028, %v1024
    %v1601 = vpack.c.b16 %v1029, %v1025
    %v1602 = vpack.c.b16 %v1034, %v1030
    %v1603 = vpack.c.b16 %v1035, %v1031
    %v1604 = vpack.c.b16 %v1036, %v1032
    %v1605 = vpack.c.b16 %v1037, %v1033
    %v1606 = vpack.c.b16 %v1042, %v1038
    %v1607 = vpack.c.b16 %v1043, %v1039
    %v1608 = vpack.c.b16 %v1044, %v1040
    %v1609 = vpack.c.b16 %v1045, %v1041
    %v1610 = vpack.c.b16 %v1050, %v1046
    %v1611 = vpack.c.b16 %v1051, %v1047
    %v1612 = vpack.c.b16 %v1052, %v1048
    %v1613 = vpack.c.b16 %v1053, %v1049
    %v1614 = vpack.c.b16 %v1058, %v1054
    %v1615 = vpack.c.b16 %v1059, %v1055
    %v1616 = vpack.c.b16 %v1060, %v1056
    %v1617 = vpack.c.b16 %v1061, %v1057
    %v1618 = vpack.c.b16 %v1066, %v1062
    %v1619 = vpack.c.b16 %v1067, %v1063
    %v1620 = vpack.c.b16 %v1068, %v1064
    %v1621 = vpack.c.b16 %v1069, %v1065
    %v1622 = vpack.c.b16 %v1074, %v1070
    %v1623 = vpack.c.b16 %v1075, %v1071
    %v1624 = vpack.c.b16 %v1076, %v1072
    %v1625 = vpack.c.b16 %v1077, %v1073
    %v1626 = vpack.c.b16 %v1082, %v1078
    %v1627 = vpack.c.b16 %v1083, %v1079
    %v1628 = vpack.c.b16 %v1084, %v1080
    %v1629 = vpack.c.b16 %v1085, %v1081
    %v1630 = vpack.c.b16 %v1090, %v1086
    %v1631 = vpack.c.b16 %v1091, %v1087
    %v1632 = vpack.c.b16 %v1092, %v1088
    %v1633 = vpack.c.b16 %v1093, %v1089
    %v1634 = vpack.c.b16 %v1098, %v1094
    %v1635 = vpack.c.b16 %v1099, %v1095
    %v1636 = vpack.c.b16 %v1100, %v1096
    %v1637 = vpack.c.b16 %v1101, %v1097
    %v1638 = vpack.c.b16 %v1106, %v1102
    %v1639 = vpack.c.b16 %v1107, %v1103
    %v1640 = vpack.c.b16 %v1108, %v1104
    %v1641 = vpack.c.b16 %v1109, %v1105
    %v1642 = vpack.c.b16 %v1114, %v1110
    %v1643 = vpack.c.b16 %v1115, %v1111
    %v1644 = vpack.c.b16 %v1116, %v1112
    %v1645 = vpack.c.b16 %v1117, %v1113
    %v1646 = vpack.c.b16 %v1122, %v1118
    %v1647 = vpack.c.b16 %v1123, %v1119
    %v1648 = vpack.c.b16 %v1124, %v1120
    %v1649 = vpack.c.b16 %v1125, %v1121
    %v1650 = vpack.c.b16 %v1130, %v1126
    %v1651 = vpack.c.b16 %v1131, %v1127
    %v1652 = vpack.c.b16 %v1132, %v1128
    %v1653 = vpack.c.b16 %v1133, %v1129
    %v1654 = vpack.c.b16 %v1138, %v1134
    %v1655 = vpack.c.b16 %v1139, %v1135
    %v1656 = vpack.c.b16 %v1140, %v1136
    %v1657 = vpack.c.b16 %v1141, %v1137
    %v1658 = vpack.c.b16 %v1146, %v1142
    %v1659 = vpack.c.b16 %v1147, %v1143
    %v1660 = vpack.c.b16 %v1148, %v1144
    %v1661 = vpack.c.b16 %v1149, %v1145
    %v1662 = vpack.c.b16 %v1154, %v1150
    %v1663 = vpack.c.b16 %v1155, %v1151
    %v1664 = vpack.c.b16 %v1156, %v1152
    %v1665 = vpack.c.b16 %v1157, %v1153
    %v1666 = vpack.c.b16 %v1162, %v1158
    %v1667 = vpack.c.b16 %v1163, %v1159
    %v1668 = vpack.c.b16 %v1164, %v1160
    %v1669 = vpack.c.b16 %v1165, %v1161
    %v1670 = vpack.c.b16 %v1170, %v1166
    %v1671 = vpack.c.b16 %v1171, %v1167
    %v1672 = vpack.c.b16 %v1172, %v1168
    %v1673 = vpack.c.b16 %v1173, %v1169
    %v1674 = vpack.c.b16 %v1178, %v1174
    %v1675 = vpack.c.b16 %v1179, %v1175
    %v1676 = vpack.c.b16 %v1180, %v1176
    %v1677 = vpack.c.b16 %v1181, %v1177
    %v1678 = vpack.c.b16 %v1186, %v1182
    %v1679 = vpack.c.b16 %v1187, %v1183
    %v1680 = vpack.c.b16 %v1188, %v1184
    %v1681 = vpack.c.b16 %v1189, %v1185
    %v1682 = vpack.c.b16 %v1194, %v1190
    %v1683 = vpack.c.b16 %v1195, %v1191
    %v1684 = vpack.c.b16 %v1196, %v1192
    %v1685 = vpack.c.b16 %v1197, %v1193
    %v1686 = vpack.c.b16 %v1202, %v1198
    %v1687 = vpack.c.b16 %v1203, %v1199
    %v1688 = vpack.c.b16 %v1204, %v1200
    %v1689 = vpack.c.b16 %v1205, %v1201
    %v1690 = vpack.c.b16 %v1210, %v1206
    %v1691 = vpack.c.b16 %v1211, %v1207
    %v1692 = vpack.c.b16 %v1212, %v1208
    %v1693 = vpack.c.b16 %v1213, %v1209
    %v1694 = vpack.c.b16 %v1218, %v1214
    %v1695 = vpack.c.b16 %v1219, %v1215
    %v1696 = vpack.c.b16 %v1220, %v1216
    %v1697 = vpack.c.b16 %v1221, %v1217
    %v1698 = vpack.c.b16 %v1226, %v1222
    %v1699 = vpack.c.b16 %v1227, %v1223
    %v1700 = vpack.c.b16 %v1228, %v1224
    %v1701 = vpack.c.b16 %v1229, %v1225
    %v1702 = vpack.c.b16 %v1234, %v1230
    %v1703 = vpack.c.b16 %v1235, %v1231
    %v1704 = vpack.c.b16 %v1236, %v1232
    %v1705 = vpack.c.b16 %v1237, %v1233
    %v1706 = vpack.c.b16 %v1242, %v1238
    %v1707 = vpack.c.b16 %v1243, %v1239
    %v1708 = vpack.c.b16 %v1244, %v1240
    %v1709 = vpack.c.b16 %v1245, %v1241
    %v1710 = vpack.c.b16 %v1250, %v1246
    %v1711 = vpack.c.b16 %v1251, %v1247
    %v1712 = vpack.c.b16 %v1252, %v1248
    %v1713 = vpack.c.b16 %v1253, %v1249
    %v1714 = vpack.c.b16 %v1258, %v1254
    %v1715 = vpack.c.b16 %v1259, %v1255
    %v1716 = vpack.c.b16 %v1260, %v1256
    %v1717 = vpack.c.b16 %v1261, %v1257
    %v1718 = vpack.c.b16 %v1266, %v1262
    %v1719 = vpack.c.b16 %v1267, %v1263
    %v1720 = vpack.c.b16 %v1268, %v1264
    %v1721 = vpack.c.b16 %v1269, %v1265
    %v1722 = vpack.c.b16 %v1274, %v1270
    %v1723 = vpack.c.b16 %v1275, %v1271
    %v1724 = vpack.c.b16 %v1276, %v1272
    %v1725 = vpack.c.b16 %v1277, %v1273
    %v1726 = vpack.c.b16 %v1282, %v1278
    %v1727 = vpack.c.b16 %v1283, %v1279
    %v1728 = vpack.c.b16 %v1284, %v1280
    %v1729 = vpack.c.b16 %v1285, %v1281
    %v1730 = vpack.c.b16 %v1290, %v1286
    %v1731 = vpack.c.b16 %v1291, %v1287
    %v1732 = vpack.c.b16 %v1292, %v1288
    %v1733 = vpack.c.b16 %v1293, %v1289
    %v1734 = vpack.c.b16 %v1298, %v1294
    %v1735 = vpack.c.b16 %v1299, %v1295
    %v1736 = vpack.c.b16 %v1300, %v1296
    %v1737 = vpack.c.b16 %v1301, %v1297
    %v1738 = vpack.c.b16 %v1306, %v1302
    %v1739 = vpack.c.b16 %v1307, %v1303
    %v1740 = vpack.c.b16 %v1308, %v1304
    %v1741 = vpack.c.b16 %v1309, %v1305
    %v1742 = vpack.c.b16 %v1314, %v1310
    %v1743 = vpack.c.b16 %v1315, %v1311
    %v1744 = vpack.c.b16 %v1316, %v1312
    %v1745 = vpack.c.b16 %v1317, %v1313
    %v1746 = vpack.c.b16 %v1322, %v1318
    %v1747 = vpack.c.b16 %v1323, %v1319
    %v1748 = vpack.c.b16 %v1324, %v1320
    %v1749 = vpack.c.b16 %v1325, %v1321
    %v1750 = vpack.c.b16 %v1330, %v1326
    %v1751 = vpack.c.b16 %v1331, %v1327
    %v1752 = vpack.c.b16 %v1332, %v1328
    %v1753 = vpack.c.b16 %v1333, %v1329
    %v1754 = vpack.c.b16 %v1338, %v1334
    %v1755 = vpack.c.b16 %v1339, %v1335
    %v1756 = vpack.c.b16 %v1340, %v1336
    %v1757 = vpack.c.b16 %v1341, %v1337
    %v1758 = vpack.c.b16 %v1346, %v1342
    %v1759 = vpack.c.b16 %v1347, %v1343
    %v1760 = vpack.c.b16 %v1348, %v1344
    %v1761 = vpack.c.b16 %v1349, %v1345
    %v1762 = vpack.c.b16 %v1354, %v1350
    %v1763 = vpack.c.b16 %v1355, %v1351
    %v1764 = vpack.c.b16 %v1356, %v1352
    %v1765 = vpack.c.b16 %v1357, %v1353
    %v1766 = vpack.c.b16 %v1362, %v1358
    %v1767 = vpack.c.b16 %v1363, %v1359
    %v1768 = vpack.c.b16 %v1364, %v1360
    %v1769 = vpack.c.b16 %v1365, %v1361
    %v1770 = vpack.c.b16 %v1370, %v1366
    %v1771 = vpack.c.b16 %v1371, %v1367
    %v1772 = vpack.c.b16 %v1372, %v1368
    %v1773 = vpack.c.b16 %v1373, %v1369
    %v1774 = vpack.c.b16 %v1378, %v1374
    %v1775 = vpack.c.b16 %v1379, %v1375
    %v1776 = vpack.c.b16 %v1380, %v1376
    %v1777 = vpack.c.b16 %v1381, %v1377
    %v1778 = vpack.c.b16 %v1386, %v1382
    %v1779 = vpack.c.b16 %v1387, %v1383
    %v1780 = vpack.c.b16 %v1388, %v1384
    %v1781 = vpack.c.b16 %v1389, %v1385
    %v1782 = vpack.c.b16 %v1394, %v1390
    %v1783 = vpack.c.b16 %v1395, %v1391
    %v1784 = vpack.c.b16 %v1396, %v1392
    %v1785 = vpack.c.b16 %v1397, %v1393
    %v1786 = vpack.c.b16 %v1402, %v1398
    %v1787 = vpack.c.b16 %v1403, %v1399
    %v1788 = vpack.c.b16 %v1404, %v1400
    %v1789 = vpack.c.b16 %v1405, %v1401
    %v1790 = vpack.c.b16 %v1410, %v1406
    %v1791 = vpack.c.b16 %v1411, %v1407
    %v1792 = vpack.c.b16 %v1412, %v1408
    %v1793 = vpack.c.b16 %v1413, %v1409
    %v1794 = vpack.c.b16 %v1418, %v1414
    %v1795 = vpack.c.b16 %v1419, %v1415
    %v1796 = vpack.c.b16 %v1420, %v1416
    %v1797 = vpack.c.b16 %v1421, %v1417
    %v1798 = vpack.c.b16 %v1426, %v1422
    %v1799 = vpack.c.b16 %v1427, %v1423
    %v1800 = vpack.c.b16 %v1428, %v1424
    %v1801 = vpack.c.b16 %v1429, %v1425
    %v1802 = vpack.c.b16 %v1434, %v1430
    %v1803 = vpack.c.b16 %v1435, %v1431
    %v1804 = vpack.c.b16 %v1436, %v1432
    %v1805 = vpack.c.b16 %v1437, %v1433
    %v1806 = vpack.c.b16 %v1442, %v1438
    %v1807 = vpack.c.b16 %v1443, %v1439
    %v1808 = vpack.c.b16 %v1444, %v1440
    %v1809 = vpack.c.b16 %v1445, %v1441
    %v1810 = vpack.c.b16 %v1450, %v1446
    %v1811 = vpack.c.b16 %v1451, %v1447
    %v1812 = vpack.c.b16 %v1452, %v1448
    %v1813 = vpack.c.b16 %v1453, %v1449
    %v1814 = vpack.c.b16 %v1458, %v1454
    %v1815 = vpack.c.b16 %v1459, %v1455
    %v1816 = vpack.c.b16 %v1460, %v1456
    %v1817 = vpack.c.b16 %v1461, %v1457
    %v1818 = vpack.c.b16 %v1466, %v1462
    %v1819 = vpack.c.b16 %v1467, %v1463
    %v1820 = vpack.c.b16 %v1468, %v1464
    %v1821 = vpack.c.b16 %v1469, %v1465
    %v1822 = vpack.c.b16 %v1474, %v1470
    %v1823 = vpack.c.b16 %v1475, %v1471
    %v1824 = vpack.c.b16 %v1476, %v1472
    %v1825 = vpack.c.b16 %v1477, %v1473
    %v1826 = vpack.c.b16 %v1482, %v1478
    %v1827 = vpack.c.b16 %v1483, %v1479
    %v1828 = vpack.c.b16 %v1484, %v1480
    %v1829 = vpack.c.b16 %v1485, %v1481
    %v1830 = vpack.c.b16 %v1490, %v1486
    %v1831 = vpack.c.b16 %v1491, %v1487
    %v1832 = vpack.c.b16 %v1492, %v1488
    %v1833 = vpack.c.b16 %v1493, %v1489
    %v1834 = vpack.c.b16 %v1498, %v1494
    %v1835 = vpack.c.b16 %v1499, %v1495
    %v1836 = vpack.c.b16 %v1500, %v1496
    %v1837 = vpack.c.b16 %v1501, %v1497
    %v1838 = vpack.c.b16 %v1506, %v1502
    %v1839 = vpack.c.b16 %v1507, %v1503
    %v1840 = vpack.c.b16 %v1508, %v1504
    %v1841 = vpack.c.b16 %v1509, %v1505
    %v1842 = vpack.c.b16 %v1514, %v1510
    %v1843 = vpack.c.b16 %v1515, %v1511
    %v1844 = vpack.c.b16 %v1516, %v1512
    %v1845 = vpack.c.b16 %v1517, %v1513
    %v1846 = vpack.c.b16 %v1522, %v1518
    %v1847 = vpack.c.b16 %v1523, %v1519
    %v1848 = vpack.c.b16 %v1524, %v1520
    %v1849 = vpack.c.b16 %v1525, %v1521
    %v1850 = vpack.c.b16 %v1530, %v1526
    %v1851 = vpack.c.b16 %v1531, %v1527
    %v1852 = vpack.c.b16 %v1532, %v1528
    %v1853 = vpack.c.b16 %v1533, %v1529
    %2174 = vmatprep.subr.bf16.mxu0 %v1535
    %2175 = vmatpush1.bf16.msra.mxu0 %v1534
    %2176 = vmatprep.subr.bf16.mxu0 %v1539
    %2177 = vmatpush1.bf16.msra.mxu0 %v1538
    %2178 = vmatprep.subr.bf16.mxu0 %v1543
    %2179 = vmatpush1.bf16.msra.mxu0 %v1542
    %2180 = vmatprep.subr.bf16.mxu0 %v1547
    %2181 = vmatpush1.bf16.msra.mxu0 %v1546
    %2182 = vmatprep.subr.bf16.mxu0 %v1551
    %2183 = vmatpush1.bf16.msra.mxu0 %v1550
    %2184 = vmatprep.subr.bf16.mxu0 %v1555
    %2185 = vmatpush1.bf16.msra.mxu0 %v1554
    %2186 = vmatprep.subr.bf16.mxu0 %v1559
    %2187 = vmatpush1.bf16.msra.mxu0 %v1558
    %2188 = vmatprep.subr.bf16.mxu0 %v1563
    %2189 = vmatpush1.bf16.msra.mxu0 %v1562
    %2190 = vmatprep.subr.bf16.mxu0 %v1567
    %2191 = vmatpush1.bf16.msra.mxu0 %v1566
    %2192 = vmatprep.subr.bf16.mxu0 %v1571
    %2193 = vmatpush1.bf16.msra.mxu0 %v1570
    %2194 = vmatprep.subr.bf16.mxu0 %v1575
    %2195 = vmatpush1.bf16.msra.mxu0 %v1574
    %2196 = vmatprep.subr.bf16.mxu0 %v1579
    %2197 = vmatpush1.bf16.msra.mxu0 %v1578
    %2198 = vmatprep.subr.bf16.mxu0 %v1583
    %2199 = vmatpush1.bf16.msra.mxu0 %v1582
    %2200 = vmatprep.subr.bf16.mxu0 %v1587
    %2201 = vmatpush1.bf16.msra.mxu0 %v1586
    %2202 = vmatprep.subr.bf16.mxu0 %v1591
    %2203 = vmatpush1.bf16.msra.mxu0 %v1590
    %2204 = vmatprep.subr.bf16.mxu0 %v1595
    %2205 = vmatpush1.bf16.msra.mxu0 %v1594
    %2206 = vmatprep.mubr.bf16.mxu0 %v193
    %2207 = vmatmul.mubr.bf16.gmra.mrb[0].mxu0 %v192
    %v2208 = vpop.f32.mrb[0].mxu0
    %v2209 = vadd.f32 %v557, %v2208
    %v2210 = vpop.f32.mrb[0].mxu0
    %v2211 = vadd.f32 %v561, %v2210
    %v2212 = vpop.f32.mrb[0].mxu0
    %v2213 = vadd.f32 %v557, %v2212
    %v2214 = vpop.f32.mrb[0].mxu0
    %v2215 = vadd.f32 %v561, %v2214
    %2216 = vmatprep.mubr.bf16.mxu0 %v203
    %2217 = vmatmul.mubr.bf16.gmra.mrb[0].mxu0 %v202
    %v2218 = vpop.f32.mrb[0].mxu0
    %v2219 = vadd.f32 %v557, %v2218
    %v2220 = vpop.f32.mrb[0].mxu0
    %v2221 = vadd.f32 %v561, %v2220
    %v2222 = vpop.f32.mrb[0].mxu0
    %v2223 = vadd.f32 %v557, %v2222
    %v2224 = vpop.f32.mrb[0].mxu0
    %v2225 = vadd.f32 %v561, %v2224
    %2226 = vmatprep.mubr.bf16.mxu0 %v213
    %2227 = vmatmul.mubr.bf16.gmra.mrb[0].mxu0 %v212
    %v2228 = vpop.f32.mrb[0].mxu0
    %v2229 = vadd.f32 %v557, %v2228
    %v2230 = vpop.f32.mrb[0].mxu0
    %v2231 = vadd.f32 %v561, %v2230
    %v2232 = vpop.f32.mrb[0].mxu0
    %v2233 = vadd.f32 %v557, %v2232
    %v2234 = vpop.f32.mrb[0].mxu0
    %v2235 = vadd.f32 %v561, %v2234
    %2236 = vmatprep.mubr.bf16.mxu0 %v223
    %2237 = vmatmul.mubr.bf16.gmra.mrb[0].mxu0 %v222
    %v2238 = vpop.f32.mrb[0].mxu0
    %v2239 = vadd.f32 %v557, %v2238
    %v2240 = vpop.f32.mrb[0].mxu0
    %v2241 = vadd.f32 %v561, %v2240
    %v2242 = vpop.f32.mrb[0].mxu0
    %v2243 = vadd.f32 %v557, %v2242
    %v2244 = vpop.f32.mrb[0].mxu0
    %v2245 = vadd.f32 %v561, %v2244
    %2246 = vdwg.mxu0
    %2247 = vmatprep.subr.bf16.mxu0 %v1599
    %2248 = vmatpush1.bf16.msra.mxu0 %v1598
    %2249 = vmatprep.subr.bf16.mxu0 %v1603
    %2250 = vmatpush1.bf16.msra.mxu0 %v1602
    %2251 = vmatprep.subr.bf16.mxu0 %v1607
    %2252 = vmatpush1.bf16.msra.mxu0 %v1606
    %2253 = vmatprep.subr.bf16.mxu0 %v1611
    %2254 = vmatpush1.bf16.msra.mxu0 %v1610
    %2255 = vmatprep.subr.bf16.mxu0 %v1615
    %2256 = vmatpush1.bf16.msra.mxu0 %v1614
    %2257 = vmatprep.subr.bf16.mxu0 %v1619
    %2258 = vmatpush1.bf16.msra.mxu0 %v1618
    %2259 = vmatprep.subr.bf16.mxu0 %v1623
    %2260 = vmatpush1.bf16.msra.mxu0 %v1622
    %2261 = vmatprep.subr.bf16.mxu0 %v1627
    %2262 = vmatpush1.bf16.msra.mxu0 %v1626
    %2263 = vmatprep.subr.bf16.mxu0 %v1631
    %2264 = vmatpush1.bf16.msra.mxu0 %v1630
    %2265 = vmatprep.subr.bf16.mxu0 %v1635
    %2266 = vmatpush1.bf16.msra.mxu0 %v1634
    %2267 = vmatprep.subr.bf16.mxu0 %v1639
    %2268 = vmatpush1.bf16.msra.mxu0 %v1638
    %2269 = vmatprep.subr.bf16.mxu0 %v1643
    %2270 = vmatpush1.bf16.msra.mxu0 %v1642
    %2271 = vmatprep.subr.bf16.mxu0 %v1647
    %2272 = vmatpush1.bf16.msra.mxu0 %v1646
    %2273 = vmatprep.subr.bf16.mxu0 %v1651
    %2274 = vmatpush1.bf16.msra.mxu0 %v1650
    %2275 = vmatprep.subr.bf16.mxu0 %v1655
    %2276 = vmatpush1.bf16.msra.mxu0 %v1654
    %2277 = vmatprep.subr.bf16.mxu0 %v1659
    %2278 = vmatpush1.bf16.msra.mxu0 %v1658
    %2279 = vmatprep.mubr.bf16.mxu0 %v195
    %2280 = vmatmul.mubr.bf16.gmra.mrb[0].mxu0 %v194
    %v2281 = vpop.f32.mrb[0].mxu0
    %v2282 = vadd.f32 %v2209, %v2281
    %v2283 = vpop.f32.mrb[0].mxu0
    %v2284 = vadd.f32 %v2211, %v2283
    %v2285 = vpop.f32.mrb[0].mxu0
    %v2286 = vadd.f32 %v2213, %v2285
    %v2287 = vpop.f32.mrb[0].mxu0
    %v2288 = vadd.f32 %v2215, %v2287
    %2289 = vmatprep.mubr.bf16.mxu0 %v205
    %2290 = vmatmul.mubr.bf16.gmra.mrb[0].mxu0 %v204
    %v2291 = vpop.f32.mrb[0].mxu0
    %v2292 = vadd.f32 %v2219, %v2291
    %v2293 = vpop.f32.mrb[0].mxu0
    %v2294 = vadd.f32 %v2221, %v2293
    %v2295 = vpop.f32.mrb[0].mxu0
    %v2296 = vadd.f32 %v2223, %v2295
    %v2297 = vpop.f32.mrb[0].mxu0
    %v2298 = vadd.f32 %v2225, %v2297
    %2299 = vmatprep.mubr.bf16.mxu0 %v215
    %2300 = vmatmul.mubr.bf16.gmra.mrb[0].mxu0 %v214
    %v2301 = vpop.f32.mrb[0].mxu0
    %v2302 = vadd.f32 %v2229, %v2301
    %v2303 = vpop.f32.mrb[0].mxu0
    %v2304 = vadd.f32 %v2231, %v2303
    %v2305 = vpop.f32.mrb[0].mxu0
    %v2306 = vadd.f32 %v2233, %v2305
    %v2307 = vpop.f32.mrb[0].mxu0
    %v2308 = vadd.f32 %v2235, %v2307
    %2309 = vmatprep.mubr.bf16.mxu0 %v225
    %2310 = vmatmul.mubr.bf16.gmra.mrb[0].mxu0 %v224
    %v2311 = vpop.f32.mrb[0].mxu0
    %v2312 = vadd.f32 %v2239, %v2311
    %v2313 = vpop.f32.mrb[0].mxu0
    %v2314 = vadd.f32 %v2241, %v2313
    %v2315 = vpop.f32.mrb[0].mxu0
    %v2316 = vadd.f32 %v2243, %v2315
    %v2317 = vpop.f32.mrb[0].mxu0
    %v2318 = vadd.f32 %v2245, %v2317
    %2319 = vdwg.mxu0
    %2320 = vmatprep.subr.bf16.mxu0 %v1663
    %2321 = vmatpush1.bf16.msra.mxu0 %v1662
    %2322 = vmatprep.subr.bf16.mxu0 %v1667
    %2323 = vmatpush1.bf16.msra.mxu0 %v1666
    %2324 = vmatprep.subr.bf16.mxu0 %v1671
    %2325 = vmatpush1.bf16.msra.mxu0 %v1670
    %2326 = vmatprep.subr.bf16.mxu0 %v1675
    %2327 = vmatpush1.bf16.msra.mxu0 %v1674
    %2328 = vmatprep.subr.bf16.mxu0 %v1679
    %2329 = vmatpush1.bf16.msra.mxu0 %v1678
    %2330 = vmatprep.subr.bf16.mxu0 %v1683
    %2331 = vmatpush1.bf16.msra.mxu0 %v1682
    %2332 = vmatprep.subr.bf16.mxu0 %v1687
    %2333 = vmatpush1.bf16.msra.mxu0 %v1686
    %2334 = vmatprep.subr.bf16.mxu0 %v1691
    %2335 = vmatpush1.bf16.msra.mxu0 %v1690
    %2336 = vmatprep.subr.bf16.mxu0 %v1695
    %2337 = vmatpush1.bf16.msra.mxu0 %v1694
    %2338 = vmatprep.subr.bf16.mxu0 %v1699
    %2339 = vmatpush1.bf16.msra.mxu0 %v1698
    %2340 = vmatprep.subr.bf16.mxu0 %v1703
    %2341 = vmatpush1.bf16.msra.mxu0 %v1702
    %2342 = vmatprep.subr.bf16.mxu0 %v1707
    %2343 = vmatpush1.bf16.msra.mxu0 %v1706
    %2344 = vmatprep.subr.bf16.mxu0 %v1711
    %2345 = vmatpush1.bf16.msra.mxu0 %v1710
    %2346 = vmatprep.subr.bf16.mxu0 %v1715
    %2347 = vmatpush1.bf16.msra.mxu0 %v1714
    %2348 = vmatprep.subr.bf16.mxu0 %v1719
    %2349 = vmatpush1.bf16.msra.mxu0 %v1718
    %2350 = vmatprep.subr.bf16.mxu0 %v1723
    %2351 = vmatpush1.bf16.msra.mxu0 %v1722
    %2352 = vmatprep.mubr.bf16.mxu0 %v197
    %2353 = vmatmul.mubr.bf16.gmra.mrb[0].mxu0 %v196
    %v2354 = vpop.f32.mrb[0].mxu0
    %v2355 = vadd.f32 %v2282, %v2354
    %v2356 = vpop.f32.mrb[0].mxu0
    %v2357 = vadd.f32 %v2284, %v2356
    %v2358 = vpop.f32.mrb[0].mxu0
    %v2359 = vadd.f32 %v2286, %v2358
    %v2360 = vpop.f32.mrb[0].mxu0
    %v2361 = vadd.f32 %v2288, %v2360
    %2362 = vmatprep.mubr.bf16.mxu0 %v207
    %2363 = vmatmul.mubr.bf16.gmra.mrb[0].mxu0 %v206
    %v2364 = vpop.f32.mrb[0].mxu0
    %v2365 = vadd.f32 %v2292, %v2364
    %v2366 = vpop.f32.mrb[0].mxu0
    %v2367 = vadd.f32 %v2294, %v2366
    %v2368 = vpop.f32.mrb[0].mxu0
    %v2369 = vadd.f32 %v2296, %v2368
    %v2370 = vpop.f32.mrb[0].mxu0
    %v2371 = vadd.f32 %v2298, %v2370
    %2372 = vmatprep.mubr.bf16.mxu0 %v217
    %2373 = vmatmul.mubr.bf16.gmra.mrb[0].mxu0 %v216
    %v2374 = vpop.f32.mrb[0].mxu0
    %v2375 = vadd.f32 %v2302, %v2374
    %v2376 = vpop.f32.mrb[0].mxu0
    %v2377 = vadd.f32 %v2304, %v2376
    %v2378 = vpop.f32.mrb[0].mxu0
    %v2379 = vadd.f32 %v2306, %v2378
    %v2380 = vpop.f32.mrb[0].mxu0
    %v2381 = vadd.f32 %v2308, %v2380
    %2382 = vmatprep.mubr.bf16.mxu0 %v227
    %2383 = vmatmul.mubr.bf16.gmra.mrb[0].mxu0 %v226
    %v2384 = vpop.f32.mrb[0].mxu0
    %v2385 = vadd.f32 %v2312, %v2384
    %v2386 = vpop.f32.mrb[0].mxu0
    %v2387 = vadd.f32 %v2314, %v2386
    %v2388 = vpop.f32.mrb[0].mxu0
    %v2389 = vadd.f32 %v2316, %v2388
    %v2390 = vpop.f32.mrb[0].mxu0
    %v2391 = vadd.f32 %v2318, %v2390
    %2392 = vdwg.mxu0
    %2393 = vmatprep.subr.bf16.mxu0 %v1727
    %2394 = vmatpush1.bf16.msra.mxu0 %v1726
    %2395 = vmatprep.subr.bf16.mxu0 %v1731
    %2396 = vmatpush1.bf16.msra.mxu0 %v1730
    %2397 = vmatprep.subr.bf16.mxu0 %v1735
    %2398 = vmatpush1.bf16.msra.mxu0 %v1734
    %2399 = vmatprep.subr.bf16.mxu0 %v1739
    %2400 = vmatpush1.bf16.msra.mxu0 %v1738
    %2401 = vmatprep.subr.bf16.mxu0 %v1743
    %2402 = vmatpush1.bf16.msra.mxu0 %v1742
    %2403 = vmatprep.subr.bf16.mxu0 %v1747
    %2404 = vmatpush1.bf16.msra.mxu0 %v1746
    %2405 = vmatprep.subr.bf16.mxu0 %v1751
    %2406 = vmatpush1.bf16.msra.mxu0 %v1750
    %2407 = vmatprep.subr.bf16.mxu0 %v1755
    %2408 = vmatpush1.bf16.msra.mxu0 %v1754
    %2409 = vmatprep.subr.bf16.mxu0 %v1759
    %2410 = vmatpush1.bf16.msra.mxu0 %v1758
    %2411 = vmatprep.subr.bf16.mxu0 %v1763
    %2412 = vmatpush1.bf16.msra.mxu0 %v1762
    %2413 = vmatprep.subr.bf16.mxu0 %v1767
    %2414 = vmatpush1.bf16.msra.mxu0 %v1766
    %2415 = vmatprep.subr.bf16.mxu0 %v1771
    %2416 = vmatpush1.bf16.msra.mxu0 %v1770
    %2417 = vmatprep.subr.bf16.mxu0 %v1775
    %2418 = vmatpush1.bf16.msra.mxu0 %v1774
    %2419 = vmatprep.subr.bf16.mxu0 %v1779
    %2420 = vmatpush1.bf16.msra.mxu0 %v1778
    %2421 = vmatprep.subr.bf16.mxu0 %v1783
    %2422 = vmatpush1.bf16.msra.mxu0 %v1782
    %2423 = vmatprep.subr.bf16.mxu0 %v1787
    %2424 = vmatpush1.bf16.msra.mxu0 %v1786
    %2425 = vmatprep.mubr.bf16.mxu0 %v199
    %2426 = vmatmul.mubr.bf16.gmra.mrb[0].mxu0 %v198
    %v2427 = vpop.f32.mrb[0].mxu0
    %v2428 = vadd.f32 %v2355, %v2427
    %v2429 = vpop.f32.mrb[0].mxu0
    %v2430 = vadd.f32 %v2357, %v2429
    %v2431 = vpop.f32.mrb[0].mxu0
    %v2432 = vadd.f32 %v2359, %v2431
    %v2433 = vpop.f32.mrb[0].mxu0
    %v2434 = vadd.f32 %v2361, %v2433
    %2435 = vmatprep.mubr.bf16.mxu0 %v209
    %2436 = vmatmul.mubr.bf16.gmra.mrb[0].mxu0 %v208
    %v2437 = vpop.f32.mrb[0].mxu0
    %v2438 = vadd.f32 %v2365, %v2437
    %v2439 = vpop.f32.mrb[0].mxu0
    %v2440 = vadd.f32 %v2367, %v2439
    %v2441 = vpop.f32.mrb[0].mxu0
    %v2442 = vadd.f32 %v2369, %v2441
    %v2443 = vpop.f32.mrb[0].mxu0
    %v2444 = vadd.f32 %v2371, %v2443
    %2445 = vmatprep.mubr.bf16.mxu0 %v219
    %2446 = vmatmul.mubr.bf16.gmra.mrb[0].mxu0 %v218
    %v2447 = vpop.f32.mrb[0].mxu0
    %v2448 = vadd.f32 %v2375, %v2447
    %v2449 = vpop.f32.mrb[0].mxu0
    %v2450 = vadd.f32 %v2377, %v2449
    %v2451 = vpop.f32.mrb[0].mxu0
    %v2452 = vadd.f32 %v2379, %v2451
    %v2453 = vpop.f32.mrb[0].mxu0
    %v2454 = vadd.f32 %v2381, %v2453
    %2455 = vmatprep.mubr.bf16.mxu0 %v229
    %2456 = vmatmul.mubr.bf16.gmra.mrb[0].mxu0 %v228
    %v2457 = vpop.f32.mrb[0].mxu0
    %v2458 = vadd.f32 %v2385, %v2457
    %v2459 = vpop.f32.mrb[0].mxu0
    %v2460 = vadd.f32 %v2387, %v2459
    %v2461 = vpop.f32.mrb[0].mxu0
    %v2462 = vadd.f32 %v2389, %v2461
    %v2463 = vpop.f32.mrb[0].mxu0
    %v2464 = vadd.f32 %v2391, %v2463
    %2465 = vdwg.mxu0
    %2466 = vmatprep.subr.bf16.mxu0 %v1791
    %2467 = vmatpush1.bf16.msra.mxu0 %v1790
    %2468 = vmatprep.subr.bf16.mxu0 %v1795
    %2469 = vmatpush1.bf16.msra.mxu0 %v1794
    %2470 = vmatprep.subr.bf16.mxu0 %v1799
    %2471 = vmatpush1.bf16.msra.mxu0 %v1798
    %2472 = vmatprep.subr.bf16.mxu0 %v1803
    %2473 = vmatpush1.bf16.msra.mxu0 %v1802
    %2474 = vmatprep.subr.bf16.mxu0 %v1807
    %2475 = vmatpush1.bf16.msra.mxu0 %v1806
    %2476 = vmatprep.subr.bf16.mxu0 %v1811
    %2477 = vmatpush1.bf16.msra.mxu0 %v1810
    %2478 = vmatprep.subr.bf16.mxu0 %v1815
    %2479 = vmatpush1.bf16.msra.mxu0 %v1814
    %2480 = vmatprep.subr.bf16.mxu0 %v1819
    %2481 = vmatpush1.bf16.msra.mxu0 %v1818
    %2482 = vmatprep.subr.bf16.mxu0 %v1823
    %2483 = vmatpush1.bf16.msra.mxu0 %v1822
    %2484 = vmatprep.subr.bf16.mxu0 %v1827
    %2485 = vmatpush1.bf16.msra.mxu0 %v1826
    %2486 = vmatprep.subr.bf16.mxu0 %v1831
    %2487 = vmatpush1.bf16.msra.mxu0 %v1830
    %2488 = vmatprep.subr.bf16.mxu0 %v1835
    %2489 = vmatpush1.bf16.msra.mxu0 %v1834
    %2490 = vmatprep.subr.bf16.mxu0 %v1839
    %2491 = vmatpush1.bf16.msra.mxu0 %v1838
    %2492 = vmatprep.subr.bf16.mxu0 %v1843
    %2493 = vmatpush1.bf16.msra.mxu0 %v1842
    %2494 = vmatprep.subr.bf16.mxu0 %v1847
    %2495 = vmatpush1.bf16.msra.mxu0 %v1846
    %2496 = vmatprep.subr.bf16.mxu0 %v1851
    %2497 = vmatpush1.bf16.msra.mxu0 %v1850
    %2498 = vmatprep.mubr.bf16.mxu0 %v201
    %2499 = vmatmul.mubr.bf16.gmra.mrb[0].mxu0 %v200
    %v2500 = vpop.f32.mrb[0].mxu0
    %v2501 = vadd.f32 %v2428, %v2500
    %v2502 = vpop.f32.mrb[0].mxu0
    %v2503 = vadd.f32 %v2430, %v2502
    %v2504 = vpop.f32.mrb[0].mxu0
    %v2505 = vadd.f32 %v2432, %v2504
    %v2506 = vpop.f32.mrb[0].mxu0
    %v2507 = vadd.f32 %v2434, %v2506
    %2508 = vmatprep.mubr.bf16.mxu0 %v211
    %2509 = vmatmul.mubr.bf16.gmra.mrb[0].mxu0 %v210
    %v2510 = vpop.f32.mrb[0].mxu0
    %v2511 = vadd.f32 %v2438, %v2510
    %v2512 = vpop.f32.mrb[0].mxu0
    %v2513 = vadd.f32 %v2440, %v2512
    %v2514 = vpop.f32.mrb[0].mxu0
    %v2515 = vadd.f32 %v2442, %v2514
    %v2516 = vpop.f32.mrb[0].mxu0
    %v2517 = vadd.f32 %v2444, %v2516
    %2518 = vmatprep.mubr.bf16.mxu0 %v221
    %2519 = vmatmul.mubr.bf16.gmra.mrb[0].mxu0 %v220
    %v2520 = vpop.f32.mrb[0].mxu0
    %v2521 = vadd.f32 %v2448, %v2520
    %v2522 = vpop.f32.mrb[0].mxu0
    %v2523 = vadd.f32 %v2450, %v2522
    %v2524 = vpop.f32.mrb[0].mxu0
    %v2525 = vadd.f32 %v2452, %v2524
    %v2526 = vpop.f32.mrb[0].mxu0
    %v2527 = vadd.f32 %v2454, %v2526
    %2528 = vmatprep.mubr.bf16.mxu0 %v231
    %2529 = vmatmul.mubr.bf16.gmra.mrb[0].mxu0 %v230
    %v2530 = vpop.f32.mrb[0].mxu0
    %v2531 = vadd.f32 %v2458, %v2530
    %v2532 = vpop.f32.mrb[0].mxu0
    %v2533 = vadd.f32 %v2460, %v2532
    %v2534 = vpop.f32.mrb[0].mxu0
    %v2535 = vadd.f32 %v2462, %v2534
    %v2536 = vpop.f32.mrb[0].mxu0
    %v2537 = vadd.f32 %v2464, %v2536
    %2538 = vdwg.mxu0
    %2539 = vmatprep.subr.bf16.mxu0 %v1537
    %2540 = vmatpush1.bf16.msra.mxu0 %v1536
    %2541 = vmatprep.subr.bf16.mxu0 %v1541
    %2542 = vmatpush1.bf16.msra.mxu0 %v1540
    %2543 = vmatprep.subr.bf16.mxu0 %v1545
    %2544 = vmatpush1.bf16.msra.mxu0 %v1544
    %2545 = vmatprep.subr.bf16.mxu0 %v1549
    %2546 = vmatpush1.bf16.msra.mxu0 %v1548
    %2547 = vmatprep.subr.bf16.mxu0 %v1553
    %2548 = vmatpush1.bf16.msra.mxu0 %v1552
    %2549 = vmatprep.subr.bf16.mxu0 %v1557
    %2550 = vmatpush1.bf16.msra.mxu0 %v1556
    %2551 = vmatprep.subr.bf16.mxu0 %v1561
    %2552 = vmatpush1.bf16.msra.mxu0 %v1560
    %2553 = vmatprep.subr.bf16.mxu0 %v1565
    %2554 = vmatpush1.bf16.msra.mxu0 %v1564
    %2555 = vmatprep.subr.bf16.mxu0 %v1569
    %2556 = vmatpush1.bf16.msra.mxu0 %v1568
    %2557 = vmatprep.subr.bf16.mxu0 %v1573
    %2558 = vmatpush1.bf16.msra.mxu0 %v1572
    %2559 = vmatprep.subr.bf16.mxu0 %v1577
    %2560 = vmatpush1.bf16.msra.mxu0 %v1576
    %2561 = vmatprep.subr.bf16.mxu0 %v1581
    %2562 = vmatpush1.bf16.msra.mxu0 %v1580
    %2563 = vmatprep.subr.bf16.mxu0 %v1585
    %2564 = vmatpush1.bf16.msra.mxu0 %v1584
    %2565 = vmatprep.subr.bf16.mxu0 %v1589
    %2566 = vmatpush1.bf16.msra.mxu0 %v1588
    %2567 = vmatprep.subr.bf16.mxu0 %v1593
    %2568 = vmatpush1.bf16.msra.mxu0 %v1592
    %2569 = vmatprep.subr.bf16.mxu0 %v1597
    %2570 = vmatpush1.bf16.msra.mxu0 %v1596
    %2571 = vmatprep.mubr.bf16.mxu0 %v193
    %2572 = vmatmul.mubr.bf16.gmra.mrb[0].mxu0 %v192
    %v2573 = vpop.f32.mrb[0].mxu0
    %v2574 = vadd.f32 %v565, %v2573
    %v2575 = vpop.f32.mrb[0].mxu0
    %v2576 = vadd.f32 %v569, %v2575
    %v2577 = vpop.f32.mrb[0].mxu0
    %v2578 = vadd.f32 %v565, %v2577
    %v2579 = vpop.f32.mrb[0].mxu0
    %v2580 = vadd.f32 %v569, %v2579
    %2581 = vmatprep.mubr.bf16.mxu0 %v203
    %2582 = vmatmul.mubr.bf16.gmra.mrb[0].mxu0 %v202
    %v2583 = vpop.f32.mrb[0].mxu0
    %v2584 = vadd.f32 %v565, %v2583
    %v2585 = vpop.f32.mrb[0].mxu0
    %v2586 = vadd.f32 %v569, %v2585
    %v2587 = vpop.f32.mrb[0].mxu0
    %v2588 = vadd.f32 %v565, %v2587
    %v2589 = vpop.f32.mrb[0].mxu0
    %v2590 = vadd.f32 %v569, %v2589
    %2591 = vmatprep.mubr.bf16.mxu0 %v213
    %2592 = vmatmul.mubr.bf16.gmra.mrb[0].mxu0 %v212
    %v2593 = vpop.f32.mrb[0].mxu0
    %v2594 = vadd.f32 %v565, %v2593
    %v2595 = vpop.f32.mrb[0].mxu0
    %v2596 = vadd.f32 %v569, %v2595
    %v2597 = vpop.f32.mrb[0].mxu0
    %v2598 = vadd.f32 %v565, %v2597
    %v2599 = vpop.f32.mrb[0].mxu0
    %v2600 = vadd.f32 %v569, %v2599
    %2601 = vmatprep.mubr.bf16.mxu0 %v223
    %2602 = vmatmul.mubr.bf16.gmra.mrb[0].mxu0 %v222
    %v2603 = vpop.f32.mrb[0].mxu0
    %v2604 = vadd.f32 %v565, %v2603
    %v2605 = vpop.f32.mrb[0].mxu0
    %v2606 = vadd.f32 %v569, %v2605
    %v2607 = vpop.f32.mrb[0].mxu0
    %v2608 = vadd.f32 %v565, %v2607
    %v2609 = vpop.f32.mrb[0].mxu0
    %v2610 = vadd.f32 %v569, %v2609
    %2611 = vdwg.mxu0
    %2612 = vmatprep.subr.bf16.mxu0 %v1601
    %2613 = vmatpush1.bf16.msra.mxu0 %v1600
    %2614 = vmatprep.subr.bf16.mxu0 %v1605
    %2615 = vmatpush1.bf16.msra.mxu0 %v1604
    %2616 = vmatprep.subr.bf16.mxu0 %v1609
    %2617 = vmatpush1.bf16.msra.mxu0 %v1608
    %2618 = vmatprep.subr.bf16.mxu0 %v1613
    %2619 = vmatpush1.bf16.msra.mxu0 %v1612
    %2620 = vmatprep.subr.bf16.mxu0 %v1617
    %2621 = vmatpush1.bf16.msra.mxu0 %v1616
    %2622 = vmatprep.subr.bf16.mxu0 %v1621
    %2623 = vmatpush1.bf16.msra.mxu0 %v1620
    %2624 = vmatprep.subr.bf16.mxu0 %v1625
    %2625 = vmatpush1.bf16.msra.mxu0 %v1624
    %2626 = vmatprep.subr.bf16.mxu0 %v1629
    %2627 = vmatpush1.bf16.msra.mxu0 %v1628
    %2628 = vmatprep.subr.bf16.mxu0 %v1633
    %2629 = vmatpush1.bf16.msra.mxu0 %v1632
    %2630 = vmatprep.subr.bf16.mxu0 %v1637
    %2631 = vmatpush1.bf16.msra.mxu0 %v1636
    %2632 = vmatprep.subr.bf16.mxu0 %v1641
    %2633 = vmatpush1.bf16.msra.mxu0 %v1640
    %2634 = vmatprep.subr.bf16.mxu0 %v1645
    %2635 = vmatpush1.bf16.msra.mxu0 %v1644
    %2636 = vmatprep.subr.bf16.mxu0 %v1649
    %2637 = vmatpush1.bf16.msra.mxu0 %v1648
    %2638 = vmatprep.subr.bf16.mxu0 %v1653
    %2639 = vmatpush1.bf16.msra.mxu0 %v1652
    %2640 = vmatprep.subr.bf16.mxu0 %v1657
    %2641 = vmatpush1.bf16.msra.mxu0 %v1656
    %2642 = vmatprep.subr.bf16.mxu0 %v1661
    %2643 = vmatpush1.bf16.msra.mxu0 %v1660
    %2644 = vmatprep.mubr.bf16.mxu0 %v195
    %2645 = vmatmul.mubr.bf16.gmra.mrb[0].mxu0 %v194
    %v2646 = vpop.f32.mrb[0].mxu0
    %v2647 = vadd.f32 %v2574, %v2646
    %v2648 = vpop.f32.mrb[0].mxu0
    %v2649 = vadd.f32 %v2576, %v2648
    %v2650 = vpop.f32.mrb[0].mxu0
    %v2651 = vadd.f32 %v2578, %v2650
    %v2652 = vpop.f32.mrb[0].mxu0
    %v2653 = vadd.f32 %v2580, %v2652
    %2654 = vmatprep.mubr.bf16.mxu0 %v205
    %2655 = vmatmul.mubr.bf16.gmra.mrb[0].mxu0 %v204
    %v2656 = vpop.f32.mrb[0].mxu0
    %v2657 = vadd.f32 %v2584, %v2656
    %v2658 = vpop.f32.mrb[0].mxu0
    %v2659 = vadd.f32 %v2586, %v2658
    %v2660 = vpop.f32.mrb[0].mxu0
    %v2661 = vadd.f32 %v2588, %v2660
    %v2662 = vpop.f32.mrb[0].mxu0
    %v2663 = vadd.f32 %v2590, %v2662
    %2664 = vmatprep.mubr.bf16.mxu0 %v215
    %2665 = vmatmul.mubr.bf16.gmra.mrb[0].mxu0 %v214
    %v2666 = vpop.f32.mrb[0].mxu0
    %v2667 = vadd.f32 %v2594, %v2666
    %v2668 = vpop.f32.mrb[0].mxu0
    %v2669 = vadd.f32 %v2596, %v2668
    %v2670 = vpop.f32.mrb[0].mxu0
    %v2671 = vadd.f32 %v2598, %v2670
    %v2672 = vpop.f32.mrb[0].mxu0
    %v2673 = vadd.f32 %v2600, %v2672
    %2674 = vmatprep.mubr.bf16.mxu0 %v225
    %2675 = vmatmul.mubr.bf16.gmra.mrb[0].mxu0 %v224
    %v2676 = vpop.f32.mrb[0].mxu0
    %v2677 = vadd.f32 %v2604, %v2676
    %v2678 = vpop.f32.mrb[0].mxu0
    %v2679 = vadd.f32 %v2606, %v2678
    %v2680 = vpop.f32.mrb[0].mxu0
    %v2681 = vadd.f32 %v2608, %v2680
    %v2682 = vpop.f32.mrb[0].mxu0
    %v2683 = vadd.f32 %v2610, %v2682
    %2684 = vdwg.mxu0
    %2685 = vmatprep.subr.bf16.mxu0 %v1665
    %2686 = vmatpush1.bf16.msra.mxu0 %v1664
    %2687 = vmatprep.subr.bf16.mxu0 %v1669
    %2688 = vmatpush1.bf16.msra.mxu0 %v1668
    %2689 = vmatprep.subr.bf16.mxu0 %v1673
    %2690 = vmatpush1.bf16.msra.mxu0 %v1672
    %2691 = vmatprep.subr.bf16.mxu0 %v1677
    %2692 = vmatpush1.bf16.msra.mxu0 %v1676
    %2693 = vmatprep.subr.bf16.mxu0 %v1681
    %2694 = vmatpush1.bf16.msra.mxu0 %v1680
    %2695 = vmatprep.subr.bf16.mxu0 %v1685
    %2696 = vmatpush1.bf16.msra.mxu0 %v1684
    %2697 = vmatprep.subr.bf16.mxu0 %v1689
    %2698 = vmatpush1.bf16.msra.mxu0 %v1688
    %2699 = vmatprep.subr.bf16.mxu0 %v1693
    %2700 = vmatpush1.bf16.msra.mxu0 %v1692
    %2701 = vmatprep.subr.bf16.mxu0 %v1697
    %2702 = vmatpush1.bf16.msra.mxu0 %v1696
    %2703 = vmatprep.subr.bf16.mxu0 %v1701
    %2704 = vmatpush1.bf16.msra.mxu0 %v1700
    %2705 = vmatprep.subr.bf16.mxu0 %v1705
    %2706 = vmatpush1.bf16.msra.mxu0 %v1704
    %2707 = vmatprep.subr.bf16.mxu0 %v1709
    %2708 = vmatpush1.bf16.msra.mxu0 %v1708
    %2709 = vmatprep.subr.bf16.mxu0 %v1713
    %2710 = vmatpush1.bf16.msra.mxu0 %v1712
    %2711 = vmatprep.subr.bf16.mxu0 %v1717
    %2712 = vmatpush1.bf16.msra.mxu0 %v1716
    %2713 = vmatprep.subr.bf16.mxu0 %v1721
    %2714 = vmatpush1.bf16.msra.mxu0 %v1720
    %2715 = vmatprep.subr.bf16.mxu0 %v1725
    %2716 = vmatpush1.bf16.msra.mxu0 %v1724
    %2717 = vmatprep.mubr.bf16.mxu0 %v197
    %2718 = vmatmul.mubr.bf16.gmra.mrb[0].mxu0 %v196
    %v2719 = vpop.f32.mrb[0].mxu0
    %v2720 = vadd.f32 %v2647, %v2719
    %v2721 = vpop.f32.mrb[0].mxu0
    %v2722 = vadd.f32 %v2649, %v2721
    %v2723 = vpop.f32.mrb[0].mxu0
    %v2724 = vadd.f32 %v2651, %v2723
    %v2725 = vpop.f32.mrb[0].mxu0
    %v2726 = vadd.f32 %v2653, %v2725
    %2727 = vmatprep.mubr.bf16.mxu0 %v207
    %2728 = vmatmul.mubr.bf16.gmra.mrb[0].mxu0 %v206
    %v2729 = vpop.f32.mrb[0].mxu0
    %v2730 = vadd.f32 %v2657, %v2729
    %v2731 = vpop.f32.mrb[0].mxu0
    %v2732 = vadd.f32 %v2659, %v2731
    %v2733 = vpop.f32.mrb[0].mxu0
    %v2734 = vadd.f32 %v2661, %v2733
    %v2735 = vpop.f32.mrb[0].mxu0
    %v2736 = vadd.f32 %v2663, %v2735
    %2737 = vmatprep.mubr.bf16.mxu0 %v217
    %2738 = vmatmul.mubr.bf16.gmra.mrb[0].mxu0 %v216
    %v2739 = vpop.f32.mrb[0].mxu0
    %v2740 = vadd.f32 %v2667, %v2739
    %v2741 = vpop.f32.mrb[0].mxu0
    %v2742 = vadd.f32 %v2669, %v2741
    %v2743 = vpop.f32.mrb[0].mxu0
    %v2744 = vadd.f32 %v2671, %v2743
    %v2745 = vpop.f32.mrb[0].mxu0
    %v2746 = vadd.f32 %v2673, %v2745
    %2747 = vmatprep.mubr.bf16.mxu0 %v227
    %2748 = vmatmul.mubr.bf16.gmra.mrb[0].mxu0 %v226
    %v2749 = vpop.f32.mrb[0].mxu0
    %v2750 = vadd.f32 %v2677, %v2749
    %v2751 = vpop.f32.mrb[0].mxu0
    %v2752 = vadd.f32 %v2679, %v2751
    %v2753 = vpop.f32.mrb[0].mxu0
    %v2754 = vadd.f32 %v2681, %v2753
    %v2755 = vpop.f32.mrb[0].mxu0
    %v2756 = vadd.f32 %v2683, %v2755
    %2757 = vdwg.mxu0
    %2758 = vmatprep.subr.bf16.mxu0 %v1729
    %2759 = vmatpush1.bf16.msra.mxu0 %v1728
    %2760 = vmatprep.subr.bf16.mxu0 %v1733
    %2761 = vmatpush1.bf16.msra.mxu0 %v1732
    %2762 = vmatprep.subr.bf16.mxu0 %v1737
    %2763 = vmatpush1.bf16.msra.mxu0 %v1736
    %2764 = vmatprep.subr.bf16.mxu0 %v1741
    %2765 = vmatpush1.bf16.msra.mxu0 %v1740
    %2766 = vmatprep.subr.bf16.mxu0 %v1745
    %2767 = vmatpush1.bf16.msra.mxu0 %v1744
    %2768 = vmatprep.subr.bf16.mxu0 %v1749
    %2769 = vmatpush1.bf16.msra.mxu0 %v1748
    %2770 = vmatprep.subr.bf16.mxu0 %v1753
    %2771 = vmatpush1.bf16.msra.mxu0 %v1752
    %2772 = vmatprep.subr.bf16.mxu0 %v1757
    %2773 = vmatpush1.bf16.msra.mxu0 %v1756
    %2774 = vmatprep.subr.bf16.mxu0 %v1761
    %2775 = vmatpush1.bf16.msra.mxu0 %v1760
    %2776 = vmatprep.subr.bf16.mxu0 %v1765
    %2777 = vmatpush1.bf16.msra.mxu0 %v1764
    %2778 = vmatprep.subr.bf16.mxu0 %v1769
    %2779 = vmatpush1.bf16.msra.mxu0 %v1768
    %2780 = vmatprep.subr.bf16.mxu0 %v1773
    %2781 = vmatpush1.bf16.msra.mxu0 %v1772
    %2782 = vmatprep.subr.bf16.mxu0 %v1777
    %2783 = vmatpush1.bf16.msra.mxu0 %v1776
    %2784 = vmatprep.subr.bf16.mxu0 %v1781
    %2785 = vmatpush1.bf16.msra.mxu0 %v1780
    %2786 = vmatprep.subr.bf16.mxu0 %v1785
    %2787 = vmatpush1.bf16.msra.mxu0 %v1784
    %2788 = vmatprep.subr.bf16.mxu0 %v1789
    %2789 = vmatpush1.bf16.msra.mxu0 %v1788
    %2790 = vmatprep.mubr.bf16.mxu0 %v199
    %2791 = vmatmul.mubr.bf16.gmra.mrb[0].mxu0 %v198
    %v2792 = vpop.f32.mrb[0].mxu0
    %v2793 = vadd.f32 %v2720, %v2792
    %v2794 = vpop.f32.mrb[0].mxu0
    %v2795 = vadd.f32 %v2722, %v2794
    %v2796 = vpop.f32.mrb[0].mxu0
    %v2797 = vadd.f32 %v2724, %v2796
    %v2798 = vpop.f32.mrb[0].mxu0
    %v2799 = vadd.f32 %v2726, %v2798
    %2800 = vmatprep.mubr.bf16.mxu0 %v209
    %2801 = vmatmul.mubr.bf16.gmra.mrb[0].mxu0 %v208
    %v2802 = vpop.f32.mrb[0].mxu0
    %v2803 = vadd.f32 %v2730, %v2802
    %v2804 = vpop.f32.mrb[0].mxu0
    %v2805 = vadd.f32 %v2732, %v2804
    %v2806 = vpop.f32.mrb[0].mxu0
    %v2807 = vadd.f32 %v2734, %v2806
    %v2808 = vpop.f32.mrb[0].mxu0
    %v2809 = vadd.f32 %v2736, %v2808
    %2810 = vmatprep.mubr.bf16.mxu0 %v219
    %2811 = vmatmul.mubr.bf16.gmra.mrb[0].mxu0 %v218
    %v2812 = vpop.f32.mrb[0].mxu0
    %v2813 = vadd.f32 %v2740, %v2812
    %v2814 = vpop.f32.mrb[0].mxu0
    %v2815 = vadd.f32 %v2742, %v2814
    %v2816 = vpop.f32.mrb[0].mxu0
    %v2817 = vadd.f32 %v2744, %v2816
    %v2818 = vpop.f32.mrb[0].mxu0
    %v2819 = vadd.f32 %v2746, %v2818
    %2820 = vmatprep.mubr.bf16.mxu0 %v229
    %2821 = vmatmul.mubr.bf16.gmra.mrb[0].mxu0 %v228
    %v2822 = vpop.f32.mrb[0].mxu0
    %v2823 = vadd.f32 %v2750, %v2822
    %v2824 = vpop.f32.mrb[0].mxu0
    %v2825 = vadd.f32 %v2752, %v2824
    %v2826 = vpop.f32.mrb[0].mxu0
    %v2827 = vadd.f32 %v2754, %v2826
    %v2828 = vpop.f32.mrb[0].mxu0
    %v2829 = vadd.f32 %v2756, %v2828
    %2830 = vdwg.mxu0
    %2831 = vmatprep.subr.bf16.mxu0 %v1793
    %2832 = vmatpush1.bf16.msra.mxu0 %v1792
    %2833 = vmatprep.subr.bf16.mxu0 %v1797
    %2834 = vmatpush1.bf16.msra.mxu0 %v1796
    %2835 = vmatprep.subr.bf16.mxu0 %v1801
    %2836 = vmatpush1.bf16.msra.mxu0 %v1800
    %2837 = vmatprep.subr.bf16.mxu0 %v1805
    %2838 = vmatpush1.bf16.msra.mxu0 %v1804
    %2839 = vmatprep.subr.bf16.mxu0 %v1809
    %2840 = vmatpush1.bf16.msra.mxu0 %v1808
    %2841 = vmatprep.subr.bf16.mxu0 %v1813
    %2842 = vmatpush1.bf16.msra.mxu0 %v1812
    %2843 = vmatprep.subr.bf16.mxu0 %v1817
    %2844 = vmatpush1.bf16.msra.mxu0 %v1816
    %2845 = vmatprep.subr.bf16.mxu0 %v1821
    %2846 = vmatpush1.bf16.msra.mxu0 %v1820
    %2847 = vmatprep.subr.bf16.mxu0 %v1825
    %2848 = vmatpush1.bf16.msra.mxu0 %v1824
    %2849 = vmatprep.subr.bf16.mxu0 %v1829
    %2850 = vmatpush1.bf16.msra.mxu0 %v1828
    %2851 = vmatprep.subr.bf16.mxu0 %v1833
    %2852 = vmatpush1.bf16.msra.mxu0 %v1832
    %2853 = vmatprep.subr.bf16.mxu0 %v1837
    %2854 = vmatpush1.bf16.msra.mxu0 %v1836
    %2855 = vmatprep.subr.bf16.mxu0 %v1841
    %2856 = vmatpush1.bf16.msra.mxu0 %v1840
    %2857 = vmatprep.subr.bf16.mxu0 %v1845
    %2858 = vmatpush1.bf16.msra.mxu0 %v1844
    %2859 = vmatprep.subr.bf16.mxu0 %v1849
    %2860 = vmatpush1.bf16.msra.mxu0 %v1848
    %2861 = vmatprep.subr.bf16.mxu0 %v1853
    %2862 = vmatpush1.bf16.msra.mxu0 %v1852
    %2863 = vmatprep.mubr.bf16.mxu0 %v201
    %2864 = vmatmul.mubr.bf16.gmra.mrb[0].mxu0 %v200
    %v2865 = vpop.f32.mrb[0].mxu0
    %v2866 = vadd.f32 %v2793, %v2865
    %v2867 = vpop.f32.mrb[0].mxu0
    %v2868 = vadd.f32 %v2795, %v2867
    %v2869 = vpop.f32.mrb[0].mxu0
    %v2870 = vadd.f32 %v2797, %v2869
    %v2871 = vpop.f32.mrb[0].mxu0
    %v2872 = vadd.f32 %v2799, %v2871
    %2873 = vmatprep.mubr.bf16.mxu0 %v211
    %2874 = vmatmul.mubr.bf16.gmra.mrb[0].mxu0 %v210
    %v2875 = vpop.f32.mrb[0].mxu0
    %v2876 = vadd.f32 %v2803, %v2875
    %v2877 = vpop.f32.mrb[0].mxu0
    %v2878 = vadd.f32 %v2805, %v2877
    %v2879 = vpop.f32.mrb[0].mxu0
    %v2880 = vadd.f32 %v2807, %v2879
    %v2881 = vpop.f32.mrb[0].mxu0
    %v2882 = vadd.f32 %v2809, %v2881
    %2883 = vmatprep.mubr.bf16.mxu0 %v221
    %2884 = vmatmul.mubr.bf16.gmra.mrb[0].mxu0 %v220
    %v2885 = vpop.f32.mrb[0].mxu0
    %v2886 = vadd.f32 %v2813, %v2885
    %v2887 = vpop.f32.mrb[0].mxu0
    %v2888 = vadd.f32 %v2815, %v2887
    %v2889 = vpop.f32.mrb[0].mxu0
    %v2890 = vadd.f32 %v2817, %v2889
    %v2891 = vpop.f32.mrb[0].mxu0
    %v2892 = vadd.f32 %v2819, %v2891
    %2893 = vmatprep.mubr.bf16.mxu0 %v231
    %2894 = vmatmul.mubr.bf16.gmra.mrb[0].mxu0 %v230
    %v2895 = vpop.f32.mrb[0].mxu0
    %v2896 = vadd.f32 %v2823, %v2895
    %v2897 = vpop.f32.mrb[0].mxu0
    %v2898 = vadd.f32 %v2825, %v2897
    %v2899 = vpop.f32.mrb[0].mxu0
    %v2900 = vadd.f32 %v2827, %v2899
    %v2901 = vpop.f32.mrb[0].mxu0
    %v2902 = vadd.f32 %v2829, %v2901
    %2903 = vdwg.mxu0
    %v2904 = vmax.f32 %v2501, 0.0
    %v2905 = vmax.f32 %v2503, 0.0
    %v2906 = vmax.f32 %v2866, 0.0
    %v2907 = vmax.f32 %v2868, 0.0
    %v2908 = vmax.f32 %v2505, 0.0
    %v2909 = vmax.f32 %v2507, 0.0
    %v2910 = vmax.f32 %v2870, 0.0
    %v2911 = vmax.f32 %v2872, 0.0
    %v2912 = vmax.f32 %v2511, 0.0
    %v2913 = vmax.f32 %v2513, 0.0
    %v2914 = vmax.f32 %v2876, 0.0
    %v2915 = vmax.f32 %v2878, 0.0
    %v2916 = vmax.f32 %v2515, 0.0
    %v2917 = vmax.f32 %v2517, 0.0
    %v2918 = vmax.f32 %v2880, 0.0
    %v2919 = vmax.f32 %v2882, 0.0
    %v2920 = vmax.f32 %v2521, 0.0
    %v2921 = vmax.f32 %v2523, 0.0
    %v2922 = vmax.f32 %v2886, 0.0
    %v2923 = vmax.f32 %v2888, 0.0
    %v2924 = vmax.f32 %v2525, 0.0
    %v2925 = vmax.f32 %v2527, 0.0
    %v2926 = vmax.f32 %v2890, 0.0
    %v2927 = vmax.f32 %v2892, 0.0
    %v2928 = vmax.f32 %v2531, 0.0
    %v2929 = vmax.f32 %v2533, 0.0
    %v2930 = vmax.f32 %v2896, 0.0
    %v2931 = vmax.f32 %v2898, 0.0
    %v2932 = vmax.f32 %v2535, 0.0
    %v2933 = vmax.f32 %v2537, 0.0
    %v2934 = vmax.f32 %v2900, 0.0
    %v2935 = vmax.f32 %v2902, 0.0
    %v2936 = vpack.c.bf16 %v2908, %v2904
    %v2937 = vpack.c.bf16 %v2909, %v2905
    %v2938 = vpack.c.bf16 %v2910, %v2906
    %v2939 = vpack.c.bf16 %v2911, %v2907
    %v2940 = vpack.c.bf16 %v2912, %v2908
    %v2941 = vpack.c.bf16 %v2913, %v2909
    %v2942 = vpack.c.bf16 %v2914, %v2910
    %v2943 = vpack.c.bf16 %v2915, %v2911
    %v2944 = vpack.c.bf16 %v2916, %v2912
    %v2945 = vpack.c.bf16 %v2917, %v2913
    %v2946 = vpack.c.bf16 %v2918, %v2914
    %v2947 = vpack.c.bf16 %v2919, %v2915
    %v2948 = vpack.c.bf16 %v2920, %v2916
    %v2949 = vpack.c.bf16 %v2921, %v2917
    %v2950 = vpack.c.bf16 %v2922, %v2918
    %v2951 = vpack.c.bf16 %v2923, %v2919
    %v2952 = vpack.c.bf16 %v2924, %v2920
    %v2953 = vpack.c.bf16 %v2925, %v2921
    %v2954 = vpack.c.bf16 %v2926, %v2922
    %v2955 = vpack.c.bf16 %v2927, %v2923
    %v2956 = vpack.c.bf16 %v2928, %v2924
    %v2957 = vpack.c.bf16 %v2929, %v2925
    %v2958 = vpack.c.bf16 %v2930, %v2926
    %v2959 = vpack.c.bf16 %v2931, %v2927
    %v2960 = vpack.c.bf16 %v2932, %v2928
    %v2961 = vpack.c.bf16 %v2933, %v2929
    %v2962 = vpack.c.bf16 %v2934, %v2930
    %v2963 = vpack.c.bf16 %v2935, %v2931
    %v2964 = vpack.c.bf16 %v2904, %v2932
    %v2965 = vpack.c.bf16 %v2905, %v2933
    %v2966 = vpack.c.bf16 %v2906, %v2934
    %v2967 = vpack.c.bf16 %v2907, %v2935
    %v2968 = vld [vmem:[#allocation6] sm:$0xff]
    %v2969 = vld [vmem:[#allocation6 + $0x8] sm:$0xff]
    %v2970 = vld [vmem:[#allocation6 + $0x10] sm:$0xff]
    %v2971 = vld [vmem:[#allocation6 + $0x18] sm:$0xff]
    %v2972 = vld [vmem:[#allocation6 + $0x20] sm:$0xff]
    %v2973 = vld [vmem:[#allocation6 + $0x28] sm:$0xff]
    %v2974 = vld [vmem:[#allocation6 + $0x30] sm:$0xff]
    %v2975 = vld [vmem:[#allocation6 + $0x38] sm:$0xff]
    %v2976 = vld [vmem:[#allocation6 + $0x40] sm:$0xff]
    %v2977 = vld [vmem:[#allocation6 + $0x48] sm:$0xff]
    %v2978 = vld [vmem:[#allocation6 + $0x50] sm:$0xff]
    %v2979 = vld [vmem:[#allocation6 + $0x58] sm:$0xff]
    %v2980 = vld [vmem:[#allocation6 + $0x60] sm:$0xff]
    %v2981 = vld [vmem:[#allocation6 + $0x68] sm:$0xff]
    %v2982 = vld [vmem:[#allocation6 + $0x70] sm:$0xff]
    %v2983 = vld [vmem:[#allocation6 + $0x78] sm:$0xff]
    %v2984 = vld [vmem:[#allocation6 + $0x80] sm:$0xff]
    %v2985 = vld [vmem:[#allocation6 + $0x88] sm:$0xff]
    %v2986 = vld [vmem:[#allocation6 + $0x90] sm:$0xff]
    %v2987 = vld [vmem:[#allocation6 + $0x98] sm:$0xff]
    %v2988 = vld [vmem:[#allocation6 + $0xa0] sm:$0xff]
    %v2989 = vld [vmem:[#allocation6 + $0xa8] sm:$0xff]
    %v2990 = vld [vmem:[#allocation6 + $0xb0] sm:$0xff]
    %v2991 = vld [vmem:[#allocation6 + $0xb8] sm:$0xff]
    %v2992 = vld [vmem:[#allocation6 + $0xc0] sm:$0xff]
    %v2993 = vld [vmem:[#allocation6 + $0xc8] sm:$0xff]
    %v2994 = vld [vmem:[#allocation6 + $0xd0] sm:$0xff]
    %v2995 = vld [vmem:[#allocation6 + $0xd8] sm:$0xff]
    %v2996 = vld [vmem:[#allocation6 + $0xe0] sm:$0xff]
    %v2997 = vld [vmem:[#allocation6 + $0xe8] sm:$0xff]
    %v2998 = vld [vmem:[#allocation6 + $0xf0] sm:$0xff]
    %v2999 = vld [vmem:[#allocation6 + $0xf8] sm:$0xff]
    %v3000 = vld [vmem:[#allocation6 + $0x100] sm:$0xff]
    %v3001 = vld [vmem:[#allocation6 + $0x108] sm:$0xff]
    %v3002 = vld [vmem:[#allocation6 + $0x110] sm:$0xff]
    %v3003 = vld [vmem:[#allocation6 + $0x118] sm:$0xff]
    %v3004 = vld [vmem:[#allocation6 + $0x120] sm:$0xff]
    %v3005 = vld [vmem:[#allocation6 + $0x128] sm:$0xff]
    %v3006 = vld [vmem:[#allocation6 + $0x130] sm:$0xff]
    %v3007 = vld [vmem:[#allocation6 + $0x138] sm:$0xff]
    %v3008 = vld [vmem:[#allocation6 + $0x140] sm:$0xff]
    %v3009 = vld [vmem:[#allocation6 + $0x148] sm:$0xff]
    %v3010 = vld [vmem:[#allocation6 + $0x150] sm:$0xff]
    %v3011 = vld [vmem:[#allocation6 + $0x158] sm:$0xff]
    %v3012 = vld [vmem:[#allocation6 + $0x160] sm:$0xff]
    %v3013 = vld [vmem:[#allocation6 + $0x168] sm:$0xff]
    %v3014 = vld [vmem:[#allocation6 + $0x170] sm:$0xff]
    %v3015 = vld [vmem:[#allocation6 + $0x178] sm:$0xff]
    %v3016 = vld [vmem:[#allocation6 + $0x180] sm:$0xff]
    %v3017 = vld [vmem:[#allocation6 + $0x188] sm:$0xff]
    %v3018 = vld [vmem:[#allocation6 + $0x190] sm:$0xff]
    %v3019 = vld [vmem:[#allocation6 + $0x198] sm:$0xff]
    %v3020 = vld [vmem:[#allocation6 + $0x1a0] sm:$0xff]
    %v3021 = vld [vmem:[#allocation6 + $0x1a8] sm:$0xff]
    %v3022 = vld [vmem:[#allocation6 + $0x1b0] sm:$0xff]
    %v3023 = vld [vmem:[#allocation6 + $0x1b8] sm:$0xff]
    %v3024 = vld [vmem:[#allocation6 + $0x1c0] sm:$0xff]
    %v3025 = vld [vmem:[#allocation6 + $0x1c8] sm:$0xff]
    %v3026 = vld [vmem:[#allocation6 + $0x1d0] sm:$0xff]
    %v3027 = vld [vmem:[#allocation6 + $0x1d8] sm:$0xff]
    %v3028 = vld [vmem:[#allocation6 + $0x1e0] sm:$0xff]
    %v3029 = vld [vmem:[#allocation6 + $0x1e8] sm:$0xff]
    %v3030 = vld [vmem:[#allocation6 + $0x1f0] sm:$0xff]
    %v3031 = vld [vmem:[#allocation6 + $0x1f8] sm:$0xff]
    %v3032 = vld [vmem:[#allocation6 + $0x200] sm:$0xff]
    %v3033 = vld [vmem:[#allocation6 + $0x208] sm:$0xff]
    %v3034 = vld [vmem:[#allocation6 + $0x210] sm:$0xff]
    %v3035 = vld [vmem:[#allocation6 + $0x218] sm:$0xff]
    %v3036 = vld [vmem:[#allocation6 + $0x220] sm:$0xff]
    %v3037 = vld [vmem:[#allocation6 + $0x228] sm:$0xff]
    %v3038 = vld [vmem:[#allocation6 + $0x230] sm:$0xff]
    %v3039 = vld [vmem:[#allocation6 + $0x238] sm:$0xff]
    %v3040 = vld [vmem:[#allocation6 + $0x240] sm:$0xff]
    %v3041 = vld [vmem:[#allocation6 + $0x248] sm:$0xff]
    %v3042 = vld [vmem:[#allocation6 + $0x250] sm:$0xff]
    %v3043 = vld [vmem:[#allocation6 + $0x258] sm:$0xff]
    %v3044 = vld [vmem:[#allocation6 + $0x260] sm:$0xff]
    %v3045 = vld [vmem:[#allocation6 + $0x268] sm:$0xff]
    %v3046 = vld [vmem:[#allocation6 + $0x270] sm:$0xff]
    %v3047 = vld [vmem:[#allocation6 + $0x278] sm:$0xff]
    %v3048 = vld [vmem:[#allocation6 + $0x280] sm:$0xff]
    %v3049 = vld [vmem:[#allocation6 + $0x288] sm:$0xff]
    %v3050 = vld [vmem:[#allocation6 + $0x290] sm:$0xff]
    %v3051 = vld [vmem:[#allocation6 + $0x298] sm:$0xff]
    %v3052 = vld [vmem:[#allocation6 + $0x2a0] sm:$0xff]
    %v3053 = vld [vmem:[#allocation6 + $0x2a8] sm:$0xff]
    %v3054 = vld [vmem:[#allocation6 + $0x2b0] sm:$0xff]
    %v3055 = vld [vmem:[#allocation6 + $0x2b8] sm:$0xff]
    %v3056 = vld [vmem:[#allocation6 + $0x2c0] sm:$0xff]
    %v3057 = vld [vmem:[#allocation6 + $0x2c8] sm:$0xff]
    %v3058 = vld [vmem:[#allocation6 + $0x2d0] sm:$0xff]
    %v3059 = vld [vmem:[#allocation6 + $0x2d8] sm:$0xff]
    %v3060 = vld [vmem:[#allocation6 + $0x2e0] sm:$0xff]
    %v3061 = vld [vmem:[#allocation6 + $0x2e8] sm:$0xff]
    %v3062 = vld [vmem:[#allocation6 + $0x2f0] sm:$0xff]
    %v3063 = vld [vmem:[#allocation6 + $0x2f8] sm:$0xff]
    %v3064 = vld [vmem:[#allocation6 + $0x300] sm:$0xff]
    %v3065 = vld [vmem:[#allocation6 + $0x308] sm:$0xff]
    %v3066 = vld [vmem:[#allocation6 + $0x310] sm:$0xff]
    %v3067 = vld [vmem:[#allocation6 + $0x318] sm:$0xff]
    %v3068 = vld [vmem:[#allocation6 + $0x320] sm:$0xff]
    %v3069 = vld [vmem:[#allocation6 + $0x328] sm:$0xff]
    %v3070 = vld [vmem:[#allocation6 + $0x330] sm:$0xff]
    %v3071 = vld [vmem:[#allocation6 + $0x338] sm:$0xff]
    %v3072 = vld [vmem:[#allocation6 + $0x340] sm:$0xff]
    %v3073 = vld [vmem:[#allocation6 + $0x348] sm:$0xff]
    %v3074 = vld [vmem:[#allocation6 + $0x350] sm:$0xff]
    %v3075 = vld [vmem:[#allocation6 + $0x358] sm:$0xff]
    %v3076 = vld [vmem:[#allocation6 + $0x360] sm:$0xff]
    %v3077 = vld [vmem:[#allocation6 + $0x368] sm:$0xff]
    %v3078 = vld [vmem:[#allocation6 + $0x370] sm:$0xff]
    %v3079 = vld [vmem:[#allocation6 + $0x378] sm:$0xff]
    %v3080 = vld [vmem:[#allocation6 + $0x380] sm:$0xff]
    %v3081 = vld [vmem:[#allocation6 + $0x388] sm:$0xff]
    %v3082 = vld [vmem:[#allocation6 + $0x390] sm:$0xff]
    %v3083 = vld [vmem:[#allocation6 + $0x398] sm:$0xff]
    %v3084 = vld [vmem:[#allocation6 + $0x3a0] sm:$0xff]
    %v3085 = vld [vmem:[#allocation6 + $0x3a8] sm:$0xff]
    %v3086 = vld [vmem:[#allocation6 + $0x3b0] sm:$0xff]
    %v3087 = vld [vmem:[#allocation6 + $0x3b8] sm:$0xff]
    %v3088 = vld [vmem:[#allocation6 + $0x3c0] sm:$0xff]
    %v3089 = vld [vmem:[#allocation6 + $0x3c8] sm:$0xff]
    %v3090 = vld [vmem:[#allocation6 + $0x3d0] sm:$0xff]
    %v3091 = vld [vmem:[#allocation6 + $0x3d8] sm:$0xff]
    %v3092 = vld [vmem:[#allocation6 + $0x3e0] sm:$0xff]
    %v3093 = vld [vmem:[#allocation6 + $0x3e8] sm:$0xff]
    %v3094 = vld [vmem:[#allocation6 + $0x3f0] sm:$0xff]
    %v3095 = vld [vmem:[#allocation6 + $0x3f8] sm:$0xff]
    %v3096 = vld [vmem:[#allocation6 + $0x400] sm:$0xff]
    %v3097 = vld [vmem:[#allocation6 + $0x408] sm:$0xff]
    %v3098 = vld [vmem:[#allocation6 + $0x410] sm:$0xff]
    %v3099 = vld [vmem:[#allocation6 + $0x418] sm:$0xff]
    %v3100 = vld [vmem:[#allocation6 + $0x420] sm:$0xff]
    %v3101 = vld [vmem:[#allocation6 + $0x428] sm:$0xff]
    %v3102 = vld [vmem:[#allocation6 + $0x430] sm:$0xff]
    %v3103 = vld [vmem:[#allocation6 + $0x438] sm:$0xff]
    %v3104 = vld [vmem:[#allocation6 + $0x440] sm:$0xff]
    %v3105 = vld [vmem:[#allocation6 + $0x448] sm:$0xff]
    %v3106 = vld [vmem:[#allocation6 + $0x450] sm:$0xff]
    %v3107 = vld [vmem:[#allocation6 + $0x458] sm:$0xff]
    %v3108 = vld [vmem:[#allocation6 + $0x460] sm:$0xff]
    %v3109 = vld [vmem:[#allocation6 + $0x468] sm:$0xff]
    %v3110 = vld [vmem:[#allocation6 + $0x470] sm:$0xff]
    %v3111 = vld [vmem:[#allocation6 + $0x478] sm:$0xff]
    %v3112 = vld [vmem:[#allocation6 + $0x480] sm:$0xff]
    %v3113 = vld [vmem:[#allocation6 + $0x488] sm:$0xff]
    %v3114 = vld [vmem:[#allocation6 + $0x490] sm:$0xff]
    %v3115 = vld [vmem:[#allocation6 + $0x498] sm:$0xff]
    %v3116 = vld [vmem:[#allocation6 + $0x4a0] sm:$0xff]
    %v3117 = vld [vmem:[#allocation6 + $0x4a8] sm:$0xff]
    %v3118 = vld [vmem:[#allocation6 + $0x4b0] sm:$0xff]
    %v3119 = vld [vmem:[#allocation6 + $0x4b8] sm:$0xff]
    %v3120 = vld [vmem:[#allocation6 + $0x4c0] sm:$0xff]
    %v3121 = vld [vmem:[#allocation6 + $0x4c8] sm:$0xff]
    %v3122 = vld [vmem:[#allocation6 + $0x4d0] sm:$0xff]
    %v3123 = vld [vmem:[#allocation6 + $0x4d8] sm:$0xff]
    %v3124 = vld [vmem:[#allocation6 + $0x4e0] sm:$0xff]
    %v3125 = vld [vmem:[#allocation6 + $0x4e8] sm:$0xff]
    %v3126 = vld [vmem:[#allocation6 + $0x4f0] sm:$0xff]
    %v3127 = vld [vmem:[#allocation6 + $0x4f8] sm:$0xff]
    %v3128 = vld [vmem:[#allocation6 + $0x500] sm:$0xff]
    %v3129 = vld [vmem:[#allocation6 + $0x508] sm:$0xff]
    %v3130 = vld [vmem:[#allocation6 + $0x510] sm:$0xff]
    %v3131 = vld [vmem:[#allocation6 + $0x518] sm:$0xff]
    %v3132 = vld [vmem:[#allocation6 + $0x520] sm:$0xff]
    %v3133 = vld [vmem:[#allocation6 + $0x528] sm:$0xff]
    %v3134 = vld [vmem:[#allocation6 + $0x530] sm:$0xff]
    %v3135 = vld [vmem:[#allocation6 + $0x538] sm:$0xff]
    %v3136 = vld [vmem:[#allocation6 + $0x540] sm:$0xff]
    %v3137 = vld [vmem:[#allocation6 + $0x548] sm:$0xff]
    %v3138 = vld [vmem:[#allocation6 + $0x550] sm:$0xff]
    %v3139 = vld [vmem:[#allocation6 + $0x558] sm:$0xff]
    %v3140 = vld [vmem:[#allocation6 + $0x560] sm:$0xff]
    %v3141 = vld [vmem:[#allocation6 + $0x568] sm:$0xff]
    %v3142 = vld [vmem:[#allocation6 + $0x570] sm:$0xff]
    %v3143 = vld [vmem:[#allocation6 + $0x578] sm:$0xff]
    %v3144 = vld [vmem:[#allocation6 + $0x580] sm:$0xff]
    %v3145 = vld [vmem:[#allocation6 + $0x588] sm:$0xff]
    %v3146 = vld [vmem:[#allocation6 + $0x590] sm:$0xff]
    %v3147 = vld [vmem:[#allocation6 + $0x598] sm:$0xff]
    %v3148 = vld [vmem:[#allocation6 + $0x5a0] sm:$0xff]
    %v3149 = vld [vmem:[#allocation6 + $0x5a8] sm:$0xff]
    %v3150 = vld [vmem:[#allocation6 + $0x5b0] sm:$0xff]
    %v3151 = vld [vmem:[#allocation6 + $0x5b8] sm:$0xff]
    %v3152 = vld [vmem:[#allocation6 + $0x5c0] sm:$0xff]
    %v3153 = vld [vmem:[#allocation6 + $0x5c8] sm:$0xff]
    %v3154 = vld [vmem:[#allocation6 + $0x5d0] sm:$0xff]
    %v3155 = vld [vmem:[#allocation6 + $0x5d8] sm:$0xff]
    %v3156 = vld [vmem:[#allocation6 + $0x5e0] sm:$0xff]
    %v3157 = vld [vmem:[#allocation6 + $0x5e8] sm:$0xff]
    %v3158 = vld [vmem:[#allocation6 + $0x5f0] sm:$0xff]
    %v3159 = vld [vmem:[#allocation6 + $0x5f8] sm:$0xff]
    %v3160 = vld [vmem:[#allocation6 + $0x600] sm:$0xff]
    %v3161 = vld [vmem:[#allocation6 + $0x608] sm:$0xff]
    %v3162 = vld [vmem:[#allocation6 + $0x610] sm:$0xff]
    %v3163 = vld [vmem:[#allocation6 + $0x618] sm:$0xff]
    %v3164 = vld [vmem:[#allocation6 + $0x620] sm:$0xff]
    %v3165 = vld [vmem:[#allocation6 + $0x628] sm:$0xff]
    %v3166 = vld [vmem:[#allocation6 + $0x630] sm:$0xff]
    %v3167 = vld [vmem:[#allocation6 + $0x638] sm:$0xff]
    %v3168 = vld [vmem:[#allocation6 + $0x640] sm:$0xff]
    %v3169 = vld [vmem:[#allocation6 + $0x648] sm:$0xff]
    %v3170 = vld [vmem:[#allocation6 + $0x650] sm:$0xff]
    %v3171 = vld [vmem:[#allocation6 + $0x658] sm:$0xff]
    %v3172 = vld [vmem:[#allocation6 + $0x660] sm:$0xff]
    %v3173 = vld [vmem:[#allocation6 + $0x668] sm:$0xff]
    %v3174 = vld [vmem:[#allocation6 + $0x670] sm:$0xff]
    %v3175 = vld [vmem:[#allocation6 + $0x678] sm:$0xff]
    %v3176 = vld [vmem:[#allocation6 + $0x680] sm:$0xff]
    %v3177 = vld [vmem:[#allocation6 + $0x688] sm:$0xff]
    %v3178 = vld [vmem:[#allocation6 + $0x690] sm:$0xff]
    %v3179 = vld [vmem:[#allocation6 + $0x698] sm:$0xff]
    %v3180 = vld [vmem:[#allocation6 + $0x6a0] sm:$0xff]
    %v3181 = vld [vmem:[#allocation6 + $0x6a8] sm:$0xff]
    %v3182 = vld [vmem:[#allocation6 + $0x6b0] sm:$0xff]
    %v3183 = vld [vmem:[#allocation6 + $0x6b8] sm:$0xff]
    %v3184 = vld [vmem:[#allocation6 + $0x6c0] sm:$0xff]
    %v3185 = vld [vmem:[#allocation6 + $0x6c8] sm:$0xff]
    %v3186 = vld [vmem:[#allocation6 + $0x6d0] sm:$0xff]
    %v3187 = vld [vmem:[#allocation6 + $0x6d8] sm:$0xff]
    %v3188 = vld [vmem:[#allocation6 + $0x6e0] sm:$0xff]
    %v3189 = vld [vmem:[#allocation6 + $0x6e8] sm:$0xff]
    %v3190 = vld [vmem:[#allocation6 + $0x6f0] sm:$0xff]
    %v3191 = vld [vmem:[#allocation6 + $0x6f8] sm:$0xff]
    %v3192 = vld [vmem:[#allocation6 + $0x700] sm:$0xff]
    %v3193 = vld [vmem:[#allocation6 + $0x708] sm:$0xff]
    %v3194 = vld [vmem:[#allocation6 + $0x710] sm:$0xff]
    %v3195 = vld [vmem:[#allocation6 + $0x718] sm:$0xff]
    %v3196 = vld [vmem:[#allocation6 + $0x720] sm:$0xff]
    %v3197 = vld [vmem:[#allocation6 + $0x728] sm:$0xff]
    %v3198 = vld [vmem:[#allocation6 + $0x730] sm:$0xff]
    %v3199 = vld [vmem:[#allocation6 + $0x738] sm:$0xff]
    %v3200 = vld [vmem:[#allocation6 + $0x740] sm:$0xff]
    %v3201 = vld [vmem:[#allocation6 + $0x748] sm:$0xff]
    %v3202 = vld [vmem:[#allocation6 + $0x750] sm:$0xff]
    %v3203 = vld [vmem:[#allocation6 + $0x758] sm:$0xff]
    %v3204 = vld [vmem:[#allocation6 + $0x760] sm:$0xff]
    %v3205 = vld [vmem:[#allocation6 + $0x768] sm:$0xff]
    %v3206 = vld [vmem:[#allocation6 + $0x770] sm:$0xff]
    %v3207 = vld [vmem:[#allocation6 + $0x778] sm:$0xff]
    %v3208 = vld [vmem:[#allocation6 + $0x780] sm:$0xff]
    %v3209 = vld [vmem:[#allocation6 + $0x788] sm:$0xff]
    %v3210 = vld [vmem:[#allocation6 + $0x790] sm:$0xff]
    %v3211 = vld [vmem:[#allocation6 + $0x798] sm:$0xff]
    %v3212 = vld [vmem:[#allocation6 + $0x7a0] sm:$0xff]
    %v3213 = vld [vmem:[#allocation6 + $0x7a8] sm:$0xff]
    %v3214 = vld [vmem:[#allocation6 + $0x7b0] sm:$0xff]
    %v3215 = vld [vmem:[#allocation6 + $0x7b8] sm:$0xff]
    %v3216 = vld [vmem:[#allocation6 + $0x7c0] sm:$0xff]
    %v3217 = vld [vmem:[#allocation6 + $0x7c8] sm:$0xff]
    %v3218 = vld [vmem:[#allocation6 + $0x7d0] sm:$0xff]
    %v3219 = vld [vmem:[#allocation6 + $0x7d8] sm:$0xff]
    %v3220 = vld [vmem:[#allocation6 + $0x7e0] sm:$0xff]
    %v3221 = vld [vmem:[#allocation6 + $0x7e8] sm:$0xff]
    %v3222 = vld [vmem:[#allocation6 + $0x7f0] sm:$0xff]
    %v3223 = vld [vmem:[#allocation6 + $0x7f8] sm:$0xff]
    %v3224 = vld [vmem:[#allocation6 + $0x800] sm:$0xff]
    %v3225 = vld [vmem:[#allocation6 + $0x808] sm:$0xff]
    %v3226 = vld [vmem:[#allocation6 + $0x810] sm:$0xff]
    %v3227 = vld [vmem:[#allocation6 + $0x818] sm:$0xff]
    %v3228 = vld [vmem:[#allocation6 + $0x820] sm:$0xff]
    %v3229 = vld [vmem:[#allocation6 + $0x828] sm:$0xff]
    %v3230 = vld [vmem:[#allocation6 + $0x830] sm:$0xff]
    %v3231 = vld [vmem:[#allocation6 + $0x838] sm:$0xff]
    %v3232 = vld [vmem:[#allocation6 + $0x840] sm:$0xff]
    %v3233 = vld [vmem:[#allocation6 + $0x848] sm:$0xff]
    %v3234 = vld [vmem:[#allocation6 + $0x850] sm:$0xff]
    %v3235 = vld [vmem:[#allocation6 + $0x858] sm:$0xff]
    %v3236 = vld [vmem:[#allocation6 + $0x860] sm:$0xff]
    %v3237 = vld [vmem:[#allocation6 + $0x868] sm:$0xff]
    %v3238 = vld [vmem:[#allocation6 + $0x870] sm:$0xff]
    %v3239 = vld [vmem:[#allocation6 + $0x878] sm:$0xff]
    %v3240 = vld [vmem:[#allocation6 + $0x880] sm:$0xff]
    %v3241 = vld [vmem:[#allocation6 + $0x888] sm:$0xff]
    %v3242 = vld [vmem:[#allocation6 + $0x890] sm:$0xff]
    %v3243 = vld [vmem:[#allocation6 + $0x898] sm:$0xff]
    %v3244 = vld [vmem:[#allocation6 + $0x8a0] sm:$0xff]
    %v3245 = vld [vmem:[#allocation6 + $0x8a8] sm:$0xff]
    %v3246 = vld [vmem:[#allocation6 + $0x8b0] sm:$0xff]
    %v3247 = vld [vmem:[#allocation6 + $0x8b8] sm:$0xff]
    %v3248 = vld [vmem:[#allocation6 + $0x8c0] sm:$0xff]
    %v3249 = vld [vmem:[#allocation6 + $0x8c8] sm:$0xff]
    %v3250 = vld [vmem:[#allocation6 + $0x8d0] sm:$0xff]
    %v3251 = vld [vmem:[#allocation6 + $0x8d8] sm:$0xff]
    %v3252 = vld [vmem:[#allocation6 + $0x8e0] sm:$0xff]
    %v3253 = vld [vmem:[#allocation6 + $0x8e8] sm:$0xff]
    %v3254 = vld [vmem:[#allocation6 + $0x8f0] sm:$0xff]
    %v3255 = vld [vmem:[#allocation6 + $0x8f8] sm:$0xff]
    %v3256 = vld [vmem:[#allocation6 + $0x900] sm:$0xff]
    %v3257 = vld [vmem:[#allocation6 + $0x908] sm:$0xff]
    %v3258 = vld [vmem:[#allocation6 + $0x910] sm:$0xff]
    %v3259 = vld [vmem:[#allocation6 + $0x918] sm:$0xff]
    %v3260 = vld [vmem:[#allocation6 + $0x920] sm:$0xff]
    %v3261 = vld [vmem:[#allocation6 + $0x928] sm:$0xff]
    %v3262 = vld [vmem:[#allocation6 + $0x930] sm:$0xff]
    %v3263 = vld [vmem:[#allocation6 + $0x938] sm:$0xff]
    %v3264 = vld [vmem:[#allocation6 + $0x940] sm:$0xff]
    %v3265 = vld [vmem:[#allocation6 + $0x948] sm:$0xff]
    %v3266 = vld [vmem:[#allocation6 + $0x950] sm:$0xff]
    %v3267 = vld [vmem:[#allocation6 + $0x958] sm:$0xff]
    %v3268 = vld [vmem:[#allocation6 + $0x960] sm:$0xff]
    %v3269 = vld [vmem:[#allocation6 + $0x968] sm:$0xff]
    %v3270 = vld [vmem:[#allocation6 + $0x970] sm:$0xff]
    %v3271 = vld [vmem:[#allocation6 + $0x978] sm:$0xff]
    %v3272 = vld [vmem:[#allocation6 + $0x980] sm:$0xff]
    %v3273 = vld [vmem:[#allocation6 + $0x988] sm:$0xff]
    %v3274 = vld [vmem:[#allocation6 + $0x990] sm:$0xff]
    %v3275 = vld [vmem:[#allocation6 + $0x998] sm:$0xff]
    %v3276 = vld [vmem:[#allocation6 + $0x9a0] sm:$0xff]
    %v3277 = vld [vmem:[#allocation6 + $0x9a8] sm:$0xff]
    %v3278 = vld [vmem:[#allocation6 + $0x9b0] sm:$0xff]
    %v3279 = vld [vmem:[#allocation6 + $0x9b8] sm:$0xff]
    %v3280 = vld [vmem:[#allocation6 + $0x9c0] sm:$0xff]
    %v3281 = vld [vmem:[#allocation6 + $0x9c8] sm:$0xff]
    %v3282 = vld [vmem:[#allocation6 + $0x9d0] sm:$0xff]
    %v3283 = vld [vmem:[#allocation6 + $0x9d8] sm:$0xff]
    %v3284 = vld [vmem:[#allocation6 + $0x9e0] sm:$0xff]
    %v3285 = vld [vmem:[#allocation6 + $0x9e8] sm:$0xff]
    %v3286 = vld [vmem:[#allocation6 + $0x9f0] sm:$0xff]
    %v3287 = vld [vmem:[#allocation6 + $0x9f8] sm:$0xff]
    %v3288 = vld [vmem:[#allocation6 + $0xa00] sm:$0xff]
    %v3289 = vld [vmem:[#allocation6 + $0xa08] sm:$0xff]
    %v3290 = vld [vmem:[#allocation6 + $0xa10] sm:$0xff]
    %v3291 = vld [vmem:[#allocation6 + $0xa18] sm:$0xff]
    %v3292 = vld [vmem:[#allocation6 + $0xa20] sm:$0xff]
    %v3293 = vld [vmem:[#allocation6 + $0xa28] sm:$0xff]
    %v3294 = vld [vmem:[#allocation6 + $0xa30] sm:$0xff]
    %v3295 = vld [vmem:[#allocation6 + $0xa38] sm:$0xff]
    %v3296 = vld [vmem:[#allocation6 + $0xa40] sm:$0xff]
    %v3297 = vld [vmem:[#allocation6 + $0xa48] sm:$0xff]
    %v3298 = vld [vmem:[#allocation6 + $0xa50] sm:$0xff]
    %v3299 = vld [vmem:[#allocation6 + $0xa58] sm:$0xff]
    %v3300 = vld [vmem:[#allocation6 + $0xa60] sm:$0xff]
    %v3301 = vld [vmem:[#allocation6 + $0xa68] sm:$0xff]
    %v3302 = vld [vmem:[#allocation6 + $0xa70] sm:$0xff]
    %v3303 = vld [vmem:[#allocation6 + $0xa78] sm:$0xff]
    %v3304 = vld [vmem:[#allocation6 + $0xa80] sm:$0xff]
    %v3305 = vld [vmem:[#allocation6 + $0xa88] sm:$0xff]
    %v3306 = vld [vmem:[#allocation6 + $0xa90] sm:$0xff]
    %v3307 = vld [vmem:[#allocation6 + $0xa98] sm:$0xff]
    %v3308 = vld [vmem:[#allocation6 + $0xaa0] sm:$0xff]
    %v3309 = vld [vmem:[#allocation6 + $0xaa8] sm:$0xff]
    %v3310 = vld [vmem:[#allocation6 + $0xab0] sm:$0xff]
    %v3311 = vld [vmem:[#allocation6 + $0xab8] sm:$0xff]
    %v3312 = vld [vmem:[#allocation6 + $0xac0] sm:$0xff]
    %v3313 = vld [vmem:[#allocation6 + $0xac8] sm:$0xff]
    %v3314 = vld [vmem:[#allocation6 + $0xad0] sm:$0xff]
    %v3315 = vld [vmem:[#allocation6 + $0xad8] sm:$0xff]
    %v3316 = vld [vmem:[#allocation6 + $0xae0] sm:$0xff]
    %v3317 = vld [vmem:[#allocation6 + $0xae8] sm:$0xff]
    %v3318 = vld [vmem:[#allocation6 + $0xaf0] sm:$0xff]
    %v3319 = vld [vmem:[#allocation6 + $0xaf8] sm:$0xff]
    %v3320 = vld [vmem:[#allocation6 + $0xb00] sm:$0xff]
    %v3321 = vld [vmem:[#allocation6 + $0xb08] sm:$0xff]
    %v3322 = vld [vmem:[#allocation6 + $0xb10] sm:$0xff]
    %v3323 = vld [vmem:[#allocation6 + $0xb18] sm:$0xff]
    %v3324 = vld [vmem:[#allocation6 + $0xb20] sm:$0xff]
    %v3325 = vld [vmem:[#allocation6 + $0xb28] sm:$0xff]
    %v3326 = vld [vmem:[#allocation6 + $0xb30] sm:$0xff]
    %v3327 = vld [vmem:[#allocation6 + $0xb38] sm:$0xff]
    %v3328 = vld [vmem:[#allocation6 + $0xb40] sm:$0xff]
    %v3329 = vld [vmem:[#allocation6 + $0xb48] sm:$0xff]
    %v3330 = vld [vmem:[#allocation6 + $0xb50] sm:$0xff]
    %v3331 = vld [vmem:[#allocation6 + $0xb58] sm:$0xff]
    %v3332 = vld [vmem:[#allocation6 + $0xb60] sm:$0xff]
    %v3333 = vld [vmem:[#allocation6 + $0xb68] sm:$0xff]
    %v3334 = vld [vmem:[#allocation6 + $0xb70] sm:$0xff]
    %v3335 = vld [vmem:[#allocation6 + $0xb78] sm:$0xff]
    %v3336 = vld [vmem:[#allocation6 + $0xb80] sm:$0xff]
    %v3337 = vld [vmem:[#allocation6 + $0xb88] sm:$0xff]
    %v3338 = vld [vmem:[#allocation6 + $0xb90] sm:$0xff]
    %v3339 = vld [vmem:[#allocation6 + $0xb98] sm:$0xff]
    %v3340 = vld [vmem:[#allocation6 + $0xba0] sm:$0xff]
    %v3341 = vld [vmem:[#allocation6 + $0xba8] sm:$0xff]
    %v3342 = vld [vmem:[#allocation6 + $0xbb0] sm:$0xff]
    %v3343 = vld [vmem:[#allocation6 + $0xbb8] sm:$0xff]
    %v3344 = vld [vmem:[#allocation6 + $0xbc0] sm:$0xff]
    %v3345 = vld [vmem:[#allocation6 + $0xbc8] sm:$0xff]
    %v3346 = vld [vmem:[#allocation6 + $0xbd0] sm:$0xff]
    %v3347 = vld [vmem:[#allocation6 + $0xbd8] sm:$0xff]
    %v3348 = vld [vmem:[#allocation6 + $0xbe0] sm:$0xff]
    %v3349 = vld [vmem:[#allocation6 + $0xbe8] sm:$0xff]
    %v3350 = vld [vmem:[#allocation6 + $0xbf0] sm:$0xff]
    %v3351 = vld [vmem:[#allocation6 + $0xbf8] sm:$0xff]
    %v3352 = vld [vmem:[#allocation7] sm:$0xf]
    %v3354 = vlaneseq
    %v3355 = vshrl.u32 %v3354, 7
    %v3356 = vsub.s32 0, %v3355
    %v3357 = vrot.slane %v3352, %v3356
    %v3358 = vlaneseq
    %v3359 = vshrl.u32 %v3358, 7
    %v3360 = vsub.s32 1, %v3359
    %v3361 = vrot.slane %v3352, %v3360
    %v3362 = vlaneseq
    %v3363 = vshrl.u32 %v3362, 7
    %v3364 = vsub.s32 2, %v3363
    %v3365 = vrot.slane %v3352, %v3364
    %v3366 = vlaneseq
    %v3367 = vshrl.u32 %v3366, 7
    %v3368 = vsub.s32 3, %v3367
    %v3369 = vrot.slane %v3352, %v3368
    %v3758 = vunpack.c.l.b16 %v2968
    %v3759 = vunpack.c.h.b16 %v2968
    %v3760 = vunpack.c.l.b16 %v2969
    %v3761 = vunpack.c.h.b16 %v2969
    %v3762 = vunpack.c.l.b16 %v2970
    %v3763 = vunpack.c.h.b16 %v2970
    %v3764 = vunpack.c.l.b16 %v2971
    %v3765 = vunpack.c.h.b16 %v2971
    %v3766 = vunpack.c.l.b16 %v2972
    %v3767 = vunpack.c.h.b16 %v2972
    %v3768 = vunpack.c.l.b16 %v2973
    %v3769 = vunpack.c.h.b16 %v2973
    %v3770 = vunpack.c.l.b16 %v2974
    %v3771 = vunpack.c.h.b16 %v2974
    %v3772 = vunpack.c.l.b16 %v2975
    %v3773 = vunpack.c.h.b16 %v2975
    %v3774 = vunpack.c.l.b16 %v2976
    %v3775 = vunpack.c.h.b16 %v2976
    %v3776 = vunpack.c.l.b16 %v2977
    %v3777 = vunpack.c.h.b16 %v2977
    %v3778 = vunpack.c.l.b16 %v2978
    %v3779 = vunpack.c.h.b16 %v2978
    %v3780 = vunpack.c.l.b16 %v2979
    %v3781 = vunpack.c.h.b16 %v2979
    %v3782 = vunpack.c.l.b16 %v2980
    %v3783 = vunpack.c.h.b16 %v2980
    %v3784 = vunpack.c.l.b16 %v2981
    %v3785 = vunpack.c.h.b16 %v2981
    %v3786 = vunpack.c.l.b16 %v2982
    %v3787 = vunpack.c.h.b16 %v2982
    %v3788 = vunpack.c.l.b16 %v2983
    %v3789 = vunpack.c.h.b16 %v2983
    %v3790 = vunpack.c.l.b16 %v2984
    %v3791 = vunpack.c.h.b16 %v2984
    %v3792 = vunpack.c.l.b16 %v2985
    %v3793 = vunpack.c.h.b16 %v2985
    %v3794 = vunpack.c.l.b16 %v2986
    %v3795 = vunpack.c.h.b16 %v2986
    %v3796 = vunpack.c.l.b16 %v2987
    %v3797 = vunpack.c.h.b16 %v2987
    %v3798 = vunpack.c.l.b16 %v2988
    %v3799 = vunpack.c.h.b16 %v2988
    %v3800 = vunpack.c.l.b16 %v2989
    %v3801 = vunpack.c.h.b16 %v2989
    %v3802 = vunpack.c.l.b16 %v2990
    %v3803 = vunpack.c.h.b16 %v2990
    %v3804 = vunpack.c.l.b16 %v2991
    %v3805 = vunpack.c.h.b16 %v2991
    %v3806 = vunpack.c.l.b16 %v2992
    %v3807 = vunpack.c.h.b16 %v2992
    %v3808 = vunpack.c.l.b16 %v2993
    %v3809 = vunpack.c.h.b16 %v2993
    %v3810 = vunpack.c.l.b16 %v2994
    %v3811 = vunpack.c.h.b16 %v2994
    %v3812 = vunpack.c.l.b16 %v2995
    %v3813 = vunpack.c.h.b16 %v2995
    %v3814 = vunpack.c.l.b16 %v2996
    %v3815 = vunpack.c.h.b16 %v2996
    %v3816 = vunpack.c.l.b16 %v2997
    %v3817 = vunpack.c.h.b16 %v2997
    %v3818 = vunpack.c.l.b16 %v2998
    %v3819 = vunpack.c.h.b16 %v2998
    %v3820 = vunpack.c.l.b16 %v2999
    %v3821 = vunpack.c.h.b16 %v2999
    %v3822 = vunpack.c.l.b16 %v3000
    %v3823 = vunpack.c.h.b16 %v3000
    %v3824 = vunpack.c.l.b16 %v3001
    %v3825 = vunpack.c.h.b16 %v3001
    %v3826 = vunpack.c.l.b16 %v3002
    %v3827 = vunpack.c.h.b16 %v3002
    %v3828 = vunpack.c.l.b16 %v3003
    %v3829 = vunpack.c.h.b16 %v3003
    %v3830 = vunpack.c.l.b16 %v3004
    %v3831 = vunpack.c.h.b16 %v3004
    %v3832 = vunpack.c.l.b16 %v3005
    %v3833 = vunpack.c.h.b16 %v3005
    %v3834 = vunpack.c.l.b16 %v3006
    %v3835 = vunpack.c.h.b16 %v3006
    %v3836 = vunpack.c.l.b16 %v3007
    %v3837 = vunpack.c.h.b16 %v3007
    %v3838 = vunpack.c.l.b16 %v3008
    %v3839 = vunpack.c.h.b16 %v3008
    %v3840 = vunpack.c.l.b16 %v3009
    %v3841 = vunpack.c.h.b16 %v3009
    %v3842 = vunpack.c.l.b16 %v3010
    %v3843 = vunpack.c.h.b16 %v3010
    %v3844 = vunpack.c.l.b16 %v3011
    %v3845 = vunpack.c.h.b16 %v3011
    %v3846 = vunpack.c.l.b16 %v3012
    %v3847 = vunpack.c.h.b16 %v3012
    %v3848 = vunpack.c.l.b16 %v3013
    %v3849 = vunpack.c.h.b16 %v3013
    %v3850 = vunpack.c.l.b16 %v3014
    %v3851 = vunpack.c.h.b16 %v3014
    %v3852 = vunpack.c.l.b16 %v3015
    %v3853 = vunpack.c.h.b16 %v3015
    %v3854 = vunpack.c.l.b16 %v3016
    %v3855 = vunpack.c.h.b16 %v3016
    %v3856 = vunpack.c.l.b16 %v3017
    %v3857 = vunpack.c.h.b16 %v3017
    %v3858 = vunpack.c.l.b16 %v3018
    %v3859 = vunpack.c.h.b16 %v3018
    %v3860 = vunpack.c.l.b16 %v3019
    %v3861 = vunpack.c.h.b16 %v3019
    %v3862 = vunpack.c.l.b16 %v3020
    %v3863 = vunpack.c.h.b16 %v3020
    %v3864 = vunpack.c.l.b16 %v3021
    %v3865 = vunpack.c.h.b16 %v3021
    %v3866 = vunpack.c.l.b16 %v3022
    %v3867 = vunpack.c.h.b16 %v3022
    %v3868 = vunpack.c.l.b16 %v3023
    %v3869 = vunpack.c.h.b16 %v3023
    %v3870 = vunpack.c.l.b16 %v3024
    %v3871 = vunpack.c.h.b16 %v3024
    %v3872 = vunpack.c.l.b16 %v3025
    %v3873 = vunpack.c.h.b16 %v3025
    %v3874 = vunpack.c.l.b16 %v3026
    %v3875 = vunpack.c.h.b16 %v3026
    %v3876 = vunpack.c.l.b16 %v3027
    %v3877 = vunpack.c.h.b16 %v3027
    %v3878 = vunpack.c.l.b16 %v3028
    %v3879 = vunpack.c.h.b16 %v3028
    %v3880 = vunpack.c.l.b16 %v3029
    %v3881 = vunpack.c.h.b16 %v3029
    %v3882 = vunpack.c.l.b16 %v3030
    %v3883 = vunpack.c.h.b16 %v3030
    %v3884 = vunpack.c.l.b16 %v3031
    %v3885 = vunpack.c.h.b16 %v3031
    %v3886 = vunpack.c.l.b16 %v3032
    %v3887 = vunpack.c.h.b16 %v3032
    %v3888 = vunpack.c.l.b16 %v3033
    %v3889 = vunpack.c.h.b16 %v3033
    %v3890 = vunpack.c.l.b16 %v3034
    %v3891 = vunpack.c.h.b16 %v3034
    %v3892 = vunpack.c.l.b16 %v3035
    %v3893 = vunpack.c.h.b16 %v3035
    %v3894 = vunpack.c.l.b16 %v3036
    %v3895 = vunpack.c.h.b16 %v3036
    %v3896 = vunpack.c.l.b16 %v3037
    %v3897 = vunpack.c.h.b16 %v3037
    %v3898 = vunpack.c.l.b16 %v3038
    %v3899 = vunpack.c.h.b16 %v3038
    %v3900 = vunpack.c.l.b16 %v3039
    %v3901 = vunpack.c.h.b16 %v3039
    %v3902 = vunpack.c.l.b16 %v3040
    %v3903 = vunpack.c.h.b16 %v3040
    %v3904 = vunpack.c.l.b16 %v3041
    %v3905 = vunpack.c.h.b16 %v3041
    %v3906 = vunpack.c.l.b16 %v3042
    %v3907 = vunpack.c.h.b16 %v3042
    %v3908 = vunpack.c.l.b16 %v3043
    %v3909 = vunpack.c.h.b16 %v3043
    %v3910 = vunpack.c.l.b16 %v3044
    %v3911 = vunpack.c.h.b16 %v3044
    %v3912 = vunpack.c.l.b16 %v3045
    %v3913 = vunpack.c.h.b16 %v3045
    %v3914 = vunpack.c.l.b16 %v3046
    %v3915 = vunpack.c.h.b16 %v3046
    %v3916 = vunpack.c.l.b16 %v3047
    %v3917 = vunpack.c.h.b16 %v3047
    %v3918 = vunpack.c.l.b16 %v3048
    %v3919 = vunpack.c.h.b16 %v3048
    %v3920 = vunpack.c.l.b16 %v3049
    %v3921 = vunpack.c.h.b16 %v3049
    %v3922 = vunpack.c.l.b16 %v3050
    %v3923 = vunpack.c.h.b16 %v3050
    %v3924 = vunpack.c.l.b16 %v3051
    %v3925 = vunpack.c.h.b16 %v3051
    %v3926 = vunpack.c.l.b16 %v3052
    %v3927 = vunpack.c.h.b16 %v3052
    %v3928 = vunpack.c.l.b16 %v3053
    %v3929 = vunpack.c.h.b16 %v3053
    %v3930 = vunpack.c.l.b16 %v3054
    %v3931 = vunpack.c.h.b16 %v3054
    %v3932 = vunpack.c.l.b16 %v3055
    %v3933 = vunpack.c.h.b16 %v3055
    %v3934 = vunpack.c.l.b16 %v3056
    %v3935 = vunpack.c.h.b16 %v3056
    %v3936 = vunpack.c.l.b16 %v3057
    %v3937 = vunpack.c.h.b16 %v3057
    %v3938 = vunpack.c.l.b16 %v3058
    %v3939 = vunpack.c.h.b16 %v3058
    %v3940 = vunpack.c.l.b16 %v3059
    %v3941 = vunpack.c.h.b16 %v3059
    %v3942 = vunpack.c.l.b16 %v3060
    %v3943 = vunpack.c.h.b16 %v3060
    %v3944 = vunpack.c.l.b16 %v3061
    %v3945 = vunpack.c.h.b16 %v3061
    %v3946 = vunpack.c.l.b16 %v3062
    %v3947 = vunpack.c.h.b16 %v3062
    %v3948 = vunpack.c.l.b16 %v3063
    %v3949 = vunpack.c.h.b16 %v3063
    %v3950 = vunpack.c.l.b16 %v3064
    %v3951 = vunpack.c.h.b16 %v3064
    %v3952 = vunpack.c.l.b16 %v3065
    %v3953 = vunpack.c.h.b16 %v3065
    %v3954 = vunpack.c.l.b16 %v3066
    %v3955 = vunpack.c.h.b16 %v3066
    %v3956 = vunpack.c.l.b16 %v3067
    %v3957 = vunpack.c.h.b16 %v3067
    %v3958 = vunpack.c.l.b16 %v3068
    %v3959 = vunpack.c.h.b16 %v3068
    %v3960 = vunpack.c.l.b16 %v3069
    %v3961 = vunpack.c.h.b16 %v3069
    %v3962 = vunpack.c.l.b16 %v3070
    %v3963 = vunpack.c.h.b16 %v3070
    %v3964 = vunpack.c.l.b16 %v3071
    %v3965 = vunpack.c.h.b16 %v3071
    %v3966 = vunpack.c.l.b16 %v3072
    %v3967 = vunpack.c.h.b16 %v3072
    %v3968 = vunpack.c.l.b16 %v3073
    %v3969 = vunpack.c.h.b16 %v3073
    %v3970 = vunpack.c.l.b16 %v3074
    %v3971 = vunpack.c.h.b16 %v3074
    %v3972 = vunpack.c.l.b16 %v3075
    %v3973 = vunpack.c.h.b16 %v3075
    %v3974 = vunpack.c.l.b16 %v3076
    %v3975 = vunpack.c.h.b16 %v3076
    %v3976 = vunpack.c.l.b16 %v3077
    %v3977 = vunpack.c.h.b16 %v3077
    %v3978 = vunpack.c.l.b16 %v3078
    %v3979 = vunpack.c.h.b16 %v3078
    %v3980 = vunpack.c.l.b16 %v3079
    %v3981 = vunpack.c.h.b16 %v3079
    %v3982 = vunpack.c.l.b16 %v3080
    %v3983 = vunpack.c.h.b16 %v3080
    %v3984 = vunpack.c.l.b16 %v3081
    %v3985 = vunpack.c.h.b16 %v3081
    %v3986 = vunpack.c.l.b16 %v3082
    %v3987 = vunpack.c.h.b16 %v3082
    %v3988 = vunpack.c.l.b16 %v3083
    %v3989 = vunpack.c.h.b16 %v3083
    %v3990 = vunpack.c.l.b16 %v3084
    %v3991 = vunpack.c.h.b16 %v3084
    %v3992 = vunpack.c.l.b16 %v3085
    %v3993 = vunpack.c.h.b16 %v3085
    %v3994 = vunpack.c.l.b16 %v3086
    %v3995 = vunpack.c.h.b16 %v3086
    %v3996 = vunpack.c.l.b16 %v3087
    %v3997 = vunpack.c.h.b16 %v3087
    %v3998 = vunpack.c.l.b16 %v3088
    %v3999 = vunpack.c.h.b16 %v3088
    %v4000 = vunpack.c.l.b16 %v3089
    %v4001 = vunpack.c.h.b16 %v3089
    %v4002 = vunpack.c.l.b16 %v3090
    %v4003 = vunpack.c.h.b16 %v3090
    %v4004 = vunpack.c.l.b16 %v3091
    %v4005 = vunpack.c.h.b16 %v3091
    %v4006 = vunpack.c.l.b16 %v3092
    %v4007 = vunpack.c.h.b16 %v3092
    %v4008 = vunpack.c.l.b16 %v3093
    %v4009 = vunpack.c.h.b16 %v3093
    %v4010 = vunpack.c.l.b16 %v3094
    %v4011 = vunpack.c.h.b16 %v3094
    %v4012 = vunpack.c.l.b16 %v3095
    %v4013 = vunpack.c.h.b16 %v3095
    %v4014 = vunpack.c.l.b16 %v3096
    %v4015 = vunpack.c.h.b16 %v3096
    %v4016 = vunpack.c.l.b16 %v3097
    %v4017 = vunpack.c.h.b16 %v3097
    %v4018 = vunpack.c.l.b16 %v3098
    %v4019 = vunpack.c.h.b16 %v3098
    %v4020 = vunpack.c.l.b16 %v3099
    %v4021 = vunpack.c.h.b16 %v3099
    %v4022 = vunpack.c.l.b16 %v3100
    %v4023 = vunpack.c.h.b16 %v3100
    %v4024 = vunpack.c.l.b16 %v3101
    %v4025 = vunpack.c.h.b16 %v3101
    %v4026 = vunpack.c.l.b16 %v3102
    %v4027 = vunpack.c.h.b16 %v3102
    %v4028 = vunpack.c.l.b16 %v3103
    %v4029 = vunpack.c.h.b16 %v3103
    %v4030 = vunpack.c.l.b16 %v3104
    %v4031 = vunpack.c.h.b16 %v3104
    %v4032 = vunpack.c.l.b16 %v3105
    %v4033 = vunpack.c.h.b16 %v3105
    %v4034 = vunpack.c.l.b16 %v3106
    %v4035 = vunpack.c.h.b16 %v3106
    %v4036 = vunpack.c.l.b16 %v3107
    %v4037 = vunpack.c.h.b16 %v3107
    %v4038 = vunpack.c.l.b16 %v3108
    %v4039 = vunpack.c.h.b16 %v3108
    %v4040 = vunpack.c.l.b16 %v3109
    %v4041 = vunpack.c.h.b16 %v3109
    %v4042 = vunpack.c.l.b16 %v3110
    %v4043 = vunpack.c.h.b16 %v3110
    %v4044 = vunpack.c.l.b16 %v3111
    %v4045 = vunpack.c.h.b16 %v3111
    %v4046 = vunpack.c.l.b16 %v3112
    %v4047 = vunpack.c.h.b16 %v3112
    %v4048 = vunpack.c.l.b16 %v3113
    %v4049 = vunpack.c.h.b16 %v3113
    %v4050 = vunpack.c.l.b16 %v3114
    %v4051 = vunpack.c.h.b16 %v3114
    %v4052 = vunpack.c.l.b16 %v3115
    %v4053 = vunpack.c.h.b16 %v3115
    %v4054 = vunpack.c.l.b16 %v3116
    %v4055 = vunpack.c.h.b16 %v3116
    %v4056 = vunpack.c.l.b16 %v3117
    %v4057 = vunpack.c.h.b16 %v3117
    %v4058 = vunpack.c.l.b16 %v3118
    %v4059 = vunpack.c.h.b16 %v3118
    %v4060 = vunpack.c.l.b16 %v3119
    %v4061 = vunpack.c.h.b16 %v3119
    %v4062 = vunpack.c.l.b16 %v3120
    %v4063 = vunpack.c.h.b16 %v3120
    %v4064 = vunpack.c.l.b16 %v3121
    %v4065 = vunpack.c.h.b16 %v3121
    %v4066 = vunpack.c.l.b16 %v3122
    %v4067 = vunpack.c.h.b16 %v3122
    %v4068 = vunpack.c.l.b16 %v3123
    %v4069 = vunpack.c.h.b16 %v3123
    %v4070 = vunpack.c.l.b16 %v3124
    %v4071 = vunpack.c.h.b16 %v3124
    %v4072 = vunpack.c.l.b16 %v3125
    %v4073 = vunpack.c.h.b16 %v3125
    %v4074 = vunpack.c.l.b16 %v3126
    %v4075 = vunpack.c.h.b16 %v3126
    %v4076 = vunpack.c.l.b16 %v3127
    %v4077 = vunpack.c.h.b16 %v3127
    %v4078 = vunpack.c.l.b16 %v3128
    %v4079 = vunpack.c.h.b16 %v3128
    %v4080 = vunpack.c.l.b16 %v3129
    %v4081 = vunpack.c.h.b16 %v3129
    %v4082 = vunpack.c.l.b16 %v3130
    %v4083 = vunpack.c.h.b16 %v3130
    %v4084 = vunpack.c.l.b16 %v3131
    %v4085 = vunpack.c.h.b16 %v3131
    %v4086 = vunpack.c.l.b16 %v3132
    %v4087 = vunpack.c.h.b16 %v3132
    %v4088 = vunpack.c.l.b16 %v3133
    %v4089 = vunpack.c.h.b16 %v3133
    %v4090 = vunpack.c.l.b16 %v3134
    %v4091 = vunpack.c.h.b16 %v3134
    %v4092 = vunpack.c.l.b16 %v3135
    %v4093 = vunpack.c.h.b16 %v3135
    %v4094 = vunpack.c.l.b16 %v3136
    %v4095 = vunpack.c.h.b16 %v3136
    %v4096 = vunpack.c.l.b16 %v3137
    %v4097 = vunpack.c.h.b16 %v3137
    %v4098 = vunpack.c.l.b16 %v3138
    %v4099 = vunpack.c.h.b16 %v3138
    %v4100 = vunpack.c.l.b16 %v3139
    %v4101 = vunpack.c.h.b16 %v3139
    %v4102 = vunpack.c.l.b16 %v3140
    %v4103 = vunpack.c.h.b16 %v3140
    %v4104 = vunpack.c.l.b16 %v3141
    %v4105 = vunpack.c.h.b16 %v3141
    %v4106 = vunpack.c.l.b16 %v3142
    %v4107 = vunpack.c.h.b16 %v3142
    %v4108 = vunpack.c.l.b16 %v3143
    %v4109 = vunpack.c.h.b16 %v3143
    %v4110 = vunpack.c.l.b16 %v3144
    %v4111 = vunpack.c.h.b16 %v3144
    %v4112 = vunpack.c.l.b16 %v3145
    %v4113 = vunpack.c.h.b16 %v3145
    %v4114 = vunpack.c.l.b16 %v3146
    %v4115 = vunpack.c.h.b16 %v3146
    %v4116 = vunpack.c.l.b16 %v3147
    %v4117 = vunpack.c.h.b16 %v3147
    %v4118 = vunpack.c.l.b16 %v3148
    %v4119 = vunpack.c.h.b16 %v3148
    %v4120 = vunpack.c.l.b16 %v3149
    %v4121 = vunpack.c.h.b16 %v3149
    %v4122 = vunpack.c.l.b16 %v3150
    %v4123 = vunpack.c.h.b16 %v3150
    %v4124 = vunpack.c.l.b16 %v3151
    %v4125 = vunpack.c.h.b16 %v3151
    %v4126 = vunpack.c.l.b16 %v3152
    %v4127 = vunpack.c.h.b16 %v3152
    %v4128 = vunpack.c.l.b16 %v3153
    %v4129 = vunpack.c.h.b16 %v3153
    %v4130 = vunpack.c.l.b16 %v3154
    %v4131 = vunpack.c.h.b16 %v3154
    %v4132 = vunpack.c.l.b16 %v3155
    %v4133 = vunpack.c.h.b16 %v3155
    %v4134 = vunpack.c.l.b16 %v3156
    %v4135 = vunpack.c.h.b16 %v3156
    %v4136 = vunpack.c.l.b16 %v3157
    %v4137 = vunpack.c.h.b16 %v3157
    %v4138 = vunpack.c.l.b16 %v3158
    %v4139 = vunpack.c.h.b16 %v3158
    %v4140 = vunpack.c.l.b16 %v3159
    %v4141 = vunpack.c.h.b16 %v3159
    %v4142 = vunpack.c.l.b16 %v3160
    %v4143 = vunpack.c.h.b16 %v3160
    %v4144 = vunpack.c.l.b16 %v3161
    %v4145 = vunpack.c.h.b16 %v3161
    %v4146 = vunpack.c.l.b16 %v3162
    %v4147 = vunpack.c.h.b16 %v3162
    %v4148 = vunpack.c.l.b16 %v3163
    %v4149 = vunpack.c.h.b16 %v3163
    %v4150 = vunpack.c.l.b16 %v3164
    %v4151 = vunpack.c.h.b16 %v3164
    %v4152 = vunpack.c.l.b16 %v3165
    %v4153 = vunpack.c.h.b16 %v3165
    %v4154 = vunpack.c.l.b16 %v3166
    %v4155 = vunpack.c.h.b16 %v3166
    %v4156 = vunpack.c.l.b16 %v3167
    %v4157 = vunpack.c.h.b16 %v3167
    %v4158 = vunpack.c.l.b16 %v3168
    %v4159 = vunpack.c.h.b16 %v3168
    %v4160 = vunpack.c.l.b16 %v3169
    %v4161 = vunpack.c.h.b16 %v3169
    %v4162 = vunpack.c.l.b16 %v3170
    %v4163 = vunpack.c.h.b16 %v3170
    %v4164 = vunpack.c.l.b16 %v3171
    %v4165 = vunpack.c.h.b16 %v3171
    %v4166 = vunpack.c.l.b16 %v3172
    %v4167 = vunpack.c.h.b16 %v3172
    %v4168 = vunpack.c.l.b16 %v3173
    %v4169 = vunpack.c.h.b16 %v3173
    %v4170 = vunpack.c.l.b16 %v3174
    %v4171 = vunpack.c.h.b16 %v3174
    %v4172 = vunpack.c.l.b16 %v3175
    %v4173 = vunpack.c.h.b16 %v3175
    %v4174 = vunpack.c.l.b16 %v3176
    %v4175 = vunpack.c.h.b16 %v3176
    %v4176 = vunpack.c.l.b16 %v3177
    %v4177 = vunpack.c.h.b16 %v3177
    %v4178 = vunpack.c.l.b16 %v3178
    %v4179 = vunpack.c.h.b16 %v3178
    %v4180 = vunpack.c.l.b16 %v3179
    %v4181 = vunpack.c.h.b16 %v3179
    %v4182 = vunpack.c.l.b16 %v3180
    %v4183 = vunpack.c.h.b16 %v3180
    %v4184 = vunpack.c.l.b16 %v3181
    %v4185 = vunpack.c.h.b16 %v3181
    %v4186 = vunpack.c.l.b16 %v3182
    %v4187 = vunpack.c.h.b16 %v3182
    %v4188 = vunpack.c.l.b16 %v3183
    %v4189 = vunpack.c.h.b16 %v3183
    %v4190 = vunpack.c.l.b16 %v3184
    %v4191 = vunpack.c.h.b16 %v3184
    %v4192 = vunpack.c.l.b16 %v3185
    %v4193 = vunpack.c.h.b16 %v3185
    %v4194 = vunpack.c.l.b16 %v3186
    %v4195 = vunpack.c.h.b16 %v3186
    %v4196 = vunpack.c.l.b16 %v3187
    %v4197 = vunpack.c.h.b16 %v3187
    %v4198 = vunpack.c.l.b16 %v3188
    %v4199 = vunpack.c.h.b16 %v3188
    %v4200 = vunpack.c.l.b16 %v3189
    %v4201 = vunpack.c.h.b16 %v3189
    %v4202 = vunpack.c.l.b16 %v3190
    %v4203 = vunpack.c.h.b16 %v3190
    %v4204 = vunpack.c.l.b16 %v3191
    %v4205 = vunpack.c.h.b16 %v3191
    %v4206 = vunpack.c.l.b16 %v3192
    %v4207 = vunpack.c.h.b16 %v3192
    %v4208 = vunpack.c.l.b16 %v3193
    %v4209 = vunpack.c.h.b16 %v3193
    %v4210 = vunpack.c.l.b16 %v3194
    %v4211 = vunpack.c.h.b16 %v3194
    %v4212 = vunpack.c.l.b16 %v3195
    %v4213 = vunpack.c.h.b16 %v3195
    %v4214 = vunpack.c.l.b16 %v3196
    %v4215 = vunpack.c.h.b16 %v3196
    %v4216 = vunpack.c.l.b16 %v3197
    %v4217 = vunpack.c.h.b16 %v3197
    %v4218 = vunpack.c.l.b16 %v3198
    %v4219 = vunpack.c.h.b16 %v3198
    %v4220 = vunpack.c.l.b16 %v3199
    %v4221 = vunpack.c.h.b16 %v3199
    %v4222 = vunpack.c.l.b16 %v3200
    %v4223 = vunpack.c.h.b16 %v3200
    %v4224 = vunpack.c.l.b16 %v3201
    %v4225 = vunpack.c.h.b16 %v3201
    %v4226 = vunpack.c.l.b16 %v3202
    %v4227 = vunpack.c.h.b16 %v3202
    %v4228 = vunpack.c.l.b16 %v3203
    %v4229 = vunpack.c.h.b16 %v3203
    %v4230 = vunpack.c.l.b16 %v3204
    %v4231 = vunpack.c.h.b16 %v3204
    %v4232 = vunpack.c.l.b16 %v3205
    %v4233 = vunpack.c.h.b16 %v3205
    %v4234 = vunpack.c.l.b16 %v3206
    %v4235 = vunpack.c.h.b16 %v3206
    %v4236 = vunpack.c.l.b16 %v3207
    %v4237 = vunpack.c.h.b16 %v3207
    %v4238 = vunpack.c.l.b16 %v3208
    %v4239 = vunpack.c.h.b16 %v3208
    %v4240 = vunpack.c.l.b16 %v3209
    %v4241 = vunpack.c.h.b16 %v3209
    %v4242 = vunpack.c.l.b16 %v3210
    %v4243 = vunpack.c.h.b16 %v3210
    %v4244 = vunpack.c.l.b16 %v3211
    %v4245 = vunpack.c.h.b16 %v3211
    %v4246 = vunpack.c.l.b16 %v3212
    %v4247 = vunpack.c.h.b16 %v3212
    %v4248 = vunpack.c.l.b16 %v3213
    %v4249 = vunpack.c.h.b16 %v3213
    %v4250 = vunpack.c.l.b16 %v3214
    %v4251 = vunpack.c.h.b16 %v3214
    %v4252 = vunpack.c.l.b16 %v3215
    %v4253 = vunpack.c.h.b16 %v3215
    %v4254 = vunpack.c.l.b16 %v3216
    %v4255 = vunpack.c.h.b16 %v3216
    %v4256 = vunpack.c.l.b16 %v3217
    %v4257 = vunpack.c.h.b16 %v3217
    %v4258 = vunpack.c.l.b16 %v3218
    %v4259 = vunpack.c.h.b16 %v3218
    %v4260 = vunpack.c.l.b16 %v3219
    %v4261 = vunpack.c.h.b16 %v3219
    %v4262 = vunpack.c.l.b16 %v3220
    %v4263 = vunpack.c.h.b16 %v3220
    %v4264 = vunpack.c.l.b16 %v3221
    %v4265 = vunpack.c.h.b16 %v3221
    %v4266 = vunpack.c.l.b16 %v3222
    %v4267 = vunpack.c.h.b16 %v3222
    %v4268 = vunpack.c.l.b16 %v3223
    %v4269 = vunpack.c.h.b16 %v3223
    %v4270 = vunpack.c.l.b16 %v3224
    %v4271 = vunpack.c.h.b16 %v3224
    %v4272 = vunpack.c.l.b16 %v3225
    %v4273 = vunpack.c.h.b16 %v3225
    %v4274 = vunpack.c.l.b16 %v3226
    %v4275 = vunpack.c.h.b16 %v3226
    %v4276 = vunpack.c.l.b16 %v3227
    %v4277 = vunpack.c.h.b16 %v3227
    %v4278 = vunpack.c.l.b16 %v3228
    %v4279 = vunpack.c.h.b16 %v3228
    %v4280 = vunpack.c.l.b16 %v3229
    %v4281 = vunpack.c.h.b16 %v3229
    %v4282 = vunpack.c.l.b16 %v3230
    %v4283 = vunpack.c.h.b16 %v3230
    %v4284 = vunpack.c.l.b16 %v3231
    %v4285 = vunpack.c.h.b16 %v3231
    %v4286 = vunpack.c.l.b16 %v3232
    %v4287 = vunpack.c.h.b16 %v3232
    %v4288 = vunpack.c.l.b16 %v3233
    %v4289 = vunpack.c.h.b16 %v3233
    %v4290 = vunpack.c.l.b16 %v3234
    %v4291 = vunpack.c.h.b16 %v3234
    %v4292 = vunpack.c.l.b16 %v3235
    %v4293 = vunpack.c.h.b16 %v3235
    %v4294 = vunpack.c.l.b16 %v3236
    %v4295 = vunpack.c.h.b16 %v3236
    %v4296 = vunpack.c.l.b16 %v3237
    %v4297 = vunpack.c.h.b16 %v3237
    %v4298 = vunpack.c.l.b16 %v3238
    %v4299 = vunpack.c.h.b16 %v3238
    %v4300 = vunpack.c.l.b16 %v3239
    %v4301 = vunpack.c.h.b16 %v3239
    %v4302 = vunpack.c.l.b16 %v3240
    %v4303 = vunpack.c.h.b16 %v3240
    %v4304 = vunpack.c.l.b16 %v3241
    %v4305 = vunpack.c.h.b16 %v3241
    %v4306 = vunpack.c.l.b16 %v3242
    %v4307 = vunpack.c.h.b16 %v3242
    %v4308 = vunpack.c.l.b16 %v3243
    %v4309 = vunpack.c.h.b16 %v3243
    %v4310 = vunpack.c.l.b16 %v3244
    %v4311 = vunpack.c.h.b16 %v3244
    %v4312 = vunpack.c.l.b16 %v3245
    %v4313 = vunpack.c.h.b16 %v3245
    %v4314 = vunpack.c.l.b16 %v3246
    %v4315 = vunpack.c.h.b16 %v3246
    %v4316 = vunpack.c.l.b16 %v3247
    %v4317 = vunpack.c.h.b16 %v3247
    %v4318 = vunpack.c.l.b16 %v3248
    %v4319 = vunpack.c.h.b16 %v3248
    %v4320 = vunpack.c.l.b16 %v3249
    %v4321 = vunpack.c.h.b16 %v3249
    %v4322 = vunpack.c.l.b16 %v3250
    %v4323 = vunpack.c.h.b16 %v3250
    %v4324 = vunpack.c.l.b16 %v3251
    %v4325 = vunpack.c.h.b16 %v3251
    %v4326 = vunpack.c.l.b16 %v3252
    %v4327 = vunpack.c.h.b16 %v3252
    %v4328 = vunpack.c.l.b16 %v3253
    %v4329 = vunpack.c.h.b16 %v3253
    %v4330 = vunpack.c.l.b16 %v3254
    %v4331 = vunpack.c.h.b16 %v3254
    %v4332 = vunpack.c.l.b16 %v3255
    %v4333 = vunpack.c.h.b16 %v3255
    %v4334 = vunpack.c.l.b16 %v3256
    %v4335 = vunpack.c.h.b16 %v3256
    %v4336 = vunpack.c.l.b16 %v3257
    %v4337 = vunpack.c.h.b16 %v3257
    %v4338 = vunpack.c.l.b16 %v3258
    %v4339 = vunpack.c.h.b16 %v3258
    %v4340 = vunpack.c.l.b16 %v3259
    %v4341 = vunpack.c.h.b16 %v3259
    %v4342 = vunpack.c.l.b16 %v3260
    %v4343 = vunpack.c.h.b16 %v3260
    %v4344 = vunpack.c.l.b16 %v3261
    %v4345 = vunpack.c.h.b16 %v3261
    %v4346 = vunpack.c.l.b16 %v3262
    %v4347 = vunpack.c.h.b16 %v3262
    %v4348 = vunpack.c.l.b16 %v3263
    %v4349 = vunpack.c.h.b16 %v3263
    %v4350 = vunpack.c.l.b16 %v3264
    %v4351 = vunpack.c.h.b16 %v3264
    %v4352 = vunpack.c.l.b16 %v3265
    %v4353 = vunpack.c.h.b16 %v3265
    %v4354 = vunpack.c.l.b16 %v3266
    %v4355 = vunpack.c.h.b16 %v3266
    %v4356 = vunpack.c.l.b16 %v3267
    %v4357 = vunpack.c.h.b16 %v3267
    %v4358 = vunpack.c.l.b16 %v3268
    %v4359 = vunpack.c.h.b16 %v3268
    %v4360 = vunpack.c.l.b16 %v3269
    %v4361 = vunpack.c.h.b16 %v3269
    %v4362 = vunpack.c.l.b16 %v3270
    %v4363 = vunpack.c.h.b16 %v3270
    %v4364 = vunpack.c.l.b16 %v3271
    %v4365 = vunpack.c.h.b16 %v3271
    %v4366 = vunpack.c.l.b16 %v3272
    %v4367 = vunpack.c.h.b16 %v3272
    %v4368 = vunpack.c.l.b16 %v3273
    %v4369 = vunpack.c.h.b16 %v3273
    %v4370 = vunpack.c.l.b16 %v3274
    %v4371 = vunpack.c.h.b16 %v3274
    %v4372 = vunpack.c.l.b16 %v3275
    %v4373 = vunpack.c.h.b16 %v3275
    %v4374 = vunpack.c.l.b16 %v3276
    %v4375 = vunpack.c.h.b16 %v3276
    %v4376 = vunpack.c.l.b16 %v3277
    %v4377 = vunpack.c.h.b16 %v3277
    %v4378 = vunpack.c.l.b16 %v3278
    %v4379 = vunpack.c.h.b16 %v3278
    %v4380 = vunpack.c.l.b16 %v3279
    %v4381 = vunpack.c.h.b16 %v3279
    %v4382 = vunpack.c.l.b16 %v3280
    %v4383 = vunpack.c.h.b16 %v3280
    %v4384 = vunpack.c.l.b16 %v3281
    %v4385 = vunpack.c.h.b16 %v3281
    %v4386 = vunpack.c.l.b16 %v3282
    %v4387 = vunpack.c.h.b16 %v3282
    %v4388 = vunpack.c.l.b16 %v3283
    %v4389 = vunpack.c.h.b16 %v3283
    %v4390 = vunpack.c.l.b16 %v3284
    %v4391 = vunpack.c.h.b16 %v3284
    %v4392 = vunpack.c.l.b16 %v3285
    %v4393 = vunpack.c.h.b16 %v3285
    %v4394 = vunpack.c.l.b16 %v3286
    %v4395 = vunpack.c.h.b16 %v3286
    %v4396 = vunpack.c.l.b16 %v3287
    %v4397 = vunpack.c.h.b16 %v3287
    %v4398 = vunpack.c.l.b16 %v3288
    %v4399 = vunpack.c.h.b16 %v3288
    %v4400 = vunpack.c.l.b16 %v3289
    %v4401 = vunpack.c.h.b16 %v3289
    %v4402 = vunpack.c.l.b16 %v3290
    %v4403 = vunpack.c.h.b16 %v3290
    %v4404 = vunpack.c.l.b16 %v3291
    %v4405 = vunpack.c.h.b16 %v3291
    %v4406 = vunpack.c.l.b16 %v3292
    %v4407 = vunpack.c.h.b16 %v3292
    %v4408 = vunpack.c.l.b16 %v3293
    %v4409 = vunpack.c.h.b16 %v3293
    %v4410 = vunpack.c.l.b16 %v3294
    %v4411 = vunpack.c.h.b16 %v3294
    %v4412 = vunpack.c.l.b16 %v3295
    %v4413 = vunpack.c.h.b16 %v3295
    %v4414 = vunpack.c.l.b16 %v3296
    %v4415 = vunpack.c.h.b16 %v3296
    %v4416 = vunpack.c.l.b16 %v3297
    %v4417 = vunpack.c.h.b16 %v3297
    %v4418 = vunpack.c.l.b16 %v3298
    %v4419 = vunpack.c.h.b16 %v3298
    %v4420 = vunpack.c.l.b16 %v3299
    %v4421 = vunpack.c.h.b16 %v3299
    %v4422 = vunpack.c.l.b16 %v3300
    %v4423 = vunpack.c.h.b16 %v3300
    %v4424 = vunpack.c.l.b16 %v3301
    %v4425 = vunpack.c.h.b16 %v3301
    %v4426 = vunpack.c.l.b16 %v3302
    %v4427 = vunpack.c.h.b16 %v3302
    %v4428 = vunpack.c.l.b16 %v3303
    %v4429 = vunpack.c.h.b16 %v3303
    %v4430 = vunpack.c.l.b16 %v3304
    %v4431 = vunpack.c.h.b16 %v3304
    %v4432 = vunpack.c.l.b16 %v3305
    %v4433 = vunpack.c.h.b16 %v3305
    %v4434 = vunpack.c.l.b16 %v3306
    %v4435 = vunpack.c.h.b16 %v3306
    %v4436 = vunpack.c.l.b16 %v3307
    %v4437 = vunpack.c.h.b16 %v3307
    %v4438 = vunpack.c.l.b16 %v3308
    %v4439 = vunpack.c.h.b16 %v3308
    %v4440 = vunpack.c.l.b16 %v3309
    %v4441 = vunpack.c.h.b16 %v3309
    %v4442 = vunpack.c.l.b16 %v3310
    %v4443 = vunpack.c.h.b16 %v3310
    %v4444 = vunpack.c.l.b16 %v3311
    %v4445 = vunpack.c.h.b16 %v3311
    %v4446 = vunpack.c.l.b16 %v3312
    %v4447 = vunpack.c.h.b16 %v3312
    %v4448 = vunpack.c.l.b16 %v3313
    %v4449 = vunpack.c.h.b16 %v3313
    %v4450 = vunpack.c.l.b16 %v3314
    %v4451 = vunpack.c.h.b16 %v3314
    %v4452 = vunpack.c.l.b16 %v3315
    %v4453 = vunpack.c.h.b16 %v3315
    %v4454 = vunpack.c.l.b16 %v3316
    %v4455 = vunpack.c.h.b16 %v3316
    %v4456 = vunpack.c.l.b16 %v3317
    %v4457 = vunpack.c.h.b16 %v3317
    %v4458 = vunpack.c.l.b16 %v3318
    %v4459 = vunpack.c.h.b16 %v3318
    %v4460 = vunpack.c.l.b16 %v3319
    %v4461 = vunpack.c.h.b16 %v3319
    %v4462 = vunpack.c.l.b16 %v3320
    %v4463 = vunpack.c.h.b16 %v3320
    %v4464 = vunpack.c.l.b16 %v3321
    %v4465 = vunpack.c.h.b16 %v3321
    %v4466 = vunpack.c.l.b16 %v3322
    %v4467 = vunpack.c.h.b16 %v3322
    %v4468 = vunpack.c.l.b16 %v3323
    %v4469 = vunpack.c.h.b16 %v3323
    %v4470 = vunpack.c.l.b16 %v3324
    %v4471 = vunpack.c.h.b16 %v3324
    %v4472 = vunpack.c.l.b16 %v3325
    %v4473 = vunpack.c.h.b16 %v3325
    %v4474 = vunpack.c.l.b16 %v3326
    %v4475 = vunpack.c.h.b16 %v3326
    %v4476 = vunpack.c.l.b16 %v3327
    %v4477 = vunpack.c.h.b16 %v3327
    %v4478 = vunpack.c.l.b16 %v3328
    %v4479 = vunpack.c.h.b16 %v3328
    %v4480 = vunpack.c.l.b16 %v3329
    %v4481 = vunpack.c.h.b16 %v3329
    %v4482 = vunpack.c.l.b16 %v3330
    %v4483 = vunpack.c.h.b16 %v3330
    %v4484 = vunpack.c.l.b16 %v3331
    %v4485 = vunpack.c.h.b16 %v3331
    %v4486 = vunpack.c.l.b16 %v3332
    %v4487 = vunpack.c.h.b16 %v3332
    %v4488 = vunpack.c.l.b16 %v3333
    %v4489 = vunpack.c.h.b16 %v3333
    %v4490 = vunpack.c.l.b16 %v3334
    %v4491 = vunpack.c.h.b16 %v3334
    %v4492 = vunpack.c.l.b16 %v3335
    %v4493 = vunpack.c.h.b16 %v3335
    %v4494 = vunpack.c.l.b16 %v3336
    %v4495 = vunpack.c.h.b16 %v3336
    %v4496 = vunpack.c.l.b16 %v3337
    %v4497 = vunpack.c.h.b16 %v3337
    %v4498 = vunpack.c.l.b16 %v3338
    %v4499 = vunpack.c.h.b16 %v3338
    %v4500 = vunpack.c.l.b16 %v3339
    %v4501 = vunpack.c.h.b16 %v3339
    %v4502 = vunpack.c.l.b16 %v3340
    %v4503 = vunpack.c.h.b16 %v3340
    %v4504 = vunpack.c.l.b16 %v3341
    %v4505 = vunpack.c.h.b16 %v3341
    %v4506 = vunpack.c.l.b16 %v3342
    %v4507 = vunpack.c.h.b16 %v3342
    %v4508 = vunpack.c.l.b16 %v3343
    %v4509 = vunpack.c.h.b16 %v3343
    %v4510 = vunpack.c.l.b16 %v3344
    %v4511 = vunpack.c.h.b16 %v3344
    %v4512 = vunpack.c.l.b16 %v3345
    %v4513 = vunpack.c.h.b16 %v3345
    %v4514 = vunpack.c.l.b16 %v3346
    %v4515 = vunpack.c.h.b16 %v3346
    %v4516 = vunpack.c.l.b16 %v3347
    %v4517 = vunpack.c.h.b16 %v3347
    %v4518 = vunpack.c.l.b16 %v3348
    %v4519 = vunpack.c.h.b16 %v3348
    %v4520 = vunpack.c.l.b16 %v3349
    %v4521 = vunpack.c.h.b16 %v3349
    %v4522 = vunpack.c.l.b16 %v3350
    %v4523 = vunpack.c.h.b16 %v3350
    %v4524 = vunpack.c.l.b16 %v3351
    %v4525 = vunpack.c.h.b16 %v3351
    %v4526 = vpack.c.b16 %v3762, %v3758
    %v4527 = vpack.c.b16 %v3763, %v3759
    %v4528 = vpack.c.b16 %v3764, %v3760
    %v4529 = vpack.c.b16 %v3765, %v3761
    %v4530 = vpack.c.b16 %v3770, %v3766
    %v4531 = vpack.c.b16 %v3771, %v3767
    %v4532 = vpack.c.b16 %v3772, %v3768
    %v4533 = vpack.c.b16 %v3773, %v3769
    %v4534 = vpack.c.b16 %v3778, %v3774
    %v4535 = vpack.c.b16 %v3779, %v3775
    %v4536 = vpack.c.b16 %v3780, %v3776
    %v4537 = vpack.c.b16 %v3781, %v3777
    %v4538 = vpack.c.b16 %v3786, %v3782
    %v4539 = vpack.c.b16 %v3787, %v3783
    %v4540 = vpack.c.b16 %v3788, %v3784
    %v4541 = vpack.c.b16 %v3789, %v3785
    %v4542 = vpack.c.b16 %v3794, %v3790
    %v4543 = vpack.c.b16 %v3795, %v3791
    %v4544 = vpack.c.b16 %v3796, %v3792
    %v4545 = vpack.c.b16 %v3797, %v3793
    %v4546 = vpack.c.b16 %v3802, %v3798
    %v4547 = vpack.c.b16 %v3803, %v3799
    %v4548 = vpack.c.b16 %v3804, %v3800
    %v4549 = vpack.c.b16 %v3805, %v3801
    %v4550 = vpack.c.b16 %v3810, %v3806
    %v4551 = vpack.c.b16 %v3811, %v3807
    %v4552 = vpack.c.b16 %v3812, %v3808
    %v4553 = vpack.c.b16 %v3813, %v3809
    %v4554 = vpack.c.b16 %v3818, %v3814
    %v4555 = vpack.c.b16 %v3819, %v3815
    %v4556 = vpack.c.b16 %v3820, %v3816
    %v4557 = vpack.c.b16 %v3821, %v3817
    %v4558 = vpack.c.b16 %v3826, %v3822
    %v4559 = vpack.c.b16 %v3827, %v3823
    %v4560 = vpack.c.b16 %v3828, %v3824
    %v4561 = vpack.c.b16 %v3829, %v3825
    %v4562 = vpack.c.b16 %v3834, %v3830
    %v4563 = vpack.c.b16 %v3835, %v3831
    %v4564 = vpack.c.b16 %v3836, %v3832
    %v4565 = vpack.c.b16 %v3837, %v3833
    %v4566 = vpack.c.b16 %v3842, %v3838
    %v4567 = vpack.c.b16 %v3843, %v3839
    %v4568 = vpack.c.b16 %v3844, %v3840
    %v4569 = vpack.c.b16 %v3845, %v3841
    %v4570 = vpack.c.b16 %v3850, %v3846
    %v4571 = vpack.c.b16 %v3851, %v3847
    %v4572 = vpack.c.b16 %v3852, %v3848
    %v4573 = vpack.c.b16 %v3853, %v3849
    %v4574 = vpack.c.b16 %v3858, %v3854
    %v4575 = vpack.c.b16 %v3859, %v3855
    %v4576 = vpack.c.b16 %v3860, %v3856
    %v4577 = vpack.c.b16 %v3861, %v3857
    %v4578 = vpack.c.b16 %v3866, %v3862
    %v4579 = vpack.c.b16 %v3867, %v3863
    %v4580 = vpack.c.b16 %v3868, %v3864
    %v4581 = vpack.c.b16 %v3869, %v3865
    %v4582 = vpack.c.b16 %v3874, %v3870
    %v4583 = vpack.c.b16 %v3875, %v3871
    %v4584 = vpack.c.b16 %v3876, %v3872
    %v4585 = vpack.c.b16 %v3877, %v3873
    %v4586 = vpack.c.b16 %v3882, %v3878
    %v4587 = vpack.c.b16 %v3883, %v3879
    %v4588 = vpack.c.b16 %v3884, %v3880
    %v4589 = vpack.c.b16 %v3885, %v3881
    %v4590 = vpack.c.b16 %v3890, %v3886
    %v4591 = vpack.c.b16 %v3891, %v3887
    %v4592 = vpack.c.b16 %v3892, %v3888
    %v4593 = vpack.c.b16 %v3893, %v3889
    %v4594 = vpack.c.b16 %v3898, %v3894
    %v4595 = vpack.c.b16 %v3899, %v3895
    %v4596 = vpack.c.b16 %v3900, %v3896
    %v4597 = vpack.c.b16 %v3901, %v3897
    %v4598 = vpack.c.b16 %v3906, %v3902
    %v4599 = vpack.c.b16 %v3907, %v3903
    %v4600 = vpack.c.b16 %v3908, %v3904
    %v4601 = vpack.c.b16 %v3909, %v3905
    %v4602 = vpack.c.b16 %v3914, %v3910
    %v4603 = vpack.c.b16 %v3915, %v3911
    %v4604 = vpack.c.b16 %v3916, %v3912
    %v4605 = vpack.c.b16 %v3917, %v3913
    %v4606 = vpack.c.b16 %v3922, %v3918
    %v4607 = vpack.c.b16 %v3923, %v3919
    %v4608 = vpack.c.b16 %v3924, %v3920
    %v4609 = vpack.c.b16 %v3925, %v3921
    %v4610 = vpack.c.b16 %v3930, %v3926
    %v4611 = vpack.c.b16 %v3931, %v3927
    %v4612 = vpack.c.b16 %v3932, %v3928
    %v4613 = vpack.c.b16 %v3933, %v3929
    %v4614 = vpack.c.b16 %v3938, %v3934
    %v4615 = vpack.c.b16 %v3939, %v3935
    %v4616 = vpack.c.b16 %v3940, %v3936
    %v4617 = vpack.c.b16 %v3941, %v3937
    %v4618 = vpack.c.b16 %v3946, %v3942
    %v4619 = vpack.c.b16 %v3947, %v3943
    %v4620 = vpack.c.b16 %v3948, %v3944
    %v4621 = vpack.c.b16 %v3949, %v3945
    %v4622 = vpack.c.b16 %v3954, %v3950
    %v4623 = vpack.c.b16 %v3955, %v3951
    %v4624 = vpack.c.b16 %v3956, %v3952
    %v4625 = vpack.c.b16 %v3957, %v3953
    %v4626 = vpack.c.b16 %v3962, %v3958
    %v4627 = vpack.c.b16 %v3963, %v3959
    %v4628 = vpack.c.b16 %v3964, %v3960
    %v4629 = vpack.c.b16 %v3965, %v3961
    %v4630 = vpack.c.b16 %v3970, %v3966
    %v4631 = vpack.c.b16 %v3971, %v3967
    %v4632 = vpack.c.b16 %v3972, %v3968
    %v4633 = vpack.c.b16 %v3973, %v3969
    %v4634 = vpack.c.b16 %v3978, %v3974
    %v4635 = vpack.c.b16 %v3979, %v3975
    %v4636 = vpack.c.b16 %v3980, %v3976
    %v4637 = vpack.c.b16 %v3981, %v3977
    %v4638 = vpack.c.b16 %v3986, %v3982
    %v4639 = vpack.c.b16 %v3987, %v3983
    %v4640 = vpack.c.b16 %v3988, %v3984
    %v4641 = vpack.c.b16 %v3989, %v3985
    %v4642 = vpack.c.b16 %v3994, %v3990
    %v4643 = vpack.c.b16 %v3995, %v3991
    %v4644 = vpack.c.b16 %v3996, %v3992
    %v4645 = vpack.c.b16 %v3997, %v3993
    %v4646 = vpack.c.b16 %v4002, %v3998
    %v4647 = vpack.c.b16 %v4003, %v3999
    %v4648 = vpack.c.b16 %v4004, %v4000
    %v4649 = vpack.c.b16 %v4005, %v4001
    %v4650 = vpack.c.b16 %v4010, %v4006
    %v4651 = vpack.c.b16 %v4011, %v4007
    %v4652 = vpack.c.b16 %v4012, %v4008
    %v4653 = vpack.c.b16 %v4013, %v4009
    %v4654 = vpack.c.b16 %v4018, %v4014
    %v4655 = vpack.c.b16 %v4019, %v4015
    %v4656 = vpack.c.b16 %v4020, %v4016
    %v4657 = vpack.c.b16 %v4021, %v4017
    %v4658 = vpack.c.b16 %v4026, %v4022
    %v4659 = vpack.c.b16 %v4027, %v4023
    %v4660 = vpack.c.b16 %v4028, %v4024
    %v4661 = vpack.c.b16 %v4029, %v4025
    %v4662 = vpack.c.b16 %v4034, %v4030
    %v4663 = vpack.c.b16 %v4035, %v4031
    %v4664 = vpack.c.b16 %v4036, %v4032
    %v4665 = vpack.c.b16 %v4037, %v4033
    %v4666 = vpack.c.b16 %v4042, %v4038
    %v4667 = vpack.c.b16 %v4043, %v4039
    %v4668 = vpack.c.b16 %v4044, %v4040
    %v4669 = vpack.c.b16 %v4045, %v4041
    %v4670 = vpack.c.b16 %v4050, %v4046
    %v4671 = vpack.c.b16 %v4051, %v4047
    %v4672 = vpack.c.b16 %v4052, %v4048
    %v4673 = vpack.c.b16 %v4053, %v4049
    %v4674 = vpack.c.b16 %v4058, %v4054
    %v4675 = vpack.c.b16 %v4059, %v4055
    %v4676 = vpack.c.b16 %v4060, %v4056
    %v4677 = vpack.c.b16 %v4061, %v4057
    %v4678 = vpack.c.b16 %v4066, %v4062
    %v4679 = vpack.c.b16 %v4067, %v4063
    %v4680 = vpack.c.b16 %v4068, %v4064
    %v4681 = vpack.c.b16 %v4069, %v4065
    %v4682 = vpack.c.b16 %v4074, %v4070
    %v4683 = vpack.c.b16 %v4075, %v4071
    %v4684 = vpack.c.b16 %v4076, %v4072
    %v4685 = vpack.c.b16 %v4077, %v4073
    %v4686 = vpack.c.b16 %v4082, %v4078
    %v4687 = vpack.c.b16 %v4083, %v4079
    %v4688 = vpack.c.b16 %v4084, %v4080
    %v4689 = vpack.c.b16 %v4085, %v4081
    %v4690 = vpack.c.b16 %v4090, %v4086
    %v4691 = vpack.c.b16 %v4091, %v4087
    %v4692 = vpack.c.b16 %v4092, %v4088
    %v4693 = vpack.c.b16 %v4093, %v4089
    %v4694 = vpack.c.b16 %v4098, %v4094
    %v4695 = vpack.c.b16 %v4099, %v4095
    %v4696 = vpack.c.b16 %v4100, %v4096
    %v4697 = vpack.c.b16 %v4101, %v4097
    %v4698 = vpack.c.b16 %v4106, %v4102
    %v4699 = vpack.c.b16 %v4107, %v4103
    %v4700 = vpack.c.b16 %v4108, %v4104
    %v4701 = vpack.c.b16 %v4109, %v4105
    %v4702 = vpack.c.b16 %v4114, %v4110
    %v4703 = vpack.c.b16 %v4115, %v4111
    %v4704 = vpack.c.b16 %v4116, %v4112
    %v4705 = vpack.c.b16 %v4117, %v4113
    %v4706 = vpack.c.b16 %v4122, %v4118
    %v4707 = vpack.c.b16 %v4123, %v4119
    %v4708 = vpack.c.b16 %v4124, %v4120
    %v4709 = vpack.c.b16 %v4125, %v4121
    %v4710 = vpack.c.b16 %v4130, %v4126
    %v4711 = vpack.c.b16 %v4131, %v4127
    %v4712 = vpack.c.b16 %v4132, %v4128
    %v4713 = vpack.c.b16 %v4133, %v4129
    %v4714 = vpack.c.b16 %v4138, %v4134
    %v4715 = vpack.c.b16 %v4139, %v4135
    %v4716 = vpack.c.b16 %v4140, %v4136
    %v4717 = vpack.c.b16 %v4141, %v4137
    %v4718 = vpack.c.b16 %v4146, %v4142
    %v4719 = vpack.c.b16 %v4147, %v4143
    %v4720 = vpack.c.b16 %v4148, %v4144
    %v4721 = vpack.c.b16 %v4149, %v4145
    %v4722 = vpack.c.b16 %v4154, %v4150
    %v4723 = vpack.c.b16 %v4155, %v4151
    %v4724 = vpack.c.b16 %v4156, %v4152
    %v4725 = vpack.c.b16 %v4157, %v4153
    %v4726 = vpack.c.b16 %v4162, %v4158
    %v4727 = vpack.c.b16 %v4163, %v4159
    %v4728 = vpack.c.b16 %v4164, %v4160
    %v4729 = vpack.c.b16 %v4165, %v4161
    %v4730 = vpack.c.b16 %v4170, %v4166
    %v4731 = vpack.c.b16 %v4171, %v4167
    %v4732 = vpack.c.b16 %v4172, %v4168
    %v4733 = vpack.c.b16 %v4173, %v4169
    %v4734 = vpack.c.b16 %v4178, %v4174
    %v4735 = vpack.c.b16 %v4179, %v4175
    %v4736 = vpack.c.b16 %v4180, %v4176
    %v4737 = vpack.c.b16 %v4181, %v4177
    %v4738 = vpack.c.b16 %v4186, %v4182
    %v4739 = vpack.c.b16 %v4187, %v4183
    %v4740 = vpack.c.b16 %v4188, %v4184
    %v4741 = vpack.c.b16 %v4189, %v4185
    %v4742 = vpack.c.b16 %v4194, %v4190
    %v4743 = vpack.c.b16 %v4195, %v4191
    %v4744 = vpack.c.b16 %v4196, %v4192
    %v4745 = vpack.c.b16 %v4197, %v4193
    %v4746 = vpack.c.b16 %v4202, %v4198
    %v4747 = vpack.c.b16 %v4203, %v4199
    %v4748 = vpack.c.b16 %v4204, %v4200
    %v4749 = vpack.c.b16 %v4205, %v4201
    %v4750 = vpack.c.b16 %v4210, %v4206
    %v4751 = vpack.c.b16 %v4211, %v4207
    %v4752 = vpack.c.b16 %v4212, %v4208
    %v4753 = vpack.c.b16 %v4213, %v4209
    %v4754 = vpack.c.b16 %v4218, %v4214
    %v4755 = vpack.c.b16 %v4219, %v4215
    %v4756 = vpack.c.b16 %v4220, %v4216
    %v4757 = vpack.c.b16 %v4221, %v4217
    %v4758 = vpack.c.b16 %v4226, %v4222
    %v4759 = vpack.c.b16 %v4227, %v4223
    %v4760 = vpack.c.b16 %v4228, %v4224
    %v4761 = vpack.c.b16 %v4229, %v4225
    %v4762 = vpack.c.b16 %v4234, %v4230
    %v4763 = vpack.c.b16 %v4235, %v4231
    %v4764 = vpack.c.b16 %v4236, %v4232
    %v4765 = vpack.c.b16 %v4237, %v4233
    %v4766 = vpack.c.b16 %v4242, %v4238
    %v4767 = vpack.c.b16 %v4243, %v4239
    %v4768 = vpack.c.b16 %v4244, %v4240
    %v4769 = vpack.c.b16 %v4245, %v4241
    %v4770 = vpack.c.b16 %v4250, %v4246
    %v4771 = vpack.c.b16 %v4251, %v4247
    %v4772 = vpack.c.b16 %v4252, %v4248
    %v4773 = vpack.c.b16 %v4253, %v4249
    %v4774 = vpack.c.b16 %v4258, %v4254
    %v4775 = vpack.c.b16 %v4259, %v4255
    %v4776 = vpack.c.b16 %v4260, %v4256
    %v4777 = vpack.c.b16 %v4261, %v4257
    %v4778 = vpack.c.b16 %v4266, %v4262
    %v4779 = vpack.c.b16 %v4267, %v4263
    %v4780 = vpack.c.b16 %v4268, %v4264
    %v4781 = vpack.c.b16 %v4269, %v4265
    %v4782 = vpack.c.b16 %v4274, %v4270
    %v4783 = vpack.c.b16 %v4275, %v4271
    %v4784 = vpack.c.b16 %v4276, %v4272
    %v4785 = vpack.c.b16 %v4277, %v4273
    %v4786 = vpack.c.b16 %v4282, %v4278
    %v4787 = vpack.c.b16 %v4283, %v4279
    %v4788 = vpack.c.b16 %v4284, %v4280
    %v4789 = vpack.c.b16 %v4285, %v4281
    %v4790 = vpack.c.b16 %v4290, %v4286
    %v4791 = vpack.c.b16 %v4291, %v4287
    %v4792 = vpack.c.b16 %v4292, %v4288
    %v4793 = vpack.c.b16 %v4293, %v4289
    %v4794 = vpack.c.b16 %v4298, %v4294
    %v4795 = vpack.c.b16 %v4299, %v4295
    %v4796 = vpack.c.b16 %v4300, %v4296
    %v4797 = vpack.c.b16 %v4301, %v4297
    %v4798 = vpack.c.b16 %v4306, %v4302
    %v4799 = vpack.c.b16 %v4307, %v4303
    %v4800 = vpack.c.b16 %v4308, %v4304
    %v4801 = vpack.c.b16 %v4309, %v4305
    %v4802 = vpack.c.b16 %v4314, %v4310
    %v4803 = vpack.c.b16 %v4315, %v4311
    %v4804 = vpack.c.b16 %v4316, %v4312
    %v4805 = vpack.c.b16 %v4317, %v4313
    %v4806 = vpack.c.b16 %v4322, %v4318
    %v4807 = vpack.c.b16 %v4323, %v4319
    %v4808 = vpack.c.b16 %v4324, %v4320
    %v4809 = vpack.c.b16 %v4325, %v4321
    %v4810 = vpack.c.b16 %v4330, %v4326
    %v4811 = vpack.c.b16 %v4331, %v4327
    %v4812 = vpack.c.b16 %v4332, %v4328
    %v4813 = vpack.c.b16 %v4333, %v4329
    %v4814 = vpack.c.b16 %v4338, %v4334
    %v4815 = vpack.c.b16 %v4339, %v4335
    %v4816 = vpack.c.b16 %v4340, %v4336
    %v4817 = vpack.c.b16 %v4341, %v4337
    %v4818 = vpack.c.b16 %v4346, %v4342
    %v4819 = vpack.c.b16 %v4347, %v4343
    %v4820 = vpack.c.b16 %v4348, %v4344
    %v4821 = vpack.c.b16 %v4349, %v4345
    %v4822 = vpack.c.b16 %v4354, %v4350
    %v4823 = vpack.c.b16 %v4355, %v4351
    %v4824 = vpack.c.b16 %v4356, %v4352
    %v4825 = vpack.c.b16 %v4357, %v4353
    %v4826 = vpack.c.b16 %v4362, %v4358
    %v4827 = vpack.c.b16 %v4363, %v4359
    %v4828 = vpack.c.b16 %v4364, %v4360
    %v4829 = vpack.c.b16 %v4365, %v4361
    %v4830 = vpack.c.b16 %v4370, %v4366
    %v4831 = vpack.c.b16 %v4371, %v4367
    %v4832 = vpack.c.b16 %v4372, %v4368
    %v4833 = vpack.c.b16 %v4373, %v4369
    %v4834 = vpack.c.b16 %v4378, %v4374
    %v4835 = vpack.c.b16 %v4379, %v4375
    %v4836 = vpack.c.b16 %v4380, %v4376
    %v4837 = vpack.c.b16 %v4381, %v4377
    %v4838 = vpack.c.b16 %v4386, %v4382
    %v4839 = vpack.c.b16 %v4387, %v4383
    %v4840 = vpack.c.b16 %v4388, %v4384
    %v4841 = vpack.c.b16 %v4389, %v4385
    %v4842 = vpack.c.b16 %v4394, %v4390
    %v4843 = vpack.c.b16 %v4395, %v4391
    %v4844 = vpack.c.b16 %v4396, %v4392
    %v4845 = vpack.c.b16 %v4397, %v4393
    %v4846 = vpack.c.b16 %v4402, %v4398
    %v4847 = vpack.c.b16 %v4403, %v4399
    %v4848 = vpack.c.b16 %v4404, %v4400
    %v4849 = vpack.c.b16 %v4405, %v4401
    %v4850 = vpack.c.b16 %v4410, %v4406
    %v4851 = vpack.c.b16 %v4411, %v4407
    %v4852 = vpack.c.b16 %v4412, %v4408
    %v4853 = vpack.c.b16 %v4413, %v4409
    %v4854 = vpack.c.b16 %v4418, %v4414
    %v4855 = vpack.c.b16 %v4419, %v4415
    %v4856 = vpack.c.b16 %v4420, %v4416
    %v4857 = vpack.c.b16 %v4421, %v4417
    %v4858 = vpack.c.b16 %v4426, %v4422
    %v4859 = vpack.c.b16 %v4427, %v4423
    %v4860 = vpack.c.b16 %v4428, %v4424
    %v4861 = vpack.c.b16 %v4429, %v4425
    %v4862 = vpack.c.b16 %v4434, %v4430
    %v4863 = vpack.c.b16 %v4435, %v4431
    %v4864 = vpack.c.b16 %v4436, %v4432
    %v4865 = vpack.c.b16 %v4437, %v4433
    %v4866 = vpack.c.b16 %v4442, %v4438
    %v4867 = vpack.c.b16 %v4443, %v4439
    %v4868 = vpack.c.b16 %v4444, %v4440
    %v4869 = vpack.c.b16 %v4445, %v4441
    %v4870 = vpack.c.b16 %v4450, %v4446
    %v4871 = vpack.c.b16 %v4451, %v4447
    %v4872 = vpack.c.b16 %v4452, %v4448
    %v4873 = vpack.c.b16 %v4453, %v4449
    %v4874 = vpack.c.b16 %v4458, %v4454
    %v4875 = vpack.c.b16 %v4459, %v4455
    %v4876 = vpack.c.b16 %v4460, %v4456
    %v4877 = vpack.c.b16 %v4461, %v4457
    %v4878 = vpack.c.b16 %v4466, %v4462
    %v4879 = vpack.c.b16 %v4467, %v4463
    %v4880 = vpack.c.b16 %v4468, %v4464
    %v4881 = vpack.c.b16 %v4469, %v4465
    %v4882 = vpack.c.b16 %v4474, %v4470
    %v4883 = vpack.c.b16 %v4475, %v4471
    %v4884 = vpack.c.b16 %v4476, %v4472
    %v4885 = vpack.c.b16 %v4477, %v4473
    %v4886 = vpack.c.b16 %v4482, %v4478
    %v4887 = vpack.c.b16 %v4483, %v4479
    %v4888 = vpack.c.b16 %v4484, %v4480
    %v4889 = vpack.c.b16 %v4485, %v4481
    %v4890 = vpack.c.b16 %v4490, %v4486
    %v4891 = vpack.c.b16 %v4491, %v4487
    %v4892 = vpack.c.b16 %v4492, %v4488
    %v4893 = vpack.c.b16 %v4493, %v4489
    %v4894 = vpack.c.b16 %v4498, %v4494
    %v4895 = vpack.c.b16 %v4499, %v4495
    %v4896 = vpack.c.b16 %v4500, %v4496
    %v4897 = vpack.c.b16 %v4501, %v4497
    %v4898 = vpack.c.b16 %v4506, %v4502
    %v4899 = vpack.c.b16 %v4507, %v4503
    %v4900 = vpack.c.b16 %v4508, %v4504
    %v4901 = vpack.c.b16 %v4509, %v4505
    %v4902 = vpack.c.b16 %v4514, %v4510
    %v4903 = vpack.c.b16 %v4515, %v4511
    %v4904 = vpack.c.b16 %v4516, %v4512
    %v4905 = vpack.c.b16 %v4517, %v4513
    %v4906 = vpack.c.b16 %v4522, %v4518
    %v4907 = vpack.c.b16 %v4523, %v4519
    %v4908 = vpack.c.b16 %v4524, %v4520
    %v4909 = vpack.c.b16 %v4525, %v4521
    %5294 = vmatprep.subr.bf16.mxu0 %v4527
    %5295 = vmatpush1.bf16.msra.mxu0 %v4526
    %5296 = vmatprep.subr.bf16.mxu0 %v4531
    %5297 = vmatpush1.bf16.msra.mxu0 %v4530
    %5298 = vmatprep.subr.bf16.mxu0 %v4535
    %5299 = vmatpush1.bf16.msra.mxu0 %v4534
    %5300 = vmatprep.subr.bf16.mxu0 %v4539
    %5301 = vmatpush1.bf16.msra.mxu0 %v4538
    %5302 = vmatprep.subr.bf16.mxu0 %v4543
    %5303 = vmatpush1.bf16.msra.mxu0 %v4542
    %5304 = vmatprep.subr.bf16.mxu0 %v4547
    %5305 = vmatpush1.bf16.msra.mxu0 %v4546
    %5306 = vmatprep.subr.bf16.mxu0 %v4551
    %5307 = vmatpush1.bf16.msra.mxu0 %v4550
    %5308 = vmatprep.subr.bf16.mxu0 %v4555
    %5309 = vmatpush1.bf16.msra.mxu0 %v4554
    %5310 = vmatprep.subr.bf16.mxu0 %v4559
    %5311 = vmatpush1.bf16.msra.mxu0 %v4558
    %5312 = vmatprep.subr.bf16.mxu0 %v4563
    %5313 = vmatpush1.bf16.msra.mxu0 %v4562
    %5314 = vmatprep.subr.bf16.mxu0 %v4567
    %5315 = vmatpush1.bf16.msra.mxu0 %v4566
    %5316 = vmatprep.subr.bf16.mxu0 %v4571
    %5317 = vmatpush1.bf16.msra.mxu0 %v4570
    %5318 = vmatprep.subr.bf16.mxu0 %v4575
    %5319 = vmatpush1.bf16.msra.mxu0 %v4574
    %5320 = vmatprep.subr.bf16.mxu0 %v4579
    %5321 = vmatpush1.bf16.msra.mxu0 %v4578
    %5322 = vmatprep.subr.bf16.mxu0 %v4583
    %5323 = vmatpush1.bf16.msra.mxu0 %v4582
    %5324 = vmatprep.subr.bf16.mxu0 %v4587
    %5325 = vmatpush1.bf16.msra.mxu0 %v4586
    %5326 = vmatprep.mubr.bf16.mxu0 %v2937
    %5327 = vmatmul.mubr.bf16.gmra.mrb[0].mxu0 %v2936
    %v5328 = vpop.f32.mrb[0].mxu0
    %v5329 = vadd.f32 %v3357, %v5328
    %v5330 = vpop.f32.mrb[0].mxu0
    %v5331 = vadd.f32 %v3361, %v5330
    %v5332 = vpop.f32.mrb[0].mxu0
    %v5333 = vadd.f32 %v3357, %v5332
    %v5334 = vpop.f32.mrb[0].mxu0
    %v5335 = vadd.f32 %v3361, %v5334
    %5336 = vmatprep.mubr.bf16.mxu0 %v2945
    %5337 = vmatmul.mubr.bf16.gmra.mrb[0].mxu0 %v2944
    %v5338 = vpop.f32.mrb[0].mxu0
    %v5339 = vadd.f32 %v3357, %v5338
    %v5340 = vpop.f32.mrb[0].mxu0
    %v5341 = vadd.f32 %v3361, %v5340
    %v5342 = vpop.f32.mrb[0].mxu0
    %v5343 = vadd.f32 %v3357, %v5342
    %v5344 = vpop.f32.mrb[0].mxu0
    %v5345 = vadd.f32 %v3361, %v5344
    %5346 = vmatprep.mubr.bf16.mxu0 %v2953
    %5347 = vmatmul.mubr.bf16.gmra.mrb[0].mxu0 %v2952
    %v5348 = vpop.f32.mrb[0].mxu0
    %v5349 = vpop.f32.mrb[0].mxu0
    %v5350 = vpop.f32.mrb[0].mxu0
    %v5351 = vpop.f32.mrb[0].mxu0
    %5352 = vmatprep.mubr.bf16.mxu0 %v2961
    %5353 = vmatmul.mubr.bf16.gmra.mrb[0].mxu0 %v2960
    %v5354 = vpop.f32.mrb[0].mxu0
    %v5355 = vpop.f32.mrb[0].mxu0
    %v5356 = vpop.f32.mrb[0].mxu0
    %v5357 = vpop.f32.mrb[0].mxu0
    %5358 = vdwg.mxu0
    %5359 = vmatprep.subr.bf16.mxu0 %v4591
    %5360 = vmatpush1.bf16.msra.mxu0 %v4590
    %5361 = vmatprep.subr.bf16.mxu0 %v4595
    %5362 = vmatpush1.bf16.msra.mxu0 %v4594
    %5363 = vmatprep.subr.bf16.mxu0 %v4599
    %5364 = vmatpush1.bf16.msra.mxu0 %v4598
    %5365 = vmatprep.subr.bf16.mxu0 %v4603
    %5366 = vmatpush1.bf16.msra.mxu0 %v4602
    %5367 = vmatprep.subr.bf16.mxu0 %v4607
    %5368 = vmatpush1.bf16.msra.mxu0 %v4606
    %5369 = vmatprep.subr.bf16.mxu0 %v4611
    %5370 = vmatpush1.bf16.msra.mxu0 %v4610
    %5371 = vmatprep.subr.bf16.mxu0 %v4615
    %5372 = vmatpush1.bf16.msra.mxu0 %v4614
    %5373 = vmatprep.subr.bf16.mxu0 %v4619
    %5374 = vmatpush1.bf16.msra.mxu0 %v4618
    %5375 = vmatprep.subr.bf16.mxu0 %v4623
    %5376 = vmatpush1.bf16.msra.mxu0 %v4622
    %5377 = vmatprep.subr.bf16.mxu0 %v4627
    %5378 = vmatpush1.bf16.msra.mxu0 %v4626
    %5379 = vmatprep.subr.bf16.mxu0 %v4631
    %5380 = vmatpush1.bf16.msra.mxu0 %v4630
    %5381 = vmatprep.subr.bf16.mxu0 %v4635
    %5382 = vmatpush1.bf16.msra.mxu0 %v4634
    %5383 = vmatprep.subr.bf16.mxu0 %v4639
    %5384 = vmatpush1.bf16.msra.mxu0 %v4638
    %5385 = vmatprep.subr.bf16.mxu0 %v4643
    %5386 = vmatpush1.bf16.msra.mxu0 %v4642
    %5387 = vmatprep.subr.bf16.mxu0 %v4647
    %5388 = vmatpush1.bf16.msra.mxu0 %v4646
    %5389 = vmatprep.subr.bf16.mxu0 %v4651
    %5390 = vmatpush1.bf16.msra.mxu0 %v4650
    %5391 = vmatprep.mubr.bf16.mxu0 %v2939
    %5392 = vmatmul.mubr.bf16.gmra.mrb[0].mxu0 %v2938
    %v5393 = vpop.f32.mrb[0].mxu0
    %v5394 = vadd.f32 %v5329, %v5393
    %v5395 = vpop.f32.mrb[0].mxu0
    %v5396 = vadd.f32 %v5331, %v5395
    %v5397 = vpop.f32.mrb[0].mxu0
    %v5398 = vadd.f32 %v5333, %v5397
    %v5399 = vpop.f32.mrb[0].mxu0
    %v5400 = vadd.f32 %v5335, %v5399
    %5401 = vmatprep.mubr.bf16.mxu0 %v2947
    %5402 = vmatmul.mubr.bf16.gmra.mrb[0].mxu0 %v2946
    %v5403 = vpop.f32.mrb[0].mxu0
    %v5404 = vadd.f32 %v5339, %v5403
    %v5405 = vpop.f32.mrb[0].mxu0
    %v5406 = vadd.f32 %v5341, %v5405
    %v5407 = vpop.f32.mrb[0].mxu0
    %v5408 = vadd.f32 %v5343, %v5407
    %v5409 = vpop.f32.mrb[0].mxu0
    %v5410 = vadd.f32 %v5345, %v5409
    %5411 = vmatprep.mubr.bf16.mxu0 %v2955
    %5412 = vmatmul.mubr.bf16.gmra.mrb[0].mxu0 %v2954
    %v5413 = vpop.f32.mrb[0].mxu0
    %v5414 = vpop.f32.mrb[0].mxu0
    %v5415 = vpop.f32.mrb[0].mxu0
    %v5416 = vpop.f32.mrb[0].mxu0
    %5417 = vmatprep.mubr.bf16.mxu0 %v2963
    %5418 = vmatmul.mubr.bf16.gmra.mrb[0].mxu0 %v2962
    %v5419 = vpop.f32.mrb[0].mxu0
    %v5420 = vpop.f32.mrb[0].mxu0
    %v5421 = vpop.f32.mrb[0].mxu0
    %v5422 = vpop.f32.mrb[0].mxu0
    %5423 = vdwg.mxu0
    %5424 = vmatprep.subr.bf16.mxu0 %v4655
    %5425 = vmatpush1.bf16.msra.mxu0 %v4654
    %5426 = vmatprep.subr.bf16.mxu0 %v4659
    %5427 = vmatpush1.bf16.msra.mxu0 %v4658
    %5428 = vmatprep.subr.bf16.mxu0 %v4663
    %5429 = vmatpush1.bf16.msra.mxu0 %v4662
    %5430 = vmatprep.subr.bf16.mxu0 %v4667
    %5431 = vmatpush1.bf16.msra.mxu0 %v4666
    %5432 = vmatprep.subr.bf16.mxu0 %v4671
    %5433 = vmatpush1.bf16.msra.mxu0 %v4670
    %5434 = vmatprep.subr.bf16.mxu0 %v4675
    %5435 = vmatpush1.bf16.msra.mxu0 %v4674
    %5436 = vmatprep.subr.bf16.mxu0 %v4679
    %5437 = vmatpush1.bf16.msra.mxu0 %v4678
    %5438 = vmatprep.subr.bf16.mxu0 %v4683
    %5439 = vmatpush1.bf16.msra.mxu0 %v4682
    %5440 = vmatprep.subr.bf16.mxu0 %v4687
    %5441 = vmatpush1.bf16.msra.mxu0 %v4686
    %5442 = vmatprep.subr.bf16.mxu0 %v4691
    %5443 = vmatpush1.bf16.msra.mxu0 %v4690
    %5444 = vmatprep.subr.bf16.mxu0 %v4695
    %5445 = vmatpush1.bf16.msra.mxu0 %v4694
    %5446 = vmatprep.subr.bf16.mxu0 %v4699
    %5447 = vmatpush1.bf16.msra.mxu0 %v4698
    %5448 = vmatprep.subr.bf16.mxu0 %v4703
    %5449 = vmatpush1.bf16.msra.mxu0 %v4702
    %5450 = vmatprep.subr.bf16.mxu0 %v4707
    %5451 = vmatpush1.bf16.msra.mxu0 %v4706
    %5452 = vmatprep.subr.bf16.mxu0 %v4711
    %5453 = vmatpush1.bf16.msra.mxu0 %v4710
    %5454 = vmatprep.subr.bf16.mxu0 %v4715
    %5455 = vmatpush1.bf16.msra.mxu0 %v4714
    %5456 = vmatprep.mubr.bf16.mxu0 %v2941
    %5457 = vmatmul.mubr.bf16.gmra.mrb[0].mxu0 %v2940
    %v5458 = vpop.f32.mrb[0].mxu0
    %v5459 = vadd.f32 %v5394, %v5458
    %v5460 = vpop.f32.mrb[0].mxu0
    %v5461 = vadd.f32 %v5396, %v5460
    %v5462 = vpop.f32.mrb[0].mxu0
    %v5463 = vadd.f32 %v5398, %v5462
    %v5464 = vpop.f32.mrb[0].mxu0
    %v5465 = vadd.f32 %v5400, %v5464
    %5466 = vmatprep.mubr.bf16.mxu0 %v2949
    %5467 = vmatmul.mubr.bf16.gmra.mrb[0].mxu0 %v2948
    %v5468 = vpop.f32.mrb[0].mxu0
    %v5469 = vadd.f32 %v5404, %v5468
    %v5470 = vpop.f32.mrb[0].mxu0
    %v5471 = vadd.f32 %v5406, %v5470
    %v5472 = vpop.f32.mrb[0].mxu0
    %v5473 = vadd.f32 %v5408, %v5472
    %v5474 = vpop.f32.mrb[0].mxu0
    %v5475 = vadd.f32 %v5410, %v5474
    %5476 = vmatprep.mubr.bf16.mxu0 %v2957
    %5477 = vmatmul.mubr.bf16.gmra.mrb[0].mxu0 %v2956
    %v5478 = vpop.f32.mrb[0].mxu0
    %v5479 = vpop.f32.mrb[0].mxu0
    %v5480 = vpop.f32.mrb[0].mxu0
    %v5481 = vpop.f32.mrb[0].mxu0
    %5482 = vmatprep.mubr.bf16.mxu0 %v2965
    %5483 = vmatmul.mubr.bf16.gmra.mrb[0].mxu0 %v2964
    %v5484 = vpop.f32.mrb[0].mxu0
    %v5485 = vpop.f32.mrb[0].mxu0
    %v5486 = vpop.f32.mrb[0].mxu0
    %v5487 = vpop.f32.mrb[0].mxu0
    %5488 = vdwg.mxu0
    %5489 = vmatprep.subr.bf16.mxu0 %v4719
    %5490 = vmatpush1.bf16.msra.mxu0 %v4718
    %5491 = vmatprep.subr.bf16.mxu0 %v4723
    %5492 = vmatpush1.bf16.msra.mxu0 %v4722
    %5493 = vmatprep.subr.bf16.mxu0 %v4727
    %5494 = vmatpush1.bf16.msra.mxu0 %v4726
    %5495 = vmatprep.subr.bf16.mxu0 %v4731
    %5496 = vmatpush1.bf16.msra.mxu0 %v4730
    %5497 = vmatprep.subr.bf16.mxu0 %v4735
    %5498 = vmatpush1.bf16.msra.mxu0 %v4734
    %5499 = vmatprep.subr.bf16.mxu0 %v4739
    %5500 = vmatpush1.bf16.msra.mxu0 %v4738
    %5501 = vmatprep.subr.bf16.mxu0 %v4743
    %5502 = vmatpush1.bf16.msra.mxu0 %v4742
    %5503 = vmatprep.subr.bf16.mxu0 %v4747
    %5504 = vmatpush1.bf16.msra.mxu0 %v4746
    %5505 = vmatprep.subr.bf16.mxu0 %v4751
    %5506 = vmatpush1.bf16.msra.mxu0 %v4750
    %5507 = vmatprep.subr.bf16.mxu0 %v4755
    %5508 = vmatpush1.bf16.msra.mxu0 %v4754
    %5509 = vmatprep.subr.bf16.mxu0 %v4759
    %5510 = vmatpush1.bf16.msra.mxu0 %v4758
    %5511 = vmatprep.subr.bf16.mxu0 %v4763
    %5512 = vmatpush1.bf16.msra.mxu0 %v4762
    %5513 = vmatprep.subr.bf16.mxu0 %v4767
    %5514 = vmatpush1.bf16.msra.mxu0 %v4766
    %5515 = vmatprep.subr.bf16.mxu0 %v4771
    %5516 = vmatpush1.bf16.msra.mxu0 %v4770
    %5517 = vmatprep.subr.bf16.mxu0 %v4775
    %5518 = vmatpush1.bf16.msra.mxu0 %v4774
    %5519 = vmatprep.subr.bf16.mxu0 %v4779
    %5520 = vmatpush1.bf16.msra.mxu0 %v4778
    %5521 = vmatprep.mubr.bf16.mxu0 %v2943
    %5522 = vmatmul.mubr.bf16.gmra.mrb[0].mxu0 %v2942
    %v5523 = vpop.f32.mrb[0].mxu0
    %v5524 = vadd.f32 %v5459, %v5523
    %v5525 = vpop.f32.mrb[0].mxu0
    %v5526 = vadd.f32 %v5461, %v5525
    %v5527 = vpop.f32.mrb[0].mxu0
    %v5528 = vadd.f32 %v5463, %v5527
    %v5529 = vpop.f32.mrb[0].mxu0
    %v5530 = vadd.f32 %v5465, %v5529
    %5531 = vmatprep.mubr.bf16.mxu0 %v2951
    %5532 = vmatmul.mubr.bf16.gmra.mrb[0].mxu0 %v2950
    %v5533 = vpop.f32.mrb[0].mxu0
    %v5534 = vadd.f32 %v5469, %v5533
    %v5535 = vpop.f32.mrb[0].mxu0
    %v5536 = vadd.f32 %v5471, %v5535
    %v5537 = vpop.f32.mrb[0].mxu0
    %v5538 = vadd.f32 %v5473, %v5537
    %v5539 = vpop.f32.mrb[0].mxu0
    %v5540 = vadd.f32 %v5475, %v5539
    %5541 = vmatprep.mubr.bf16.mxu0 %v2959
    %5542 = vmatmul.mubr.bf16.gmra.mrb[0].mxu0 %v2958
    %v5543 = vpop.f32.mrb[0].mxu0
    %v5544 = vpop.f32.mrb[0].mxu0
    %v5545 = vpop.f32.mrb[0].mxu0
    %v5546 = vpop.f32.mrb[0].mxu0
    %5547 = vmatprep.mubr.bf16.mxu0 %v2967
    %5548 = vmatmul.mubr.bf16.gmra.mrb[0].mxu0 %v2966
    %v5549 = vpop.f32.mrb[0].mxu0
    %v5550 = vpop.f32.mrb[0].mxu0
    %v5551 = vpop.f32.mrb[0].mxu0
    %v5552 = vpop.f32.mrb[0].mxu0
    %5553 = vdwg.mxu0
    %5554 = vmatprep.subr.bf16.mxu0 %v4783
    %5555 = vmatpush1.bf16.msra.mxu0 %v4782
    %5556 = vmatprep.subr.bf16.mxu0 %v4787
    %5557 = vmatpush1.bf16.msra.mxu0 %v4786
    %5558 = vmatprep.subr.bf16.mxu0 %v4791
    %5559 = vmatpush1.bf16.msra.mxu0 %v4790
    %5560 = vmatprep.subr.bf16.mxu0 %v4795
    %5561 = vmatpush1.bf16.msra.mxu0 %v4794
    %5562 = vmatprep.subr.bf16.mxu0 %v4799
    %5563 = vmatpush1.bf16.msra.mxu0 %v4798
    %5564 = vmatprep.subr.bf16.mxu0 %v4803
    %5565 = vmatpush1.bf16.msra.mxu0 %v4802
    %5566 = vmatprep.subr.bf16.mxu0 %v4807
    %5567 = vmatpush1.bf16.msra.mxu0 %v4806
    %5568 = vmatprep.subr.bf16.mxu0 %v4811
    %5569 = vmatpush1.bf16.msra.mxu0 %v4810
    %5570 = vmatprep.subr.bf16.mxu0 %v4815
    %5571 = vmatpush1.bf16.msra.mxu0 %v4814
    %5572 = vmatprep.subr.bf16.mxu0 %v4819
    %5573 = vmatpush1.bf16.msra.mxu0 %v4818
    %5574 = vmatprep.subr.bf16.mxu0 %v4823
    %5575 = vmatpush1.bf16.msra.mxu0 %v4822
    %5576 = vmatprep.subr.bf16.mxu0 %v4827
    %5577 = vmatpush1.bf16.msra.mxu0 %v4826
    %5578 = vmatprep.subr.bf16.mxu0 %v4831
    %5579 = vmatpush1.bf16.msra.mxu0 %v4830
    %5580 = vmatprep.subr.bf16.mxu0 %v4835
    %5581 = vmatpush1.bf16.msra.mxu0 %v4834
    %5582 = vmatprep.subr.bf16.mxu0 %v4839
    %5583 = vmatpush1.bf16.msra.mxu0 %v4838
    %5584 = vmatprep.subr.bf16.mxu0 %v4843
    %5585 = vmatpush1.bf16.msra.mxu0 %v4842
    %5586 = vmatprep.mubr.bf16.mxu0 %v2945
    %5587 = vmatmul.mubr.bf16.gmra.mrb[0].mxu0 %v2944
    %v5588 = vpop.f32.mrb[0].mxu0
    %v5589 = vadd.f32 %v5524, %v5588
    %v5590 = vpop.f32.mrb[0].mxu0
    %v5591 = vadd.f32 %v5526, %v5590
    %v5592 = vpop.f32.mrb[0].mxu0
    %v5593 = vadd.f32 %v5528, %v5592
    %v5594 = vpop.f32.mrb[0].mxu0
    %v5595 = vadd.f32 %v5530, %v5594
    %5596 = vmatprep.mubr.bf16.mxu0 %v2953
    %5597 = vmatmul.mubr.bf16.gmra.mrb[0].mxu0 %v2952
    %v5598 = vpop.f32.mrb[0].mxu0
    %v5599 = vadd.f32 %v5534, %v5598
    %v5600 = vpop.f32.mrb[0].mxu0
    %v5601 = vadd.f32 %v5536, %v5600
    %v5602 = vpop.f32.mrb[0].mxu0
    %v5603 = vadd.f32 %v5538, %v5602
    %v5604 = vpop.f32.mrb[0].mxu0
    %v5605 = vadd.f32 %v5540, %v5604
    %5606 = vmatprep.mubr.bf16.mxu0 %v2961
    %5607 = vmatmul.mubr.bf16.gmra.mrb[0].mxu0 %v2960
    %v5608 = vpop.f32.mrb[0].mxu0
    %v5609 = vpop.f32.mrb[0].mxu0
    %v5610 = vpop.f32.mrb[0].mxu0
    %v5611 = vpop.f32.mrb[0].mxu0
    %5612 = vmatprep.mubr.bf16.mxu0 %v2937
    %5613 = vmatmul.mubr.bf16.gmra.mrb[0].mxu0 %v2936
    %v5614 = vpop.f32.mrb[0].mxu0
    %v5615 = vpop.f32.mrb[0].mxu0
    %v5616 = vpop.f32.mrb[0].mxu0
    %v5617 = vpop.f32.mrb[0].mxu0
    %5618 = vdwg.mxu0
    %5619 = vmatprep.subr.bf16.mxu0 %v4847
    %5620 = vmatpush1.bf16.msra.mxu0 %v4846
    %5621 = vmatprep.subr.bf16.mxu0 %v4851
    %5622 = vmatpush1.bf16.msra.mxu0 %v4850
    %5623 = vmatprep.subr.bf16.mxu0 %v4855
    %5624 = vmatpush1.bf16.msra.mxu0 %v4854
    %5625 = vmatprep.subr.bf16.mxu0 %v4859
    %5626 = vmatpush1.bf16.msra.mxu0 %v4858
    %5627 = vmatprep.subr.bf16.mxu0 %v4863
    %5628 = vmatpush1.bf16.msra.mxu0 %v4862
    %5629 = vmatprep.subr.bf16.mxu0 %v4867
    %5630 = vmatpush1.bf16.msra.mxu0 %v4866
    %5631 = vmatprep.subr.bf16.mxu0 %v4871
    %5632 = vmatpush1.bf16.msra.mxu0 %v4870
    %5633 = vmatprep.subr.bf16.mxu0 %v4875
    %5634 = vmatpush1.bf16.msra.mxu0 %v4874
    %5635 = vmatprep.subr.bf16.mxu0 %v4879
    %5636 = vmatpush1.bf16.msra.mxu0 %v4878
    %5637 = vmatprep.subr.bf16.mxu0 %v4883
    %5638 = vmatpush1.bf16.msra.mxu0 %v4882
    %5639 = vmatprep.subr.bf16.mxu0 %v4887
    %5640 = vmatpush1.bf16.msra.mxu0 %v4886
    %5641 = vmatprep.subr.bf16.mxu0 %v4891
    %5642 = vmatpush1.bf16.msra.mxu0 %v4890
    %5643 = vmatprep.subr.bf16.mxu0 %v4895
    %5644 = vmatpush1.bf16.msra.mxu0 %v4894
    %5645 = vmatprep.subr.bf16.mxu0 %v4899
    %5646 = vmatpush1.bf16.msra.mxu0 %v4898
    %5647 = vmatprep.subr.bf16.mxu0 %v4903
    %5648 = vmatpush1.bf16.msra.mxu0 %v4902
    %5649 = vmatprep.subr.bf16.mxu0 %v4907
    %5650 = vmatpush1.bf16.msra.mxu0 %v4906
    %5651 = vmatprep.mubr.bf16.mxu0 %v2947
    %5652 = vmatmul.mubr.bf16.gmra.mrb[0].mxu0 %v2946
    %v5653 = vpop.f32.mrb[0].mxu0
    %v5654 = vadd.f32 %v5589, %v5653
    %v5655 = vpop.f32.mrb[0].mxu0
    %v5656 = vadd.f32 %v5591, %v5655
    %v5657 = vpop.f32.mrb[0].mxu0
    %v5658 = vadd.f32 %v5593, %v5657
    %v5659 = vpop.f32.mrb[0].mxu0
    %v5660 = vadd.f32 %v5595, %v5659
    %5661 = vmatprep.mubr.bf16.mxu0 %v2955
    %5662 = vmatmul.mubr.bf16.gmra.mrb[0].mxu0 %v2954
    %v5663 = vpop.f32.mrb[0].mxu0
    %v5664 = vadd.f32 %v5599, %v5663
    %v5665 = vpop.f32.mrb[0].mxu0
    %v5666 = vadd.f32 %v5601, %v5665
    %v5667 = vpop.f32.mrb[0].mxu0
    %v5668 = vadd.f32 %v5603, %v5667
    %v5669 = vpop.f32.mrb[0].mxu0
    %v5670 = vadd.f32 %v5605, %v5669
    %5671 = vmatprep.mubr.bf16.mxu0 %v2963
    %5672 = vmatmul.mubr.bf16.gmra.mrb[0].mxu0 %v2962
    %v5673 = vpop.f32.mrb[0].mxu0
    %v5674 = vpop.f32.mrb[0].mxu0
    %v5675 = vpop.f32.mrb[0].mxu0
    %v5676 = vpop.f32.mrb[0].mxu0
    %5677 = vmatprep.mubr.bf16.mxu0 %v2939
    %5678 = vmatmul.mubr.bf16.gmra.mrb[0].mxu0 %v2938
    %v5679 = vpop.f32.mrb[0].mxu0
    %v5680 = vpop.f32.mrb[0].mxu0
    %v5681 = vpop.f32.mrb[0].mxu0
    %v5682 = vpop.f32.mrb[0].mxu0
    %5683 = vdwg.mxu0
    %5684 = vmatprep.subr.bf16.mxu0 %v4529
    %5685 = vmatpush1.bf16.msra.mxu0 %v4528
    %5686 = vmatprep.subr.bf16.mxu0 %v4533
    %5687 = vmatpush1.bf16.msra.mxu0 %v4532
    %5688 = vmatprep.subr.bf16.mxu0 %v4537
    %5689 = vmatpush1.bf16.msra.mxu0 %v4536
    %5690 = vmatprep.subr.bf16.mxu0 %v4541
    %5691 = vmatpush1.bf16.msra.mxu0 %v4540
    %5692 = vmatprep.subr.bf16.mxu0 %v4545
    %5693 = vmatpush1.bf16.msra.mxu0 %v4544
    %5694 = vmatprep.subr.bf16.mxu0 %v4549
    %5695 = vmatpush1.bf16.msra.mxu0 %v4548
    %5696 = vmatprep.subr.bf16.mxu0 %v4553
    %5697 = vmatpush1.bf16.msra.mxu0 %v4552
    %5698 = vmatprep.subr.bf16.mxu0 %v4557
    %5699 = vmatpush1.bf16.msra.mxu0 %v4556
    %5700 = vmatprep.subr.bf16.mxu0 %v4561
    %5701 = vmatpush1.bf16.msra.mxu0 %v4560
    %5702 = vmatprep.subr.bf16.mxu0 %v4565
    %5703 = vmatpush1.bf16.msra.mxu0 %v4564
    %5704 = vmatprep.subr.bf16.mxu0 %v4569
    %5705 = vmatpush1.bf16.msra.mxu0 %v4568
    %5706 = vmatprep.subr.bf16.mxu0 %v4573
    %5707 = vmatpush1.bf16.msra.mxu0 %v4572
    %5708 = vmatprep.subr.bf16.mxu0 %v4577
    %5709 = vmatpush1.bf16.msra.mxu0 %v4576
    %5710 = vmatprep.subr.bf16.mxu0 %v4581
    %5711 = vmatpush1.bf16.msra.mxu0 %v4580
    %5712 = vmatprep.subr.bf16.mxu0 %v4585
    %5713 = vmatpush1.bf16.msra.mxu0 %v4584
    %5714 = vmatprep.subr.bf16.mxu0 %v4589
    %5715 = vmatpush1.bf16.msra.mxu0 %v4588
    %5716 = vmatprep.mubr.bf16.mxu0 %v2937
    %5717 = vmatmul.mubr.bf16.gmra.mrb[0].mxu0 %v2936
    %v5718 = vpop.f32.mrb[0].mxu0
    %v5719 = vadd.f32 %v3365, %v5718
    %v5720 = vpop.f32.mrb[0].mxu0
    %v5721 = vadd.f32 %v3369, %v5720
    %v5722 = vpop.f32.mrb[0].mxu0
    %v5723 = vadd.f32 %v3365, %v5722
    %v5724 = vpop.f32.mrb[0].mxu0
    %v5725 = vadd.f32 %v3369, %v5724
    %5726 = vmatprep.mubr.bf16.mxu0 %v2945
    %5727 = vmatmul.mubr.bf16.gmra.mrb[0].mxu0 %v2944
    %v5728 = vpop.f32.mrb[0].mxu0
    %v5729 = vadd.f32 %v3365, %v5728
    %v5730 = vpop.f32.mrb[0].mxu0
    %v5731 = vadd.f32 %v3369, %v5730
    %v5732 = vpop.f32.mrb[0].mxu0
    %v5733 = vadd.f32 %v3365, %v5732
    %v5734 = vpop.f32.mrb[0].mxu0
    %v5735 = vadd.f32 %v3369, %v5734
    %5736 = vmatprep.mubr.bf16.mxu0 %v2953
    %5737 = vmatmul.mubr.bf16.gmra.mrb[0].mxu0 %v2952
    %v5738 = vpop.f32.mrb[0].mxu0
    %v5739 = vpop.f32.mrb[0].mxu0
    %v5740 = vpop.f32.mrb[0].mxu0
    %v5741 = vpop.f32.mrb[0].mxu0
    %5742 = vmatprep.mubr.bf16.mxu0 %v2961
    %5743 = vmatmul.mubr.bf16.gmra.mrb[0].mxu0 %v2960
    %v5744 = vpop.f32.mrb[0].mxu0
    %v5745 = vpop.f32.mrb[0].mxu0
    %v5746 = vpop.f32.mrb[0].mxu0
    %v5747 = vpop.f32.mrb[0].mxu0
    %5748 = vdwg.mxu0
    %5749 = vmatprep.subr.bf16.mxu0 %v4593
    %5750 = vmatpush1.bf16.msra.mxu0 %v4592
    %5751 = vmatprep.subr.bf16.mxu0 %v4597
    %5752 = vmatpush1.bf16.msra.mxu0 %v4596
    %5753 = vmatprep.subr.bf16.mxu0 %v4601
    %5754 = vmatpush1.bf16.msra.mxu0 %v4600
    %5755 = vmatprep.subr.bf16.mxu0 %v4605
    %5756 = vmatpush1.bf16.msra.mxu0 %v4604
    %5757 = vmatprep.subr.bf16.mxu0 %v4609
    %5758 = vmatpush1.bf16.msra.mxu0 %v4608
    %5759 = vmatprep.subr.bf16.mxu0 %v4613
    %5760 = vmatpush1.bf16.msra.mxu0 %v4612
    %5761 = vmatprep.subr.bf16.mxu0 %v4617
    %5762 = vmatpush1.bf16.msra.mxu0 %v4616
    %5763 = vmatprep.subr.bf16.mxu0 %v4621
    %5764 = vmatpush1.bf16.msra.mxu0 %v4620
    %5765 = vmatprep.subr.bf16.mxu0 %v4625
    %5766 = vmatpush1.bf16.msra.mxu0 %v4624
    %5767 = vmatprep.subr.bf16.mxu0 %v4629
    %5768 = vmatpush1.bf16.msra.mxu0 %v4628
    %5769 = vmatprep.subr.bf16.mxu0 %v4633
    %5770 = vmatpush1.bf16.msra.mxu0 %v4632
    %5771 = vmatprep.subr.bf16.mxu0 %v4637
    %5772 = vmatpush1.bf16.msra.mxu0 %v4636
    %5773 = vmatprep.subr.bf16.mxu0 %v4641
    %5774 = vmatpush1.bf16.msra.mxu0 %v4640
    %5775 = vmatprep.subr.bf16.mxu0 %v4645
    %5776 = vmatpush1.bf16.msra.mxu0 %v4644
    %5777 = vmatprep.subr.bf16.mxu0 %v4649
    %5778 = vmatpush1.bf16.msra.mxu0 %v4648
    %5779 = vmatprep.subr.bf16.mxu0 %v4653
    %5780 = vmatpush1.bf16.msra.mxu0 %v4652
    %5781 = vmatprep.mubr.bf16.mxu0 %v2939
    %5782 = vmatmul.mubr.bf16.gmra.mrb[0].mxu0 %v2938
    %v5783 = vpop.f32.mrb[0].mxu0
    %v5784 = vadd.f32 %v5719, %v5783
    %v5785 = vpop.f32.mrb[0].mxu0
    %v5786 = vadd.f32 %v5721, %v5785
    %v5787 = vpop.f32.mrb[0].mxu0
    %v5788 = vadd.f32 %v5723, %v5787
    %v5789 = vpop.f32.mrb[0].mxu0
    %v5790 = vadd.f32 %v5725, %v5789
    %5791 = vmatprep.mubr.bf16.mxu0 %v2947
    %5792 = vmatmul.mubr.bf16.gmra.mrb[0].mxu0 %v2946
    %v5793 = vpop.f32.mrb[0].mxu0
    %v5794 = vadd.f32 %v5729, %v5793
    %v5795 = vpop.f32.mrb[0].mxu0
    %v5796 = vadd.f32 %v5731, %v5795
    %v5797 = vpop.f32.mrb[0].mxu0
    %v5798 = vadd.f32 %v5733, %v5797
    %v5799 = vpop.f32.mrb[0].mxu0
    %v5800 = vadd.f32 %v5735, %v5799
    %5801 = vmatprep.mubr.bf16.mxu0 %v2955
    %5802 = vmatmul.mubr.bf16.gmra.mrb[0].mxu0 %v2954
    %v5803 = vpop.f32.mrb[0].mxu0
    %v5804 = vpop.f32.mrb[0].mxu0
    %v5805 = vpop.f32.mrb[0].mxu0
    %v5806 = vpop.f32.mrb[0].mxu0
    %5807 = vmatprep.mubr.bf16.mxu0 %v2963
    %5808 = vmatmul.mubr.bf16.gmra.mrb[0].mxu0 %v2962
    %v5809 = vpop.f32.mrb[0].mxu0
    %v5810 = vpop.f32.mrb[0].mxu0
    %v5811 = vpop.f32.mrb[0].mxu0
    %v5812 = vpop.f32.mrb[0].mxu0
    %5813 = vdwg.mxu0
    %5814 = vmatprep.subr.bf16.mxu0 %v4657
    %5815 = vmatpush1.bf16.msra.mxu0 %v4656
    %5816 = vmatprep.subr.bf16.mxu0 %v4661
    %5817 = vmatpush1.bf16.msra.mxu0 %v4660
    %5818 = vmatprep.subr.bf16.mxu0 %v4665
    %5819 = vmatpush1.bf16.msra.mxu0 %v4664
    %5820 = vmatprep.subr.bf16.mxu0 %v4669
    %5821 = vmatpush1.bf16.msra.mxu0 %v4668
    %5822 = vmatprep.subr.bf16.mxu0 %v4673
    %5823 = vmatpush1.bf16.msra.mxu0 %v4672
    %5824 = vmatprep.subr.bf16.mxu0 %v4677
    %5825 = vmatpush1.bf16.msra.mxu0 %v4676
    %5826 = vmatprep.subr.bf16.mxu0 %v4681
    %5827 = vmatpush1.bf16.msra.mxu0 %v4680
    %5828 = vmatprep.subr.bf16.mxu0 %v4685
    %5829 = vmatpush1.bf16.msra.mxu0 %v4684
    %5830 = vmatprep.subr.bf16.mxu0 %v4689
    %5831 = vmatpush1.bf16.msra.mxu0 %v4688
    %5832 = vmatprep.subr.bf16.mxu0 %v4693
    %5833 = vmatpush1.bf16.msra.mxu0 %v4692
    %5834 = vmatprep.subr.bf16.mxu0 %v4697
    %5835 = vmatpush1.bf16.msra.mxu0 %v4696
    %5836 = vmatprep.subr.bf16.mxu0 %v4701
    %5837 = vmatpush1.bf16.msra.mxu0 %v4700
    %5838 = vmatprep.subr.bf16.mxu0 %v4705
    %5839 = vmatpush1.bf16.msra.mxu0 %v4704
    %5840 = vmatprep.subr.bf16.mxu0 %v4709
    %5841 = vmatpush1.bf16.msra.mxu0 %v4708
    %5842 = vmatprep.subr.bf16.mxu0 %v4713
    %5843 = vmatpush1.bf16.msra.mxu0 %v4712
    %5844 = vmatprep.subr.bf16.mxu0 %v4717
    %5845 = vmatpush1.bf16.msra.mxu0 %v4716
    %5846 = vmatprep.mubr.bf16.mxu0 %v2941
    %5847 = vmatmul.mubr.bf16.gmra.mrb[0].mxu0 %v2940
    %v5848 = vpop.f32.mrb[0].mxu0
    %v5849 = vadd.f32 %v5784, %v5848
    %v5850 = vpop.f32.mrb[0].mxu0
    %v5851 = vadd.f32 %v5786, %v5850
    %v5852 = vpop.f32.mrb[0].mxu0
    %v5853 = vadd.f32 %v5788, %v5852
    %v5854 = vpop.f32.mrb[0].mxu0
    %v5855 = vadd.f32 %v5790, %v5854
    %5856 = vmatprep.mubr.bf16.mxu0 %v2949
    %5857 = vmatmul.mubr.bf16.gmra.mrb[0].mxu0 %v2948
    %v5858 = vpop.f32.mrb[0].mxu0
    %v5859 = vadd.f32 %v5794, %v5858
    %v5860 = vpop.f32.mrb[0].mxu0
    %v5861 = vadd.f32 %v5796, %v5860
    %v5862 = vpop.f32.mrb[0].mxu0
    %v5863 = vadd.f32 %v5798, %v5862
    %v5864 = vpop.f32.mrb[0].mxu0
    %v5865 = vadd.f32 %v5800, %v5864
    %5866 = vmatprep.mubr.bf16.mxu0 %v2957
    %5867 = vmatmul.mubr.bf16.gmra.mrb[0].mxu0 %v2956
    %v5868 = vpop.f32.mrb[0].mxu0
    %v5869 = vpop.f32.mrb[0].mxu0
    %v5870 = vpop.f32.mrb[0].mxu0
    %v5871 = vpop.f32.mrb[0].mxu0
    %5872 = vmatprep.mubr.bf16.mxu0 %v2965
    %5873 = vmatmul.mubr.bf16.gmra.mrb[0].mxu0 %v2964
    %v5874 = vpop.f32.mrb[0].mxu0
    %v5875 = vpop.f32.mrb[0].mxu0
    %v5876 = vpop.f32.mrb[0].mxu0
    %v5877 = vpop.f32.mrb[0].mxu0
    %5878 = vdwg.mxu0
    %5879 = vmatprep.subr.bf16.mxu0 %v4721
    %5880 = vmatpush1.bf16.msra.mxu0 %v4720
    %5881 = vmatprep.subr.bf16.mxu0 %v4725
    %5882 = vmatpush1.bf16.msra.mxu0 %v4724
    %5883 = vmatprep.subr.bf16.mxu0 %v4729
    %5884 = vmatpush1.bf16.msra.mxu0 %v4728
    %5885 = vmatprep.subr.bf16.mxu0 %v4733
    %5886 = vmatpush1.bf16.msra.mxu0 %v4732
    %5887 = vmatprep.subr.bf16.mxu0 %v4737
    %5888 = vmatpush1.bf16.msra.mxu0 %v4736
    %5889 = vmatprep.subr.bf16.mxu0 %v4741
    %5890 = vmatpush1.bf16.msra.mxu0 %v4740
    %5891 = vmatprep.subr.bf16.mxu0 %v4745
    %5892 = vmatpush1.bf16.msra.mxu0 %v4744
    %5893 = vmatprep.subr.bf16.mxu0 %v4749
    %5894 = vmatpush1.bf16.msra.mxu0 %v4748
    %5895 = vmatprep.subr.bf16.mxu0 %v4753
    %5896 = vmatpush1.bf16.msra.mxu0 %v4752
    %5897 = vmatprep.subr.bf16.mxu0 %v4757
    %5898 = vmatpush1.bf16.msra.mxu0 %v4756
    %5899 = vmatprep.subr.bf16.mxu0 %v4761
    %5900 = vmatpush1.bf16.msra.mxu0 %v4760
    %5901 = vmatprep.subr.bf16.mxu0 %v4765
    %5902 = vmatpush1.bf16.msra.mxu0 %v4764
    %5903 = vmatprep.subr.bf16.mxu0 %v4769
    %5904 = vmatpush1.bf16.msra.mxu0 %v4768
    %5905 = vmatprep.subr.bf16.mxu0 %v4773
    %5906 = vmatpush1.bf16.msra.mxu0 %v4772
    %5907 = vmatprep.subr.bf16.mxu0 %v4777
    %5908 = vmatpush1.bf16.msra.mxu0 %v4776
    %5909 = vmatprep.subr.bf16.mxu0 %v4781
    %5910 = vmatpush1.bf16.msra.mxu0 %v4780
    %5911 = vmatprep.mubr.bf16.mxu0 %v2943
    %5912 = vmatmul.mubr.bf16.gmra.mrb[0].mxu0 %v2942
    %v5913 = vpop.f32.mrb[0].mxu0
    %v5914 = vadd.f32 %v5849, %v5913
    %v5915 = vpop.f32.mrb[0].mxu0
    %v5916 = vadd.f32 %v5851, %v5915
    %v5917 = vpop.f32.mrb[0].mxu0
    %v5918 = vadd.f32 %v5853, %v5917
    %v5919 = vpop.f32.mrb[0].mxu0
    %v5920 = vadd.f32 %v5855, %v5919
    %5921 = vmatprep.mubr.bf16.mxu0 %v2951
    %5922 = vmatmul.mubr.bf16.gmra.mrb[0].mxu0 %v2950
    %v5923 = vpop.f32.mrb[0].mxu0
    %v5924 = vadd.f32 %v5859, %v5923
    %v5925 = vpop.f32.mrb[0].mxu0
    %v5926 = vadd.f32 %v5861, %v5925
    %v5927 = vpop.f32.mrb[0].mxu0
    %v5928 = vadd.f32 %v5863, %v5927
    %v5929 = vpop.f32.mrb[0].mxu0
    %v5930 = vadd.f32 %v5865, %v5929
    %5931 = vmatprep.mubr.bf16.mxu0 %v2959
    %5932 = vmatmul.mubr.bf16.gmra.mrb[0].mxu0 %v2958
    %v5933 = vpop.f32.mrb[0].mxu0
    %v5934 = vpop.f32.mrb[0].mxu0
    %v5935 = vpop.f32.mrb[0].mxu0
    %v5936 = vpop.f32.mrb[0].mxu0
    %5937 = vmatprep.mubr.bf16.mxu0 %v2967
    %5938 = vmatmul.mubr.bf16.gmra.mrb[0].mxu0 %v2966
    %v5939 = vpop.f32.mrb[0].mxu0
    %v5940 = vpop.f32.mrb[0].mxu0
    %v5941 = vpop.f32.mrb[0].mxu0
    %v5942 = vpop.f32.mrb[0].mxu0
    %5943 = vdwg.mxu0
    %5944 = vmatprep.subr.bf16.mxu0 %v4785
    %5945 = vmatpush1.bf16.msra.mxu0 %v4784
    %5946 = vmatprep.subr.bf16.mxu0 %v4789
    %5947 = vmatpush1.bf16.msra.mxu0 %v4788
    %5948 = vmatprep.subr.bf16.mxu0 %v4793
    %5949 = vmatpush1.bf16.msra.mxu0 %v4792
    %5950 = vmatprep.subr.bf16.mxu0 %v4797
    %5951 = vmatpush1.bf16.msra.mxu0 %v4796
    %5952 = vmatprep.subr.bf16.mxu0 %v4801
    %5953 = vmatpush1.bf16.msra.mxu0 %v4800
    %5954 = vmatprep.subr.bf16.mxu0 %v4805
    %5955 = vmatpush1.bf16.msra.mxu0 %v4804
    %5956 = vmatprep.subr.bf16.mxu0 %v4809
    %5957 = vmatpush1.bf16.msra.mxu0 %v4808
    %5958 = vmatprep.subr.bf16.mxu0 %v4813
    %5959 = vmatpush1.bf16.msra.mxu0 %v4812
    %5960 = vmatprep.subr.bf16.mxu0 %v4817
    %5961 = vmatpush1.bf16.msra.mxu0 %v4816
    %5962 = vmatprep.subr.bf16.mxu0 %v4821
    %5963 = vmatpush1.bf16.msra.mxu0 %v4820
    %5964 = vmatprep.subr.bf16.mxu0 %v4825
    %5965 = vmatpush1.bf16.msra.mxu0 %v4824
    %5966 = vmatprep.subr.bf16.mxu0 %v4829
    %5967 = vmatpush1.bf16.msra.mxu0 %v4828
    %5968 = vmatprep.subr.bf16.mxu0 %v4833
    %5969 = vmatpush1.bf16.msra.mxu0 %v4832
    %5970 = vmatprep.subr.bf16.mxu0 %v4837
    %5971 = vmatpush1.bf16.msra.mxu0 %v4836
    %5972 = vmatprep.subr.bf16.mxu0 %v4841
    %5973 = vmatpush1.bf16.msra.mxu0 %v4840
    %5974 = vmatprep.subr.bf16.mxu0 %v4845
    %5975 = vmatpush1.bf16.msra.mxu0 %v4844
    %5976 = vmatprep.mubr.bf16.mxu0 %v2945
    %5977 = vmatmul.mubr.bf16.gmra.mrb[0].mxu0 %v2944
    %v5978 = vpop.f32.mrb[0].mxu0
    %v5979 = vadd.f32 %v5914, %v5978
    %v5980 = vpop.f32.mrb[0].mxu0
    %v5981 = vadd.f32 %v5916, %v5980
    %v5982 = vpop.f32.mrb[0].mxu0
    %v5983 = vadd.f32 %v5918, %v5982
    %v5984 = vpop.f32.mrb[0].mxu0
    %v5985 = vadd.f32 %v5920, %v5984
    %5986 = vmatprep.mubr.bf16.mxu0 %v2953
    %5987 = vmatmul.mubr.bf16.gmra.mrb[0].mxu0 %v2952
    %v5988 = vpop.f32.mrb[0].mxu0
    %v5989 = vadd.f32 %v5924, %v5988
    %v5990 = vpop.f32.mrb[0].mxu0
    %v5991 = vadd.f32 %v5926, %v5990
    %v5992 = vpop.f32.mrb[0].mxu0
    %v5993 = vadd.f32 %v5928, %v5992
    %v5994 = vpop.f32.mrb[0].mxu0
    %v5995 = vadd.f32 %v5930, %v5994
    %5996 = vmatprep.mubr.bf16.mxu0 %v2961
    %5997 = vmatmul.mubr.bf16.gmra.mrb[0].mxu0 %v2960
    %v5998 = vpop.f32.mrb[0].mxu0
    %v5999 = vpop.f32.mrb[0].mxu0
    %v6000 = vpop.f32.mrb[0].mxu0
    %v6001 = vpop.f32.mrb[0].mxu0
    %6002 = vmatprep.mubr.bf16.mxu0 %v2937
    %6003 = vmatmul.mubr.bf16.gmra.mrb[0].mxu0 %v2936
    %v6004 = vpop.f32.mrb[0].mxu0
    %v6005 = vpop.f32.mrb[0].mxu0
    %v6006 = vpop.f32.mrb[0].mxu0
    %v6007 = vpop.f32.mrb[0].mxu0
    %6008 = vdwg.mxu0
    %6009 = vmatprep.subr.bf16.mxu0 %v4849
    %6010 = vmatpush1.bf16.msra.mxu0 %v4848
    %6011 = vmatprep.subr.bf16.mxu0 %v4853
    %6012 = vmatpush1.bf16.msra.mxu0 %v4852
    %6013 = vmatprep.subr.bf16.mxu0 %v4857
    %6014 = vmatpush1.bf16.msra.mxu0 %v4856
    %6015 = vmatprep.subr.bf16.mxu0 %v4861
    %6016 = vmatpush1.bf16.msra.mxu0 %v4860
    %6017 = vmatprep.subr.bf16.mxu0 %v4865
    %6018 = vmatpush1.bf16.msra.mxu0 %v4864
    %6019 = vmatprep.subr.bf16.mxu0 %v4869
    %6020 = vmatpush1.bf16.msra.mxu0 %v4868
    %6021 = vmatprep.subr.bf16.mxu0 %v4873
    %6022 = vmatpush1.bf16.msra.mxu0 %v4872
    %6023 = vmatprep.subr.bf16.mxu0 %v4877
    %6024 = vmatpush1.bf16.msra.mxu0 %v4876
    %6025 = vmatprep.subr.bf16.mxu0 %v4881
    %6026 = vmatpush1.bf16.msra.mxu0 %v4880
    %6027 = vmatprep.subr.bf16.mxu0 %v4885
    %6028 = vmatpush1.bf16.msra.mxu0 %v4884
    %6029 = vmatprep.subr.bf16.mxu0 %v4889
    %6030 = vmatpush1.bf16.msra.mxu0 %v4888
    %6031 = vmatprep.subr.bf16.mxu0 %v4893
    %6032 = vmatpush1.bf16.msra.mxu0 %v4892
    %6033 = vmatprep.subr.bf16.mxu0 %v4897
    %6034 = vmatpush1.bf16.msra.mxu0 %v4896
    %6035 = vmatprep.subr.bf16.mxu0 %v4901
    %6036 = vmatpush1.bf16.msra.mxu0 %v4900
    %6037 = vmatprep.subr.bf16.mxu0 %v4905
    %6038 = vmatpush1.bf16.msra.mxu0 %v4904
    %6039 = vmatprep.subr.bf16.mxu0 %v4909
    %6040 = vmatpush1.bf16.msra.mxu0 %v4908
    %6041 = vmatprep.mubr.bf16.mxu0 %v2947
    %6042 = vmatmul.mubr.bf16.gmra.mrb[0].mxu0 %v2946
    %v6043 = vpop.f32.mrb[0].mxu0
    %v6044 = vadd.f32 %v5979, %v6043
    %v6045 = vpop.f32.mrb[0].mxu0
    %v6046 = vadd.f32 %v5981, %v6045
    %v6047 = vpop.f32.mrb[0].mxu0
    %v6048 = vadd.f32 %v5983, %v6047
    %v6049 = vpop.f32.mrb[0].mxu0
    %v6050 = vadd.f32 %v5985, %v6049
    %6051 = vmatprep.mubr.bf16.mxu0 %v2955
    %6052 = vmatmul.mubr.bf16.gmra.mrb[0].mxu0 %v2954
    %v6053 = vpop.f32.mrb[0].mxu0
    %v6054 = vadd.f32 %v5989, %v6053
    %v6055 = vpop.f32.mrb[0].mxu0
    %v6056 = vadd.f32 %v5991, %v6055
    %v6057 = vpop.f32.mrb[0].mxu0
    %v6058 = vadd.f32 %v5993, %v6057
    %v6059 = vpop.f32.mrb[0].mxu0
    %v6060 = vadd.f32 %v5995, %v6059
    %6061 = vmatprep.mubr.bf16.mxu0 %v2963
    %6062 = vmatmul.mubr.bf16.gmra.mrb[0].mxu0 %v2962
    %v6063 = vpop.f32.mrb[0].mxu0
    %v6064 = vpop.f32.mrb[0].mxu0
    %v6065 = vpop.f32.mrb[0].mxu0
    %v6066 = vpop.f32.mrb[0].mxu0
    %6067 = vmatprep.mubr.bf16.mxu0 %v2939
    %6068 = vmatmul.mubr.bf16.gmra.mrb[0].mxu0 %v2938
    %v6069 = vpop.f32.mrb[0].mxu0
    %v6070 = vpop.f32.mrb[0].mxu0
    %v6071 = vpop.f32.mrb[0].mxu0
    %v6072 = vpop.f32.mrb[0].mxu0
    %6073 = vdwg.mxu0
    %v6074 = vmax.f32 %v5654, 0.0
    %v6075 = vmax.f32 %v5656, 0.0
    %v6076 = vmax.f32 %v6044, 0.0
    %v6077 = vmax.f32 %v6046, 0.0
    %v6078 = vmax.f32 %v5658, 0.0
    %v6079 = vmax.f32 %v5660, 0.0
    %v6080 = vmax.f32 %v6048, 0.0
    %v6081 = vmax.f32 %v6050, 0.0
    %v6082 = vmax.f32 %v5664, 0.0
    %v6083 = vmax.f32 %v5666, 0.0
    %v6084 = vmax.f32 %v6054, 0.0
    %v6085 = vmax.f32 %v6056, 0.0
    %v6086 = vmax.f32 %v5668, 0.0
    %v6087 = vmax.f32 %v5670, 0.0
    %v6088 = vmax.f32 %v6058, 0.0
    %v6089 = vmax.f32 %v6060, 0.0
    %v6090 = vmax.f32 %v6074, %v6076
    %v6091 = vmax.f32 %v6075, %v6077
    %v6092 = vmax.f32 %v6078, %v6080
    %v6093 = vmax.f32 %v6079, %v6081
    %v6094 = vmax.f32 %v6082, %v6084
    %v6095 = vmax.f32 %v6083, %v6085
    %v6096 = vmax.f32 %v6086, %v6088
    %v6097 = vmax.f32 %v6087, %v6089
    %v6098 = vmax.f32 %v6090, %v6091
    %v6099 = vmax.f32 %v6092, %v6093
    %v6100 = vmax.f32 %v6094, %v6095
    %v6101 = vmax.f32 %v6096, %v6097
    %v6102 = vmax.f32 %v6098, %v6099
    %v6103 = vmax.f32 %v6100, %v6101
    %v6104 = vpack.c.bf16 %v6102, %v6102
    %v6105 = vpack.c.bf16 %v6103, %v6103
    %v6106 = vld [vmem:[#allocation9] sm:$0xf]
    %v6107 = vld [vmem:[#allocation9 + $0x4] sm:$0xf]
    %v6108 = vld [vmem:[#allocation9 + $0x8] sm:$0xf]
    %v6109 = vld [vmem:[#allocation9 + $0xc] sm:$0xf]
    %v6110 = vld [vmem:[#allocation9 + $0x10] sm:$0xf]
    %v6111 = vld [vmem:[#allocation9 + $0x14] sm:$0xf]
    %v6112 = vld [vmem:[#allocation9 + $0x18] sm:$0xf]
    %v6113 = vld [vmem:[#allocation9 + $0x1c] sm:$0xf]
    %v6114 = vld [vmem:[#allocation9 + $0x20] sm:$0xf]
    %v6115 = vld [vmem:[#allocation9 + $0x24] sm:$0xf]
    %v6116 = vld [vmem:[#allocation9 + $0x28] sm:$0xf]
    %v6117 = vld [vmem:[#allocation9 + $0x2c] sm:$0xf]
    %v6118 = vld [vmem:[#allocation9 + $0x30] sm:$0xf]
    %v6119 = vld [vmem:[#allocation9 + $0x34] sm:$0xf]
    %v6120 = vld [vmem:[#allocation9 + $0x38] sm:$0xf]
    %v6121 = vld [vmem:[#allocation9 + $0x3c] sm:$0xf]
    %v6122 = vld [vmem:[#allocation9 + $0x40] sm:$0xf]
    %v6123 = vld [vmem:[#allocation9 + $0x44] sm:$0xf]
    %v6124 = vld [vmem:[#allocation9 + $0x48] sm:$0xf]
    %v6125 = vld [vmem:[#allocation9 + $0x4c] sm:$0xf]
    %v6126 = vld [vmem:[#allocation9 + $0x50] sm:$0xf]
    %v6127 = vld [vmem:[#allocation9 + $0x54] sm:$0xf]
    %v6128 = vld [vmem:[#allocation9 + $0x58] sm:$0xf]
    %v6129 = vld [vmem:[#allocation9 + $0x5c] sm:$0xf]
    %v6130 = vld [vmem:[#allocation9 + $0x60] sm:$0xf]
    %v6131 = vld [vmem:[#allocation9 + $0x64] sm:$0xf]
    %v6132 = vld [vmem:[#allocation9 + $0x68] sm:$0xf]
    %v6133 = vld [vmem:[#allocation9 + $0x6c] sm:$0xf]
    %v6134 = vld [vmem:[#allocation9 + $0x70] sm:$0xf]
    %v6135 = vld [vmem:[#allocation9 + $0x74] sm:$0xf]
    %v6136 = vld [vmem:[#allocation9 + $0x78] sm:$0xf]
    %v6137 = vld [vmem:[#allocation9 + $0x7c] sm:$0xf]
    %v6138 = vld [vmem:[#allocation10] sm:$0x1]
    %v6140 = vlaneseq
    %v6141 = vshrl.u32 %v6140, 7
    %v6142 = vsub.s32 0, %v6141
    %v6143 = vrot.slane %v6138, %v6142
    %v6177 = vunpack.c.l.b16 %v6106
    %v6178 = vunpack.c.l.b16 %v6107
    %v6179 = vunpack.c.l.b16 %v6108
    %v6180 = vunpack.c.l.b16 %v6109
    %v6181 = vunpack.c.l.b16 %v6110
    %v6182 = vunpack.c.l.b16 %v6111
    %v6183 = vunpack.c.l.b16 %v6112
    %v6184 = vunpack.c.l.b16 %v6113
    %v6185 = vunpack.c.l.b16 %v6114
    %v6186 = vunpack.c.l.b16 %v6115
    %v6187 = vunpack.c.l.b16 %v6116
    %v6188 = vunpack.c.l.b16 %v6117
    %v6189 = vunpack.c.l.b16 %v6118
    %v6190 = vunpack.c.l.b16 %v6119
    %v6191 = vunpack.c.l.b16 %v6120
    %v6192 = vunpack.c.l.b16 %v6121
    %v6193 = vunpack.c.l.b16 %v6122
    %v6194 = vunpack.c.l.b16 %v6123
    %v6195 = vunpack.c.l.b16 %v6124
    %v6196 = vunpack.c.l.b16 %v6125
    %v6197 = vunpack.c.l.b16 %v6126
    %v6198 = vunpack.c.l.b16 %v6127
    %v6199 = vunpack.c.l.b16 %v6128
    %v6200 = vunpack.c.l.b16 %v6129
    %v6201 = vunpack.c.l.b16 %v6130
    %v6202 = vunpack.c.l.b16 %v6131
    %v6203 = vunpack.c.l.b16 %v6132
    %v6204 = vunpack.c.l.b16 %v6133
    %v6205 = vunpack.c.l.b16 %v6134
    %v6206 = vunpack.c.l.b16 %v6135
    %v6207 = vunpack.c.l.b16 %v6136
    %v6208 = vunpack.c.l.b16 %v6137
    %v6209 = vpack.c.b16 %v6178, %v6177
    %v6210 = vpack.c.b16 %v6180, %v6179
    %v6211 = vpack.c.b16 %v6182, %v6181
    %v6212 = vpack.c.b16 %v6184, %v6183
    %v6213 = vpack.c.b16 %v6186, %v6185
    %v6214 = vpack.c.b16 %v6188, %v6187
    %v6215 = vpack.c.b16 %v6190, %v6189
    %v6216 = vpack.c.b16 %v6192, %v6191
    %v6217 = vpack.c.b16 %v6194, %v6193
    %v6218 = vpack.c.b16 %v6196, %v6195
    %v6219 = vpack.c.b16 %v6198, %v6197
    %v6220 = vpack.c.b16 %v6200, %v6199
    %v6221 = vpack.c.b16 %v6202, %v6201
    %v6222 = vpack.c.b16 %v6204, %v6203
    %v6223 = vpack.c.b16 %v6206, %v6205
    %v6224 = vpack.c.b16 %v6208, %v6207
    %6241 = vmatprep.subr.bf16.mxu0 0
    %6242 = vmatpush1.bf16.msra.mxu0 %v6209
    %6243 = vmatprep.subr.bf16.mxu0 0
    %6244 = vmatpush1.bf16.msra.mxu0 %v6210
    %6245 = vmatprep.subr.bf16.mxu0 0
    %6246 = vmatpush1.bf16.msra.mxu0 %v6211
    %6247 = vmatprep.subr.bf16.mxu0 0
    %6248 = vmatpush1.bf16.msra.mxu0 %v6212
    %6249 = vmatprep.subr.bf16.mxu0 0
    %6250 = vmatpush1.bf16.msra.mxu0 %v6213
    %6251 = vmatprep.subr.bf16.mxu0 0
    %6252 = vmatpush1.bf16.msra.mxu0 %v6214
    %6253 = vmatprep.subr.bf16.mxu0 0
    %6254 = vmatpush1.bf16.msra.mxu0 %v6215
    %6255 = vmatprep.subr.bf16.mxu0 0
    %6256 = vmatpush1.bf16.msra.mxu0 %v6216
    %6257 = vmatprep.subr.bf16.mxu0 0
    %6258 = vmatpush1.bf16.msra.mxu0 %v6217
    %6259 = vmatprep.subr.bf16.mxu0 0
    %6260 = vmatpush1.bf16.msra.mxu0 %v6218
    %6261 = vmatprep.subr.bf16.mxu0 0
    %6262 = vmatpush1.bf16.msra.mxu0 %v6219
    %6263 = vmatprep.subr.bf16.mxu0 0
    %6264 = vmatpush1.bf16.msra.mxu0 %v6220
    %6265 = vmatprep.subr.bf16.mxu0 0
    %6266 = vmatpush1.bf16.msra.mxu0 %v6221
    %6267 = vmatprep.subr.bf16.mxu0 0
    %6268 = vmatpush1.bf16.msra.mxu0 %v6222
    %6269 = vmatprep.subr.bf16.mxu0 0
    %6270 = vmatpush1.bf16.msra.mxu0 %v6223
    %6271 = vmatprep.subr.bf16.mxu0 0
    %6272 = vmatpush1.bf16.msra.mxu0 %v6224
    %6273 = vmatprep.mubr.bf16.mxu0 %v6105
    %6274 = vmatmul.mubr.bf16.gmra.mrb[0].mxu0 %v6104
    %v6275 = vpop.f32.mrb[0].mxu0
    %v6276 = vadd.f32 %v6143, %v6275
    %v6277 = vpop.f32.mrb[0].mxu0
    %v6278 = vpop.f32.mrb[0].mxu0
    %v6279 = vpop.f32.mrb[0].mxu0
    %6280 = vdwg.mxu0
    %6281 = vst [vmem:[%s7] sm:$0xff] %v6276
    // Predicated region
    $region54: #{voxnet_forward.1} parent=1 // pred_check
      _
    $region55: #{voxnet_forward.1} parent=1 // pred_check_branch
      %6283 = sbr.rel (0) target = $region57
    $region56: #{voxnet_forward.1} parent=1 // pred_region
      _
    $region57: #{voxnet_forward.1} parent=1 // pred_fallthru
      _
    // Predicated region
    $region58: #{voxnet_forward.1} parent=1 // pred_check
      _
    $region59: #{voxnet_forward.1} parent=1 // pred_check_branch
      %6285 = sbr.rel (0) target = $region61
    $region60: #{voxnet_forward.1} parent=1 // pred_region
      _
    $region61: #{voxnet_forward.1} parent=1 // pred_fallthru
      _
    %6286 = vsyncpa [#allocation3], 1
    %6287 = vsyncpa [#allocation5], 1
    %6288 = vsyncpa [#allocation8], 1
    %6289 = vsyncpa [#allocation11], 1

</llo_original>
